<compile_context>
chip_gen: v6e
topology: v6e:2x2x1
jax: 0.10.0
libtpu: 0.0.40
codegen_flags: <defaults>
</compile_context>

<pallas_src>
import functools

import jax
import jax.numpy as jnp
from jax.experimental import pallas as pl
from jax.experimental.pallas import tpu as pltpu

LANE = 128


def _round_up(x, m):
    return (x + m - 1) // m * m


# ---------------------------------------------------------------------------
# Pallas kernel factory: 3x3 conv (per-tap dots) + BN [+ shortcut] [+ ReLU]
# ---------------------------------------------------------------------------
def _make_conv_block_kernel(kh, kw, stride, oh, ow, coutp, shortcut, relu):
    n_phase = stride * stride

    def kernel(*refs):
        idx = 0
        phase_refs = refs[idx:idx + n_phase]
        idx += n_phase
        w_ref = refs[idx]; idx += 1
        s_ref = refs[idx]; idx += 1
        b_ref = refs[idx]; idx += 1
        if shortcut == "identity":
            r_ref = refs[idx]; idx += 1
        elif shortcut == "proj":
            rx_ref, rw_ref, rs_ref, rb_ref = refs[idx:idx + 4]
            idx += 4
        o_ref = refs[idx]

        # Direct conv: accumulate kh*kw per-tap matmuls (no im2col in HBM).
        acc = jnp.zeros((oh * ow, coutp), jnp.float32)
        for ki in range(kh):
            for kj in range(kw):
                p_ref = phase_refs[(ki % stride) * stride + (kj % stride)]
                r0 = ki // stride
                c0 = kj // stride
                patch = p_ref[0, r0:r0 + oh, c0:c0 + ow, :]
                patch = patch.reshape(oh * ow, patch.shape[-1])
                acc = acc + jnp.dot(patch, w_ref[ki * kw + kj, :, :],
                                    preferred_element_type=jnp.float32)

        out = acc * s_ref[...] + b_ref[...]

        if shortcut == "identity":
            res = r_ref[0, :, :, :]
            out = out + res.reshape(oh * ow, coutp).astype(jnp.float32)
        elif shortcut == "proj":
            rx = rx_ref[0, :, :, :]
            rx = rx.reshape(oh * ow, rx.shape[-1])
            sc = jnp.dot(rx, rw_ref[...], preferred_element_type=jnp.float32)
            out = out + sc * rs_ref[...] + rb_ref[...]

        if relu:
            out = jnp.maximum(out, 0.0)
        o_ref[...] = out.reshape(1, oh, ow, coutp).astype(o_ref.dtype)

    return kernel


# ---------------------------------------------------------------------------
# Host wrapper for one fused conv(+BN[+shortcut][+ReLU]) pallas_call
# ---------------------------------------------------------------------------
def conv_bn_act(phases, w_taps, scale, bias, *, kh, kw, stride, oh, ow,
                shortcut=None, shortcut_args=(), relu=True,
                out_dtype=jnp.float32):
    n = phases[0].shape[0]
    coutp = w_taps.shape[-1]

    in_specs = []
    args = []
    for p in phases:
        _, ph, pw, pc = p.shape
        in_specs.append(pl.BlockSpec((1, ph, pw, pc), lambda i: (i, 0, 0, 0)))
        args.append(p)

    in_specs += [
        pl.BlockSpec((kh * kw,) + tuple(w_taps.shape[1:]), lambda i: (0, 0, 0)),
        pl.BlockSpec((1, coutp), lambda i: (0, 0)),
        pl.BlockSpec((1, coutp), lambda i: (0, 0)),
    ]
    args += [w_taps, scale, bias]

    if shortcut == "identity":
        (res,) = shortcut_args
        in_specs.append(pl.BlockSpec((1, oh, ow, coutp), lambda i: (i, 0, 0, 0)))
        args.append(res)
    elif shortcut == "proj":
        rx, rw, rs, rb = shortcut_args
        in_specs += [
            pl.BlockSpec((1, oh, ow, rx.shape[-1]), lambda i: (i, 0, 0, 0)),
            pl.BlockSpec(tuple(rw.shape), lambda i: (0, 0)),
            pl.BlockSpec((1, coutp), lambda i: (0, 0)),
            pl.BlockSpec((1, coutp), lambda i: (0, 0)),
        ]
        args += [rx, rw, rs, rb]

    flops = 2 * n * oh * ow * (kh * kw) * w_taps.shape[1] * coutp
    if shortcut == "proj":
        flops += 2 * n * oh * ow * shortcut_args[0].shape[-1] * coutp
    out_bytes = n * oh * ow * coutp * jnp.dtype(out_dtype).itemsize
    bytes_accessed = int(sum(a.size * a.dtype.itemsize for a in args) + out_bytes)

    kernel = _make_conv_block_kernel(kh, kw, stride, oh, ow, coutp,
                                     shortcut, relu)
    return pl.pallas_call(
        kernel,
        out_shape=jax.ShapeDtypeStruct((n, oh, ow, coutp), out_dtype),
        grid=(n,),
        in_specs=in_specs,
        out_specs=pl.BlockSpec((1, oh, ow, coutp), lambda i: (i, 0, 0, 0)),
        compiler_params=pltpu.CompilerParams(
            dimension_semantics=("parallel",),
            vmem_limit_bytes=32 * 1024 * 1024),
        cost_estimate=pl.CostEstimate(flops=flops, transcendentals=0,
                                      bytes_accessed=bytes_accessed),
    )(*args)


# ---------------------------------------------------------------------------
# Parameter prep (weight layout, BN folding, channel padding)
# ---------------------------------------------------------------------------
def _prep_conv_weight(w, cinp, coutp):
    """PyTorch (Cout, Cin, KH, KW) -> (KH*KW, cinp, coutp) bf16 per-tap mats."""
    cout, cin, kh, kw = w.shape
    wm = jnp.transpose(w, (2, 3, 1, 0)).reshape(kh * kw, cin, cout)
    wm = jnp.pad(wm, ((0, 0), (0, cinp - cin), (0, coutp - cout)))
    return wm.astype(jnp.bfloat16)


def _prep_bn(gamma, beta, mean, var, coutp, eps=1e-5):
    scale = gamma / jnp.sqrt(var + eps)
    bias = beta - mean * scale
    pad = coutp - scale.shape[0]
    scale = jnp.pad(scale, (0, pad)).astype(jnp.float32).reshape(1, coutp)
    bias = jnp.pad(bias, (0, pad)).astype(jnp.float32).reshape(1, coutp)
    return scale, bias


def _pad_channels(x, cp):
    c = x.shape[-1]
    if c == cp:
        return x
    return jnp.pad(x, ((0, 0),) * (x.ndim - 1) + ((0, cp - c),))


# ---------------------------------------------------------------------------
# BasicBlock forward (NCHW in, NCHW out)
# ---------------------------------------------------------------------------
def basic_block_forward(x_nchw, params, strides):
    assert strides in (1, 2), "only stride 1 or 2 supported"
    x = jnp.transpose(x_nchw, (0, 2, 3, 1))                  # NHWC
    n, h, w, cin = x.shape
    cout = params["conv1_w"].shape[0]
    cinp = _round_up(cin, LANE)
    coutp = _round_up(cout, LANE)

    oh = (h - 1) // strides + 1
    ow = (w - 1) // strides + 1

    xb = _pad_channels(x, cinp).astype(jnp.bfloat16)

    # ---- conv1: 3x3, stride=strides, pad=1  + BN + ReLU (fused kernel) ----
    xp = jnp.pad(xb, ((0, 0), (1, 1), (1, 1), (0, 0)))
    phases1 = [xp[:, pi::strides, pj::strides, :]
               for pi in range(strides) for pj in range(strides)]
    w1 = _prep_conv_weight(params["conv1_w"], cinp, coutp)
    s1, b1 = _prep_bn(params["bn1_gamma"], params["bn1_beta"],
                      params["bn1_mean"], params["bn1_var"], coutp)
    out1 = conv_bn_act(phases1, w1, s1, b1, kh=3, kw=3, stride=strides,
                       oh=oh, ow=ow, relu=True, out_dtype=jnp.bfloat16)

    # ---- conv2: 3x3, stride=1, pad=1 + BN + shortcut + ReLU (fused) --------
    out1p = jnp.pad(out1, ((0, 0), (1, 1), (1, 1), (0, 0)))
    w2 = _prep_conv_weight(params["conv2_w"], coutp, coutp)
    s2, b2 = _prep_bn(params["bn2_gamma"], params["bn2_beta"],
                      params["bn2_mean"], params["bn2_var"], coutp)

    if strides != 1:
        # 1x1 stride-s projection shortcut fused into the conv2 kernel.
        x_sub = xb[:, ::strides, ::strides, :]               # (n, oh, ow, cinp)
        wsc = params["sc_w"].reshape(cout, cin).T            # (cin, cout)
        wsc = jnp.pad(wsc, ((0, cinp - cin),
                            (0, coutp - cout))).astype(jnp.bfloat16)
        ssc, bsc = _prep_bn(params["sc_gamma"], params["sc_beta"],
                            params["sc_mean"], params["sc_var"], coutp)
        out = conv_bn_act([out1p], w2, s2, b2, kh=3, kw=3, stride=1,
                          oh=oh, ow=ow, shortcut="proj",
                          shortcut_args=(x_sub, wsc, ssc, bsc),
                          relu=True, out_dtype=jnp.float32)
    else:
        assert cin == cout, "identity shortcut requires Cin == Cout"
        out = conv_bn_act([out1p], w2, s2, b2, kh=3, kw=3, stride=1,
                          oh=oh, ow=ow, shortcut="identity",
                          shortcut_args=(xb,),
                          relu=True, out_dtype=jnp.float32)

    out = out[..., :cout]                                    # drop channel pad
    return jnp.transpose(out, (0, 3, 1, 2))                  # NCHW


# ---------------------------------------------------------------------------
# Pure-JAX reference (lax conv) for correctness checks
# ---------------------------------------------------------------------------
def reference_forward(x, params, strides):
    def conv(x, w, stride, pad):
        return jax.lax.conv_general_dilated(
            x, w, (stride, stride), [(pad, pad), (pad, pad)],
            dimension_numbers=("NCHW", "OIHW", "NCHW"))

    def bn(y, g, b, m, v):
        g, b, m, v = (t[None, :, None, None] for t in (g, b, m, v))
        return (y - m) / jnp.sqrt(v + 1e-5) * g + b

    out = jax.nn.relu(bn(conv(x, params["conv1_w"], strides, 1),
                         params["bn1_gamma"], params["bn1_beta"],
                         params["bn1_mean"], params["bn1_var"]))
    out = bn(conv(out, params["conv2_w"], 1, 1),
             params["bn2_gamma"], params["bn2_beta"],
             params["bn2_mean"], params["bn2_var"])
    if strides != 1:
        sc = bn(conv(x, params["sc_w"], strides, 0),
                params["sc_gamma"], params["sc_beta"],
                params["sc_mean"], params["sc_var"])
    else:
        sc = x
    return jax.nn.relu(out + sc)


# ---------------------------------------------------------------------------
if __name__ == "__main__":
    def bn_params(k, c):
        k0, k1, k2, k3 = jax.random.split(k, 4)
        return (1.0 + 0.1 * jax.random.normal(k0, (c,), jnp.float32),   # gamma
                0.1 * jax.random.normal(k1, (c,), jnp.float32),         # beta
                0.1 * jax.random.normal(k2, (c,), jnp.float32),         # mean
                jax.random.uniform(k3, (c,), jnp.float32, 0.5, 1.5))    # var

    def make_params(key, cin, cout, with_shortcut):
        ks = jax.random.split(key, 6)
        g1, b1, m1, v1 = bn_params(ks[1], cout)
        g2, b2, m2, v2 = bn_params(ks[3], cout)
        p = {
            "conv1_w": 0.1 * jax.random.normal(ks[0], (cout, cin, 3, 3), jnp.float32),
            "bn1_gamma": g1, "bn1_beta": b1, "bn1_mean": m1, "bn1_var": v1,
            "conv2_w": 0.1 * jax.random.normal(ks[2], (cout, cout, 3, 3), jnp.float32),
            "bn2_gamma": g2, "bn2_beta": b2, "bn2_mean": m2, "bn2_var": v2,
        }
        if with_shortcut:
            gs, bs, ms, vs = bn_params(ks[5], cout)
            p.update({
                "sc_w": 0.1 * jax.random.normal(ks[4], (cout, cin, 1, 1), jnp.float32),
                "sc_gamma": gs, "sc_beta": bs, "sc_mean": ms, "sc_var": vs,
            })
        return p

    key = jax.random.PRNGKey(0)
    kp1, kx1, kp2, kx2 = jax.random.split(key, 4)

    # Case 1: downsampling block (stride 2, projection shortcut).
    n, cin, cout, h, w, strides = 2, 4, 8, 16, 16, 2
    params = make_params(kp1, cin, cout, with_shortcut=True)
    x = jax.random.normal(kx1, (n, cin, h, w), jnp.float32)
    fwd = jax.jit(functools.partial(basic_block_forward, strides=strides))
    out = jax.block_until_ready(fwd(x, params))
    ref = jax.block_until_ready(reference_forward(x, params, strides))
    assert out.shape == (n, cout, h // strides, w // strides), out.shape
    err = float(jnp.max(jnp.abs(out - ref)))
    assert jnp.allclose(out, ref, atol=5e-2, rtol=5e-2), err

    # Case 2: identity-shortcut block (stride 1, Cin == Cout).
    n, cin, cout, h, w, strides = 2, 8, 8, 16, 16, 1
    params = make_params(kp2, cin, cout, with_shortcut=False)
    x = jax.random.normal(kx2, (n, cin, h, w), jnp.float32)
    fwd = jax.jit(functools.partial(basic_block_forward, strides=strides))
    out = jax.block_until_ready(fwd(x, params))
    ref = jax.block_until_ready(reference_forward(x, params, strides))
    assert out.shape == (n, cout, h, w), out.shape
    err = float(jnp.max(jnp.abs(out - ref)))
    assert jnp.allclose(out, ref, atol=5e-2, rtol=5e-2), err

    print("KERNEL_OK")
</pallas_src>

<mosaic_0001>
module attributes {stable_mosaic.version = 11 : i64} {
  func.func @kernel(%arg0: i32, %arg1: memref<1x9x9x128xbf16, #tpu.memory_space<vmem>>, %arg2: memref<1x9x9x128xbf16, #tpu.memory_space<vmem>>, %arg3: memref<1x9x9x128xbf16, #tpu.memory_space<vmem>>, %arg4: memref<1x9x9x128xbf16, #tpu.memory_space<vmem>>, %arg5: memref<9x128x128xbf16, #tpu.memory_space<vmem>>, %arg6: memref<1x128xf32, #tpu.memory_space<vmem>>, %arg7: memref<1x128xf32, #tpu.memory_space<vmem>>, %arg8: memref<1x8x8x128xbf16, #tpu.memory_space<vmem>>) attributes {dimension_semantics = [#tpu.dimension_semantics<parallel>], iteration_bounds = array<i64: 2>, scalar_prefetch = 0 : i64, scratch_operands = 0 : i64, tpu.core_type = #tpu.core_type<tc>, window_params = [{transform_indices = @transform_0, window_bounds = array<i64: 1, 9, 9, 128>}, {transform_indices = @transform_1, window_bounds = array<i64: 1, 9, 9, 128>}, {transform_indices = @transform_2, window_bounds = array<i64: 1, 9, 9, 128>}, {transform_indices = @transform_3, window_bounds = array<i64: 1, 9, 9, 128>}, {pipeline_mode = #tpu.pipeline_mode<synchronous>, transform_indices = @transform_4, window_bounds = array<i64: 9, 128, 128>}, {pipeline_mode = #tpu.pipeline_mode<synchronous>, transform_indices = @transform_5, window_bounds = array<i64: 1, 128>}, {pipeline_mode = #tpu.pipeline_mode<synchronous>, transform_indices = @transform_6, window_bounds = array<i64: 1, 128>}, {transform_indices = @transform_7, window_bounds = array<i64: 1, 8, 8, 128>}]} {
    %cst = arith.constant 0.000000e+00 : f32
    %0 = vector.broadcast %cst : f32 to vector<64x128xf32>
    %c0 = arith.constant 0 : index
    %c0_0 = arith.constant 0 : index
    %c0_1 = arith.constant 0 : index
    %c0_2 = arith.constant 0 : index
    %1 = vector.load %arg1[%c0, %c0_0, %c0_1, %c0_2] : memref<1x9x9x128xbf16, #tpu.memory_space<vmem>>, vector<1x8x8x128xbf16>
    %2 = vector.shape_cast %1 : vector<1x8x8x128xbf16> to vector<8x8x128xbf16>
    %3 = vector.shape_cast %2 : vector<8x8x128xbf16> to vector<64x128xbf16>
    %c0_3 = arith.constant 0 : index
    %c0_4 = arith.constant 0 : index
    %c0_5 = arith.constant 0 : index
    %4 = vector.load %arg5[%c0_3, %c0_4, %c0_5] : memref<9x128x128xbf16, #tpu.memory_space<vmem>>, vector<1x128x128xbf16>
    %5 = vector.shape_cast %4 : vector<1x128x128xbf16> to vector<128x128xbf16>
    %cst_6 = arith.constant dense<0.000000e+00> : vector<64x128xf32>
    %6 = tpu.matmul %3, %5, %cst_6 {dimension_numbers = #tpu.dot_dimension_numbers<[1], [0], [0], [1], [0, 0, 1, 1], [], []>} : vector<64x128xbf16>, vector<128x128xbf16>, vector<64x128xf32> -> vector<64x128xf32>
    %7 = arith.addf %0, %6 : vector<64x128xf32>
    %c0_7 = arith.constant 0 : index
    %c0_8 = arith.constant 0 : index
    %c0_9 = arith.constant 0 : index
    %c0_10 = arith.constant 0 : index
    %8 = vector.load %arg2[%c0_7, %c0_8, %c0_9, %c0_10] : memref<1x9x9x128xbf16, #tpu.memory_space<vmem>>, vector<1x8x8x128xbf16>
    %9 = vector.shape_cast %8 : vector<1x8x8x128xbf16> to vector<8x8x128xbf16>
    %10 = vector.shape_cast %9 : vector<8x8x128xbf16> to vector<64x128xbf16>
    %c1 = arith.constant 1 : index
    %c0_11 = arith.constant 0 : index
    %c0_12 = arith.constant 0 : index
    %11 = vector.load %arg5[%c1, %c0_11, %c0_12] : memref<9x128x128xbf16, #tpu.memory_space<vmem>>, vector<1x128x128xbf16>
    %12 = vector.shape_cast %11 : vector<1x128x128xbf16> to vector<128x128xbf16>
    %cst_13 = arith.constant dense<0.000000e+00> : vector<64x128xf32>
    %13 = tpu.matmul %10, %12, %cst_13 {dimension_numbers = #tpu.dot_dimension_numbers<[1], [0], [0], [1], [0, 0, 1, 1], [], []>} : vector<64x128xbf16>, vector<128x128xbf16>, vector<64x128xf32> -> vector<64x128xf32>
    %14 = arith.addf %7, %13 : vector<64x128xf32>
    %c0_14 = arith.constant 0 : index
    %c0_15 = arith.constant 0 : index
    %c1_16 = arith.constant 1 : index
    %c0_17 = arith.constant 0 : index
    %15 = vector.load %arg1[%c0_14, %c0_15, %c1_16, %c0_17] : memref<1x9x9x128xbf16, #tpu.memory_space<vmem>>, vector<1x8x8x128xbf16>
    %16 = vector.shape_cast %15 : vector<1x8x8x128xbf16> to vector<8x8x128xbf16>
    %17 = vector.shape_cast %16 : vector<8x8x128xbf16> to vector<64x128xbf16>
    %c2 = arith.constant 2 : index
    %c0_18 = arith.constant 0 : index
    %c0_19 = arith.constant 0 : index
    %18 = vector.load %arg5[%c2, %c0_18, %c0_19] : memref<9x128x128xbf16, #tpu.memory_space<vmem>>, vector<1x128x128xbf16>
    %19 = vector.shape_cast %18 : vector<1x128x128xbf16> to vector<128x128xbf16>
    %cst_20 = arith.constant dense<0.000000e+00> : vector<64x128xf32>
    %20 = tpu.matmul %17, %19, %cst_20 {dimension_numbers = #tpu.dot_dimension_numbers<[1], [0], [0], [1], [0, 0, 1, 1], [], []>} : vector<64x128xbf16>, vector<128x128xbf16>, vector<64x128xf32> -> vector<64x128xf32>
    %21 = arith.addf %14, %20 : vector<64x128xf32>
    %c0_21 = arith.constant 0 : index
    %c0_22 = arith.constant 0 : index
    %c0_23 = arith.constant 0 : index
    %c0_24 = arith.constant 0 : index
    %22 = vector.load %arg3[%c0_21, %c0_22, %c0_23, %c0_24] : memref<1x9x9x128xbf16, #tpu.memory_space<vmem>>, vector<1x8x8x128xbf16>
    %23 = vector.shape_cast %22 : vector<1x8x8x128xbf16> to vector<8x8x128xbf16>
    %24 = vector.shape_cast %23 : vector<8x8x128xbf16> to vector<64x128xbf16>
    %c3 = arith.constant 3 : index
    %c0_25 = arith.constant 0 : index
    %c0_26 = arith.constant 0 : index
    %25 = vector.load %arg5[%c3, %c0_25, %c0_26] : memref<9x128x128xbf16, #tpu.memory_space<vmem>>, vector<1x128x128xbf16>
    %26 = vector.shape_cast %25 : vector<1x128x128xbf16> to vector<128x128xbf16>
    %cst_27 = arith.constant dense<0.000000e+00> : vector<64x128xf32>
    %27 = tpu.matmul %24, %26, %cst_27 {dimension_numbers = #tpu.dot_dimension_numbers<[1], [0], [0], [1], [0, 0, 1, 1], [], []>} : vector<64x128xbf16>, vector<128x128xbf16>, vector<64x128xf32> -> vector<64x128xf32>
    %28 = arith.addf %21, %27 : vector<64x128xf32>
    %c0_28 = arith.constant 0 : index
    %c0_29 = arith.constant 0 : index
    %c0_30 = arith.constant 0 : index
    %c0_31 = arith.constant 0 : index
    %29 = vector.load %arg4[%c0_28, %c0_29, %c0_30, %c0_31] : memref<1x9x9x128xbf16, #tpu.memory_space<vmem>>, vector<1x8x8x128xbf16>
    %30 = vector.shape_cast %29 : vector<1x8x8x128xbf16> to vector<8x8x128xbf16>
    %31 = vector.shape_cast %30 : vector<8x8x128xbf16> to vector<64x128xbf16>
    %c4 = arith.constant 4 : index
    %c0_32 = arith.constant 0 : index
    %c0_33 = arith.constant 0 : index
    %32 = vector.load %arg5[%c4, %c0_32, %c0_33] : memref<9x128x128xbf16, #tpu.memory_space<vmem>>, vector<1x128x128xbf16>
    %33 = vector.shape_cast %32 : vector<1x128x128xbf16> to vector<128x128xbf16>
    %cst_34 = arith.constant dense<0.000000e+00> : vector<64x128xf32>
    %34 = tpu.matmul %31, %33, %cst_34 {dimension_numbers = #tpu.dot_dimension_numbers<[1], [0], [0], [1], [0, 0, 1, 1], [], []>} : vector<64x128xbf16>, vector<128x128xbf16>, vector<64x128xf32> -> vector<64x128xf32>
    %35 = arith.addf %28, %34 : vector<64x128xf32>
    %c0_35 = arith.constant 0 : index
    %c0_36 = arith.constant 0 : index
    %c1_37 = arith.constant 1 : index
    %c0_38 = arith.constant 0 : index
    %36 = vector.load %arg3[%c0_35, %c0_36, %c1_37, %c0_38] : memref<1x9x9x128xbf16, #tpu.memory_space<vmem>>, vector<1x8x8x128xbf16>
    %37 = vector.shape_cast %36 : vector<1x8x8x128xbf16> to vector<8x8x128xbf16>
    %38 = vector.shape_cast %37 : vector<8x8x128xbf16> to vector<64x128xbf16>
    %c5 = arith.constant 5 : index
    %c0_39 = arith.constant 0 : index
    %c0_40 = arith.constant 0 : index
    %39 = vector.load %arg5[%c5, %c0_39, %c0_40] : memref<9x128x128xbf16, #tpu.memory_space<vmem>>, vector<1x128x128xbf16>
    %40 = vector.shape_cast %39 : vector<1x128x128xbf16> to vector<128x128xbf16>
    %cst_41 = arith.constant dense<0.000000e+00> : vector<64x128xf32>
    %41 = tpu.matmul %38, %40, %cst_41 {dimension_numbers = #tpu.dot_dimension_numbers<[1], [0], [0], [1], [0, 0, 1, 1], [], []>} : vector<64x128xbf16>, vector<128x128xbf16>, vector<64x128xf32> -> vector<64x128xf32>
    %42 = arith.addf %35, %41 : vector<64x128xf32>
    %c0_42 = arith.constant 0 : index
    %c1_43 = arith.constant 1 : index
    %c0_44 = arith.constant 0 : index
    %c0_45 = arith.constant 0 : index
    %43 = vector.load %arg1[%c0_42, %c1_43, %c0_44, %c0_45] : memref<1x9x9x128xbf16, #tpu.memory_space<vmem>>, vector<1x8x8x128xbf16>
    %44 = vector.shape_cast %43 : vector<1x8x8x128xbf16> to vector<8x8x128xbf16>
    %45 = vector.shape_cast %44 : vector<8x8x128xbf16> to vector<64x128xbf16>
    %c6 = arith.constant 6 : index
    %c0_46 = arith.constant 0 : index
    %c0_47 = arith.constant 0 : index
    %46 = vector.load %arg5[%c6, %c0_46, %c0_47] : memref<9x128x128xbf16, #tpu.memory_space<vmem>>, vector<1x128x128xbf16>
    %47 = vector.shape_cast %46 : vector<1x128x128xbf16> to vector<128x128xbf16>
    %cst_48 = arith.constant dense<0.000000e+00> : vector<64x128xf32>
    %48 = tpu.matmul %45, %47, %cst_48 {dimension_numbers = #tpu.dot_dimension_numbers<[1], [0], [0], [1], [0, 0, 1, 1], [], []>} : vector<64x128xbf16>, vector<128x128xbf16>, vector<64x128xf32> -> vector<64x128xf32>
    %49 = arith.addf %42, %48 : vector<64x128xf32>
    %c0_49 = arith.constant 0 : index
    %c1_50 = arith.constant 1 : index
    %c0_51 = arith.constant 0 : index
    %c0_52 = arith.constant 0 : index
    %50 = vector.load %arg2[%c0_49, %c1_50, %c0_51, %c0_52] : memref<1x9x9x128xbf16, #tpu.memory_space<vmem>>, vector<1x8x8x128xbf16>
    %51 = vector.shape_cast %50 : vector<1x8x8x128xbf16> to vector<8x8x128xbf16>
    %52 = vector.shape_cast %51 : vector<8x8x128xbf16> to vector<64x128xbf16>
    %c7 = arith.constant 7 : index
    %c0_53 = arith.constant 0 : index
    %c0_54 = arith.constant 0 : index
    %53 = vector.load %arg5[%c7, %c0_53, %c0_54] : memref<9x128x128xbf16, #tpu.memory_space<vmem>>, vector<1x128x128xbf16>
    %54 = vector.shape_cast %53 : vector<1x128x128xbf16> to vector<128x128xbf16>
    %cst_55 = arith.constant dense<0.000000e+00> : vector<64x128xf32>
    %55 = tpu.matmul %52, %54, %cst_55 {dimension_numbers = #tpu.dot_dimension_numbers<[1], [0], [0], [1], [0, 0, 1, 1], [], []>} : vector<64x128xbf16>, vector<128x128xbf16>, vector<64x128xf32> -> vector<64x128xf32>
    %56 = arith.addf %49, %55 : vector<64x128xf32>
    %c0_56 = arith.constant 0 : index
    %c1_57 = arith.constant 1 : index
    %c1_58 = arith.constant 1 : index
    %c0_59 = arith.constant 0 : index
    %57 = vector.load %arg1[%c0_56, %c1_57, %c1_58, %c0_59] : memref<1x9x9x128xbf16, #tpu.memory_space<vmem>>, vector<1x8x8x128xbf16>
    %58 = vector.shape_cast %57 : vector<1x8x8x128xbf16> to vector<8x8x128xbf16>
    %59 = vector.shape_cast %58 : vector<8x8x128xbf16> to vector<64x128xbf16>
    %c8 = arith.constant 8 : index
    %c0_60 = arith.constant 0 : index
    %c0_61 = arith.constant 0 : index
    %60 = vector.load %arg5[%c8, %c0_60, %c0_61] : memref<9x128x128xbf16, #tpu.memory_space<vmem>>, vector<1x128x128xbf16>
    %61 = vector.shape_cast %60 : vector<1x128x128xbf16> to vector<128x128xbf16>
    %cst_62 = arith.constant dense<0.000000e+00> : vector<64x128xf32>
    %62 = tpu.matmul %59, %61, %cst_62 {dimension_numbers = #tpu.dot_dimension_numbers<[1], [0], [0], [1], [0, 0, 1, 1], [], []>} : vector<64x128xbf16>, vector<128x128xbf16>, vector<64x128xf32> -> vector<64x128xf32>
    %63 = arith.addf %56, %62 : vector<64x128xf32>
    %c0_63 = arith.constant 0 : index
    %c0_64 = arith.constant 0 : index
    %64 = vector.load %arg6[%c0_63, %c0_64] : memref<1x128xf32, #tpu.memory_space<vmem>>, vector<1x128xf32>
    %65 = vector.broadcast %64 : vector<1x128xf32> to vector<64x128xf32>
    %66 = arith.mulf %63, %65 : vector<64x128xf32>
    %c0_65 = arith.constant 0 : index
    %c0_66 = arith.constant 0 : index
    %67 = vector.load %arg7[%c0_65, %c0_66] : memref<1x128xf32, #tpu.memory_space<vmem>>, vector<1x128xf32>
    %68 = vector.broadcast %67 : vector<1x128xf32> to vector<64x128xf32>
    %69 = arith.addf %66, %68 : vector<64x128xf32>
    %cst_67 = arith.constant 0.000000e+00 : f32
    %70 = vector.broadcast %cst_67 : f32 to vector<64x128xf32>
    %71 = arith.maximumf %69, %70 : vector<64x128xf32>
    %72 = vector.shape_cast %71 : vector<64x128xf32> to vector<1x8x8x128xf32>
    %73 = arith.truncf %72 : vector<1x8x8x128xf32> to vector<1x8x8x128xbf16>
    %c0_68 = arith.constant 0 : index
    %c0_69 = arith.constant 0 : index
    %c0_70 = arith.constant 0 : index
    %c0_71 = arith.constant 0 : index
    %74 = vector.load %arg8[%c0_68, %c0_69, %c0_70, %c0_71] : memref<1x8x8x128xbf16, #tpu.memory_space<vmem>>, vector<1x8x8x128xbf16>
    tpu.vector_store %arg8[%c0_68, %c0_69, %c0_70, %c0_71], %73 {strides = array<i32>} : memref<1x8x8x128xbf16, #tpu.memory_space<vmem>>, vector<1x8x8x128xbf16>,
    return
  }
  func.func @transform_0(%arg0: i32) -> (i32, i32, i32, i32) {
    %c0_i32 = arith.constant 0 : i32
    %c0_i32_0 = arith.constant 0 : i32
    %c0_i32_1 = arith.constant 0 : i32
    %c0_i32_2 = arith.constant 0 : i32
    return %arg0, %c0_i32, %c0_i32_0, %c0_i32_1 : i32, i32, i32, i32
  }
  func.func @transform_1(%arg0: i32) -> (i32, i32, i32, i32) {
    %c0_i32 = arith.constant 0 : i32
    %c0_i32_0 = arith.constant 0 : i32
    %c0_i32_1 = arith.constant 0 : i32
    %c0_i32_2 = arith.constant 0 : i32
    return %arg0, %c0_i32, %c0_i32_0, %c0_i32_1 : i32, i32, i32, i32
  }
  func.func @transform_2(%arg0: i32) -> (i32, i32, i32, i32) {
    %c0_i32 = arith.constant 0 : i32
    %c0_i32_0 = arith.constant 0 : i32
    %c0_i32_1 = arith.constant 0 : i32
    %c0_i32_2 = arith.constant 0 : i32
    return %arg0, %c0_i32, %c0_i32_0, %c0_i32_1 : i32, i32, i32, i32
  }
  func.func @transform_3(%arg0: i32) -> (i32, i32, i32, i32) {
    %c0_i32 = arith.constant 0 : i32
    %c0_i32_0 = arith.constant 0 : i32
    %c0_i32_1 = arith.constant 0 : i32
    %c0_i32_2 = arith.constant 0 : i32
    return %arg0, %c0_i32, %c0_i32_0, %c0_i32_1 : i32, i32, i32, i32
  }
  func.func @transform_4(%arg0: i32) -> (i32, i32, i32) {
    %c0_i32 = arith.constant 0 : i32
    %c0_i32_0 = arith.constant 0 : i32
    %c0_i32_1 = arith.constant 0 : i32
    %c0_i32_2 = arith.constant 0 : i32
    return %c0_i32, %c0_i32_0, %c0_i32_1 : i32, i32, i32
  }
  func.func @transform_5(%arg0: i32) -> (i32, i32) {
    %c0_i32 = arith.constant 0 : i32
    %c0_i32_0 = arith.constant 0 : i32
    %c0_i32_1 = arith.constant 0 : i32
    return %c0_i32, %c0_i32_0 : i32, i32
  }
  func.func @transform_6(%arg0: i32) -> (i32, i32) {
    %c0_i32 = arith.constant 0 : i32
    %c0_i32_0 = arith.constant 0 : i32
    %c0_i32_1 = arith.constant 0 : i32
    return %c0_i32, %c0_i32_0 : i32, i32
  }
  func.func @transform_7(%arg0: i32) -> (i32, i32, i32, i32) {
    %c0_i32 = arith.constant 0 : i32
    %c0_i32_0 = arith.constant 0 : i32
    %c0_i32_1 = arith.constant 0 : i32
    %c0_i32_2 = arith.constant 0 : i32
    return %arg0, %c0_i32, %c0_i32_0, %c0_i32_1 : i32, i32, i32, i32
  }
}

module attributes {stable_mosaic.version = 11 : i64} {
  func.func @kernel(%arg0: i32, %arg1: memref<1x10x10x128xbf16, #tpu.memory_space<vmem>>, %arg2: memref<9x128x128xbf16, #tpu.memory_space<vmem>>, %arg3: memref<1x128xf32, #tpu.memory_space<vmem>>, %arg4: memref<1x128xf32, #tpu.memory_space<vmem>>, %arg5: memref<1x8x8x128xbf16, #tpu.memory_space<vmem>>, %arg6: memref<128x128xbf16, #tpu.memory_space<vmem>>, %arg7: memref<1x128xf32, #tpu.memory_space<vmem>>, %arg8: memref<1x128xf32, #tpu.memory_space<vmem>>, %arg9: memref<1x8x8x128xf32, #tpu.memory_space<vmem>>) attributes {dimension_semantics = [#tpu.dimension_semantics<parallel>], iteration_bounds = array<i64: 2>, scalar_prefetch = 0 : i64, scratch_operands = 0 : i64, tpu.core_type = #tpu.core_type<tc>, window_params = [{transform_indices = @transform_0, window_bounds = array<i64: 1, 10, 10, 128>}, {pipeline_mode = #tpu.pipeline_mode<synchronous>, transform_indices = @transform_1, window_bounds = array<i64: 9, 128, 128>}, {pipeline_mode = #tpu.pipeline_mode<synchronous>, transform_indices = @transform_2, window_bounds = array<i64: 1, 128>}, {pipeline_mode = #tpu.pipeline_mode<synchronous>, transform_indices = @transform_3, window_bounds = array<i64: 1, 128>}, {transform_indices = @transform_4, window_bounds = array<i64: 1, 8, 8, 128>}, {pipeline_mode = #tpu.pipeline_mode<synchronous>, transform_indices = @transform_5, window_bounds = array<i64: 128, 128>}, {pipeline_mode = #tpu.pipeline_mode<synchronous>, transform_indices = @transform_6, window_bounds = array<i64: 1, 128>}, {pipeline_mode = #tpu.pipeline_mode<synchronous>, transform_indices = @transform_7, window_bounds = array<i64: 1, 128>}, {transform_indices = @transform_8, window_bounds = array<i64: 1, 8, 8, 128>}]} {
    %cst = arith.constant 0.000000e+00 : f32
    %0 = vector.broadcast %cst : f32 to vector<64x128xf32>
    %c0 = arith.constant 0 : index
    %c0_0 = arith.constant 0 : index
    %c0_1 = arith.constant 0 : index
    %c0_2 = arith.constant 0 : index
    %1 = vector.load %arg1[%c0, %c0_0, %c0_1, %c0_2] : memref<1x10x10x128xbf16, #tpu.memory_space<vmem>>, vector<1x8x8x128xbf16>
    %2 = vector.shape_cast %1 : vector<1x8x8x128xbf16> to vector<8x8x128xbf16>
    %3 = vector.shape_cast %2 : vector<8x8x128xbf16> to vector<64x128xbf16>
    %c0_3 = arith.constant 0 : index
    %c0_4 = arith.constant 0 : index
    %c0_5 = arith.constant 0 : index
    %4 = vector.load %arg2[%c0_3, %c0_4, %c0_5] : memref<9x128x128xbf16, #tpu.memory_space<vmem>>, vector<1x128x128xbf16>
    %5 = vector.shape_cast %4 : vector<1x128x128xbf16> to vector<128x128xbf16>
    %cst_6 = arith.constant dense<0.000000e+00> : vector<64x128xf32>
    %6 = tpu.matmul %3, %5, %cst_6 {dimension_numbers = #tpu.dot_dimension_numbers<[1], [0], [0], [1], [0, 0, 1, 1], [], []>} : vector<64x128xbf16>, vector<128x128xbf16>, vector<64x128xf32> -> vector<64x128xf32>
    %7 = arith.addf %0, %6 : vector<64x128xf32>
    %c0_7 = arith.constant 0 : index
    %c0_8 = arith.constant 0 : index
    %c1 = arith.constant 1 : index
    %c0_9 = arith.constant 0 : index
    %8 = vector.load %arg1[%c0_7, %c0_8, %c1, %c0_9] : memref<1x10x10x128xbf16, #tpu.memory_space<vmem>>, vector<1x8x8x128xbf16>
    %9 = vector.shape_cast %8 : vector<1x8x8x128xbf16> to vector<8x8x128xbf16>
    %10 = vector.shape_cast %9 : vector<8x8x128xbf16> to vector<64x128xbf16>
    %c1_10 = arith.constant 1 : index
    %c0_11 = arith.constant 0 : index
    %c0_12 = arith.constant 0 : index
    %11 = vector.load %arg2[%c1_10, %c0_11, %c0_12] : memref<9x128x128xbf16, #tpu.memory_space<vmem>>, vector<1x128x128xbf16>
    %12 = vector.shape_cast %11 : vector<1x128x128xbf16> to vector<128x128xbf16>
    %cst_13 = arith.constant dense<0.000000e+00> : vector<64x128xf32>
    %13 = tpu.matmul %10, %12, %cst_13 {dimension_numbers = #tpu.dot_dimension_numbers<[1], [0], [0], [1], [0, 0, 1, 1], [], []>} : vector<64x128xbf16>, vector<128x128xbf16>, vector<64x128xf32> -> vector<64x128xf32>
    %14 = arith.addf %7, %13 : vector<64x128xf32>
    %c0_14 = arith.constant 0 : index
    %c0_15 = arith.constant 0 : index
    %c2 = arith.constant 2 : index
    %c0_16 = arith.constant 0 : index
    %15 = vector.load %arg1[%c0_14, %c0_15, %c2, %c0_16] : memref<1x10x10x128xbf16, #tpu.memory_space<vmem>>, vector<1x8x8x128xbf16>
    %16 = vector.shape_cast %15 : vector<1x8x8x128xbf16> to vector<8x8x128xbf16>
    %17 = vector.shape_cast %16 : vector<8x8x128xbf16> to vector<64x128xbf16>
    %c2_17 = arith.constant 2 : index
    %c0_18 = arith.constant 0 : index
    %c0_19 = arith.constant 0 : index
    %18 = vector.load %arg2[%c2_17, %c0_18, %c0_19] : memref<9x128x128xbf16, #tpu.memory_space<vmem>>, vector<1x128x128xbf16>
    %19 = vector.shape_cast %18 : vector<1x128x128xbf16> to vector<128x128xbf16>
    %cst_20 = arith.constant dense<0.000000e+00> : vector<64x128xf32>
    %20 = tpu.matmul %17, %19, %cst_20 {dimension_numbers = #tpu.dot_dimension_numbers<[1], [0], [0], [1], [0, 0, 1, 1], [], []>} : vector<64x128xbf16>, vector<128x128xbf16>, vector<64x128xf32> -> vector<64x128xf32>
    %21 = arith.addf %14, %20 : vector<64x128xf32>
    %c0_21 = arith.constant 0 : index
    %c1_22 = arith.constant 1 : index
    %c0_23 = arith.constant 0 : index
    %c0_24 = arith.constant 0 : index
    %22 = vector.load %arg1[%c0_21, %c1_22, %c0_23, %c0_24] : memref<1x10x10x128xbf16, #tpu.memory_space<vmem>>, vector<1x8x8x128xbf16>
    %23 = vector.shape_cast %22 : vector<1x8x8x128xbf16> to vector<8x8x128xbf16>
    %24 = vector.shape_cast %23 : vector<8x8x128xbf16> to vector<64x128xbf16>
    %c3 = arith.constant 3 : index
    %c0_25 = arith.constant 0 : index
    %c0_26 = arith.constant 0 : index
    %25 = vector.load %arg2[%c3, %c0_25, %c0_26] : memref<9x128x128xbf16, #tpu.memory_space<vmem>>, vector<1x128x128xbf16>
    %26 = vector.shape_cast %25 : vector<1x128x128xbf16> to vector<128x128xbf16>
    %cst_27 = arith.constant dense<0.000000e+00> : vector<64x128xf32>
    %27 = tpu.matmul %24, %26, %cst_27 {dimension_numbers = #tpu.dot_dimension_numbers<[1], [0], [0], [1], [0, 0, 1, 1], [], []>} : vector<64x128xbf16>, vector<128x128xbf16>, vector<64x128xf32> -> vector<64x128xf32>
    %28 = arith.addf %21, %27 : vector<64x128xf32>
    %c0_28 = arith.constant 0 : index
    %c1_29 = arith.constant 1 : index
    %c1_30 = arith.constant 1 : index
    %c0_31 = arith.constant 0 : index
    %29 = vector.load %arg1[%c0_28, %c1_29, %c1_30, %c0_31] : memref<1x10x10x128xbf16, #tpu.memory_space<vmem>>, vector<1x8x8x128xbf16>
    %30 = vector.shape_cast %29 : vector<1x8x8x128xbf16> to vector<8x8x128xbf16>
    %31 = vector.shape_cast %30 : vector<8x8x128xbf16> to vector<64x128xbf16>
    %c4 = arith.constant 4 : index
    %c0_32 = arith.constant 0 : index
    %c0_33 = arith.constant 0 : index
    %32 = vector.load %arg2[%c4, %c0_32, %c0_33] : memref<9x128x128xbf16, #tpu.memory_space<vmem>>, vector<1x128x128xbf16>
    %33 = vector.shape_cast %32 : vector<1x128x128xbf16> to vector<128x128xbf16>
    %cst_34 = arith.constant dense<0.000000e+00> : vector<64x128xf32>
    %34 = tpu.matmul %31, %33, %cst_34 {dimension_numbers = #tpu.dot_dimension_numbers<[1], [0], [0], [1], [0, 0, 1, 1], [], []>} : vector<64x128xbf16>, vector<128x128xbf16>, vector<64x128xf32> -> vector<64x128xf32>
    %35 = arith.addf %28, %34 : vector<64x128xf32>
    %c0_35 = arith.constant 0 : index
    %c1_36 = arith.constant 1 : index
    %c2_37 = arith.constant 2 : index
    %c0_38 = arith.constant 0 : index
    %36 = vector.load %arg1[%c0_35, %c1_36, %c2_37, %c0_38] : memref<1x10x10x128xbf16, #tpu.memory_space<vmem>>, vector<1x8x8x128xbf16>
    %37 = vector.shape_cast %36 : vector<1x8x8x128xbf16> to vector<8x8x128xbf16>
    %38 = vector.shape_cast %37 : vector<8x8x128xbf16> to vector<64x128xbf16>
    %c5 = arith.constant 5 : index
    %c0_39 = arith.constant 0 : index
    %c0_40 = arith.constant 0 : index
    %39 = vector.load %arg2[%c5, %c0_39, %c0_40] : memref<9x128x128xbf16, #tpu.memory_space<vmem>>, vector<1x128x128xbf16>
    %40 = vector.shape_cast %39 : vector<1x128x128xbf16> to vector<128x128xbf16>
    %cst_41 = arith.constant dense<0.000000e+00> : vector<64x128xf32>
    %41 = tpu.matmul %38, %40, %cst_41 {dimension_numbers = #tpu.dot_dimension_numbers<[1], [0], [0], [1], [0, 0, 1, 1], [], []>} : vector<64x128xbf16>, vector<128x128xbf16>, vector<64x128xf32> -> vector<64x128xf32>
    %42 = arith.addf %35, %41 : vector<64x128xf32>
    %c0_42 = arith.constant 0 : index
    %c2_43 = arith.constant 2 : index
    %c0_44 = arith.constant 0 : index
    %c0_45 = arith.constant 0 : index
    %43 = vector.load %arg1[%c0_42, %c2_43, %c0_44, %c0_45] : memref<1x10x10x128xbf16, #tpu.memory_space<vmem>>, vector<1x8x8x128xbf16>
    %44 = vector.shape_cast %43 : vector<1x8x8x128xbf16> to vector<8x8x128xbf16>
    %45 = vector.shape_cast %44 : vector<8x8x128xbf16> to vector<64x128xbf16>
    %c6 = arith.constant 6 : index
    %c0_46 = arith.constant 0 : index
    %c0_47 = arith.constant 0 : index
    %46 = vector.load %arg2[%c6, %c0_46, %c0_47] : memref<9x128x128xbf16, #tpu.memory_space<vmem>>, vector<1x128x128xbf16>
    %47 = vector.shape_cast %46 : vector<1x128x128xbf16> to vector<128x128xbf16>
    %cst_48 = arith.constant dense<0.000000e+00> : vector<64x128xf32>
    %48 = tpu.matmul %45, %47, %cst_48 {dimension_numbers = #tpu.dot_dimension_numbers<[1], [0], [0], [1], [0, 0, 1, 1], [], []>} : vector<64x128xbf16>, vector<128x128xbf16>, vector<64x128xf32> -> vector<64x128xf32>
    %49 = arith.addf %42, %48 : vector<64x128xf32>
    %c0_49 = arith.constant 0 : index
    %c2_50 = arith.constant 2 : index
    %c1_51 = arith.constant 1 : index
    %c0_52 = arith.constant 0 : index
    %50 = vector.load %arg1[%c0_49, %c2_50, %c1_51, %c0_52] : memref<1x10x10x128xbf16, #tpu.memory_space<vmem>>, vector<1x8x8x128xbf16>
    %51 = vector.shape_cast %50 : vector<1x8x8x128xbf16> to vector<8x8x128xbf16>
    %52 = vector.shape_cast %51 : vector<8x8x128xbf16> to vector<64x128xbf16>
    %c7 = arith.constant 7 : index
    %c0_53 = arith.constant 0 : index
    %c0_54 = arith.constant 0 : index
    %53 = vector.load %arg2[%c7, %c0_53, %c0_54] : memref<9x128x128xbf16, #tpu.memory_space<vmem>>, vector<1x128x128xbf16>
    %54 = vector.shape_cast %53 : vector<1x128x128xbf16> to vector<128x128xbf16>
    %cst_55 = arith.constant dense<0.000000e+00> : vector<64x128xf32>
    %55 = tpu.matmul %52, %54, %cst_55 {dimension_numbers = #tpu.dot_dimension_numbers<[1], [0], [0], [1], [0, 0, 1, 1], [], []>} : vector<64x128xbf16>, vector<128x128xbf16>, vector<64x128xf32> -> vector<64x128xf32>
    %56 = arith.addf %49, %55 : vector<64x128xf32>
    %c0_56 = arith.constant 0 : index
    %c2_57 = arith.constant 2 : index
    %c2_58 = arith.constant 2 : index
    %c0_59 = arith.constant 0 : index
    %57 = vector.load %arg1[%c0_56, %c2_57, %c2_58, %c0_59] : memref<1x10x10x128xbf16, #tpu.memory_space<vmem>>, vector<1x8x8x128xbf16>
    %58 = vector.shape_cast %57 : vector<1x8x8x128xbf16> to vector<8x8x128xbf16>
    %59 = vector.shape_cast %58 : vector<8x8x128xbf16> to vector<64x128xbf16>
    %c8 = arith.constant 8 : index
    %c0_60 = arith.constant 0 : index
    %c0_61 = arith.constant 0 : index
    %60 = vector.load %arg2[%c8, %c0_60, %c0_61] : memref<9x128x128xbf16, #tpu.memory_space<vmem>>, vector<1x128x128xbf16>
    %61 = vector.shape_cast %60 : vector<1x128x128xbf16> to vector<128x128xbf16>
    %cst_62 = arith.constant dense<0.000000e+00> : vector<64x128xf32>
    %62 = tpu.matmul %59, %61, %cst_62 {dimension_numbers = #tpu.dot_dimension_numbers<[1], [0], [0], [1], [0, 0, 1, 1], [], []>} : vector<64x128xbf16>, vector<128x128xbf16>, vector<64x128xf32> -> vector<64x128xf32>
    %63 = arith.addf %56, %62 : vector<64x128xf32>
    %c0_63 = arith.constant 0 : index
    %c0_64 = arith.constant 0 : index
    %64 = vector.load %arg3[%c0_63, %c0_64] : memref<1x128xf32, #tpu.memory_space<vmem>>, vector<1x128xf32>
    %65 = vector.broadcast %64 : vector<1x128xf32> to vector<64x128xf32>
    %66 = arith.mulf %63, %65 : vector<64x128xf32>
    %c0_65 = arith.constant 0 : index
    %c0_66 = arith.constant 0 : index
    %67 = vector.load %arg4[%c0_65, %c0_66] : memref<1x128xf32, #tpu.memory_space<vmem>>, vector<1x128xf32>
    %68 = vector.broadcast %67 : vector<1x128xf32> to vector<64x128xf32>
    %69 = arith.addf %66, %68 : vector<64x128xf32>
    %c0_67 = arith.constant 0 : index
    %c0_68 = arith.constant 0 : index
    %c0_69 = arith.constant 0 : index
    %c0_70 = arith.constant 0 : index
    %70 = vector.load %arg5[%c0_67, %c0_68, %c0_69, %c0_70] : memref<1x8x8x128xbf16, #tpu.memory_space<vmem>>, vector<1x8x8x128xbf16>
    %71 = vector.shape_cast %70 : vector<1x8x8x128xbf16> to vector<8x8x128xbf16>
    %72 = vector.shape_cast %71 : vector<8x8x128xbf16> to vector<64x128xbf16>
    %c0_71 = arith.constant 0 : index
    %c0_72 = arith.constant 0 : index
    %73 = vector.load %arg6[%c0_71, %c0_72] : memref<128x128xbf16, #tpu.memory_space<vmem>>, vector<128x128xbf16>
    %cst_73 = arith.constant dense<0.000000e+00> : vector<64x128xf32>
    %74 = tpu.matmul %72, %73, %cst_73 {dimension_numbers = #tpu.dot_dimension_numbers<[1], [0], [0], [1], [0, 0, 1, 1], [], []>} : vector<64x128xbf16>, vector<128x128xbf16>, vector<64x128xf32> -> vector<64x128xf32>
    %c0_74 = arith.constant 0 : index
    %c0_75 = arith.constant 0 : index
    %75 = vector.load %arg7[%c0_74, %c0_75] : memref<1x128xf32, #tpu.memory_space<vmem>>, vector<1x128xf32>
    %76 = vector.broadcast %75 : vector<1x128xf32> to vector<64x128xf32>
    %77 = arith.mulf %74, %76 : vector<64x128xf32>
    %78 = arith.addf %69, %77 : vector<64x128xf32>
    %c0_76 = arith.constant 0 : index
    %c0_77 = arith.constant 0 : index
    %79 = vector.load %arg8[%c0_76, %c0_77] : memref<1x128xf32, #tpu.memory_space<vmem>>, vector<1x128xf32>
    %80 = vector.broadcast %79 : vector<1x128xf32> to vector<64x128xf32>
    %81 = arith.addf %78, %80 : vector<64x128xf32>
    %cst_78 = arith.constant 0.000000e+00 : f32
    %82 = vector.broadcast %cst_78 : f32 to vector<64x128xf32>
    %83 = arith.maximumf %81, %82 : vector<64x128xf32>
    %84 = vector.shape_cast %83 : vector<64x128xf32> to vector<1x8x8x128xf32>
    %c0_79 = arith.constant 0 : index
    %c0_80 = arith.constant 0 : index
    %c0_81 = arith.constant 0 : index
    %c0_82 = arith.constant 0 : index
    %85 = vector.load %arg9[%c0_79, %c0_80, %c0_81, %c0_82] : memref<1x8x8x128xf32, #tpu.memory_space<vmem>>, vector<1x8x8x128xf32>
    tpu.vector_store %arg9[%c0_79, %c0_80, %c0_81, %c0_82], %84 {strides = array<i32>} : memref<1x8x8x128xf32, #tpu.memory_space<vmem>>, vector<1x8x8x128xf32>,
    return
  }
  func.func @transform_0(%arg0: i32) -> (i32, i32, i32, i32) {
    %c0_i32 = arith.constant 0 : i32
    %c0_i32_0 = arith.constant 0 : i32
    %c0_i32_1 = arith.constant 0 : i32
    %c0_i32_2 = arith.constant 0 : i32
    return %arg0, %c0_i32, %c0_i32_0, %c0_i32_1 : i32, i32, i32, i32
  }
  func.func @transform_1(%arg0: i32) -> (i32, i32, i32) {
    %c0_i32 = arith.constant 0 : i32
    %c0_i32_0 = arith.constant 0 : i32
    %c0_i32_1 = arith.constant 0 : i32
    %c0_i32_2 = arith.constant 0 : i32
    return %c0_i32, %c0_i32_0, %c0_i32_1 : i32, i32, i32
  }
  func.func @transform_2(%arg0: i32) -> (i32, i32) {
    %c0_i32 = arith.constant 0 : i32
    %c0_i32_0 = arith.constant 0 : i32
    %c0_i32_1 = arith.constant 0 : i32
    return %c0_i32, %c0_i32_0 : i32, i32
  }
  func.func @transform_3(%arg0: i32) -> (i32, i32) {
    %c0_i32 = arith.constant 0 : i32
    %c0_i32_0 = arith.constant 0 : i32
    %c0_i32_1 = arith.constant 0 : i32
    return %c0_i32, %c0_i32_0 : i32, i32
  }
  func.func @transform_4(%arg0: i32) -> (i32, i32, i32, i32) {
    %c0_i32 = arith.constant 0 : i32
    %c0_i32_0 = arith.constant 0 : i32
    %c0_i32_1 = arith.constant 0 : i32
    %c0_i32_2 = arith.constant 0 : i32
    return %arg0, %c0_i32, %c0_i32_0, %c0_i32_1 : i32, i32, i32, i32
  }
  func.func @transform_5(%arg0: i32) -> (i32, i32) {
    %c0_i32 = arith.constant 0 : i32
    %c0_i32_0 = arith.constant 0 : i32
    %c0_i32_1 = arith.constant 0 : i32
    return %c0_i32, %c0_i32_0 : i32, i32
  }
  func.func @transform_6(%arg0: i32) -> (i32, i32) {
    %c0_i32 = arith.constant 0 : i32
    %c0_i32_0 = arith.constant 0 : i32
    %c0_i32_1 = arith.constant 0 : i32
    return %c0_i32, %c0_i32_0 : i32, i32
  }
  func.func @transform_7(%arg0: i32) -> (i32, i32) {
    %c0_i32 = arith.constant 0 : i32
    %c0_i32_0 = arith.constant 0 : i32
    %c0_i32_1 = arith.constant 0 : i32
    return %c0_i32, %c0_i32_0 : i32, i32
  }
  func.func @transform_8(%arg0: i32) -> (i32, i32, i32, i32) {
    %c0_i32 = arith.constant 0 : i32
    %c0_i32_0 = arith.constant 0 : i32
    %c0_i32_1 = arith.constant 0 : i32
    %c0_i32_2 = arith.constant 0 : i32
    return %arg0, %c0_i32, %c0_i32_0, %c0_i32_1 : i32, i32, i32, i32
  }
}

</mosaic_0001>

<llo_original>
// kernel: basic_block_forward.2
$region0: #{basic_block_forward.2}
  #allocation0 [shape = 'u32[]', space=smem, size = 0x4, offset = 0x4, fixed_abs, tag = 'smem constant byte address 0x4 - core index']
  #allocation1 [shape = 'u32[144,128]{1,0:T(1,128)}', space=vmem, size = 0x12000, scoped, tag = 'internal scratch']
  %s0 = inlined_call_operand.vmem [shape: bf16[2,9,9,128], index: 0, kind: input, shape index: {}]
  %s1 = inlined_call_operand.vmem [shape: bf16[2,9,9,128], index: 1, kind: input, shape index: {}]
  %s2 = inlined_call_operand.vmem [shape: bf16[2,9,9,128], index: 2, kind: input, shape index: {}]
  %s3 = inlined_call_operand.vmem [shape: bf16[2,9,9,128], index: 3, kind: input, shape index: {}]
  %s4 = inlined_call_operand.vmem [shape: bf16[9,128,128], index: 4, kind: input, shape index: {}]
  %s5 = inlined_call_operand.vmem [shape: f32[1,128], index: 5, kind: input, shape index: {}]
  %s6 = inlined_call_operand.vmem [shape: f32[1,128], index: 6, kind: input, shape index: {}]
  %s7 = inlined_call_operand.vmem [shape: bf16[2,8,8,128], index: 7, kind: output, shape index: {}]
  %s8 = sld [smem:[#allocation0]]
  $region61: #{basic_block_forward.2} parent=0
    _
  %s10 = ssub.s32 1, %s8
  %s11 = scalar_select 0, %s10, %s8
  loop: start=0, step=1, limit=4
  $region2: #{basic_block_forward.2} parent=0 // loop_pre_header
    _
  $region3: #{basic_block_forward.2} parent=0 // loop_header
    %s13 = sphi 0, %s17
    %p14 = scmp.ge.s32.totalorder %s13, 4
    %s23 = sphi 0, %s25
    %s26 = sphi 0, %s23
    %s27 = sphi 0, %s26
    %s43 = sphi 0, %s27
    %s49 = sphi 0, %s51
    %s52 = sphi 0, %s49
    %s53 = sphi 0, %s52
    %s69 = sphi 0, %s53
    %s75 = sphi 0, %s77
    %s78 = sphi 0, %s75
    %s79 = sphi 0, %s78
    %s95 = sphi 0, %s79
    %s101 = sphi 0, %s103
    %s104 = sphi 0, %s101
    %s105 = sphi 0, %s104
    %s121 = sphi 0, %s105
    %s125 = sphi 0, %s125
    %s127 = sphi 0, %s125
    %s128 = sphi 0, %s127
    %s142 = sphi 0, %s128
    %s146 = sphi 0, %s146
    %s148 = sphi 0, %s146
    %s149 = sphi 0, %s148
    %s163 = sphi 0, %s149
    %s167 = sphi 0, %s167
    %s169 = sphi 0, %s167
    %s170 = sphi 0, %s169
    %s184 = sphi 0, %s170
    %s190 = sphi 0, %s192
    %s193 = sphi 0, %s190
    %s194 = sphi 0, %s193
    %s210 = sphi 0, %s194
  $region4: #{basic_block_forward.2} parent=0 // loop_header_branch
    %16 = sbr.rel (%p14) target = $region8
  $region5: #{basic_block_forward.2} parent=0 // loop_body
    %s18 = ssub.s32 %s13, 1
    %s19 = ssub.s32 %s13, 2
    %s20 = sadd.s32 %s13, 1
    %s21 = ssub.s32 %s13, %s20
    %p22 = scmp.eq.s32.totalorder %s21, 0
    %s24 = sadd.s32 %s23, 1
    %s25 = scalar_select %p22, %s23, %s24
    %p28 = pneg %p22
    %p29 = scmp.eq.s32.totalorder %s13, 1
    %p30 = por %p28, %p29
    %p31 = scmp.ne.s32.totalorder %s23, %s26
    %p32 = scmp.eq.s32.totalorder %s13, 0
    %p33 = por %p31, %p32
    %p34 = scmp.ne.s32.totalorder %s23, %s26
    %p35 = scmp.eq.s32.totalorder %s18, 1
    %p36 = por %p34, %p35
    %p37 = scmp.ne.s32.totalorder %s26, %s27
    %p38 = scmp.eq.s32.totalorder %s18, 0
    %p39 = por %p37, %p38
    %p40 = scmp.ne.s32.totalorder %s26, %s27
    %p41 = scmp.eq.s32.totalorder %s19, 1
    %p42 = por %p40, %p41
    %p44 = scmp.ne.s32.totalorder %s27, %s43
    %p45 = scmp.eq.s32.totalorder %s19, 0
    %p46 = por %p44, %p45
    %s47 = ssub.s32 %s13, %s20
    %p48 = scmp.eq.s32.totalorder %s47, 0
    %s50 = sadd.s32 %s49, 1
    %s51 = scalar_select %p48, %s49, %s50
    %p54 = pneg %p48
    %p55 = scmp.eq.s32.totalorder %s13, 1
    %p56 = por %p54, %p55
    %p57 = scmp.ne.s32.totalorder %s49, %s52
    %p58 = scmp.eq.s32.totalorder %s13, 0
    %p59 = por %p57, %p58
    %p60 = scmp.ne.s32.totalorder %s49, %s52
    %p61 = scmp.eq.s32.totalorder %s18, 1
    %p62 = por %p60, %p61
    %p63 = scmp.ne.s32.totalorder %s52, %s53
    %p64 = scmp.eq.s32.totalorder %s18, 0
    %p65 = por %p63, %p64
    %p66 = scmp.ne.s32.totalorder %s52, %s53
    %p67 = scmp.eq.s32.totalorder %s19, 1
    %p68 = por %p66, %p67
    %p70 = scmp.ne.s32.totalorder %s53, %s69
    %p71 = scmp.eq.s32.totalorder %s19, 0
    %p72 = por %p70, %p71
    %s73 = ssub.s32 %s13, %s20
    %p74 = scmp.eq.s32.totalorder %s73, 0
    %s76 = sadd.s32 %s75, 1
    %s77 = scalar_select %p74, %s75, %s76
    %p80 = pneg %p74
    %p81 = scmp.eq.s32.totalorder %s13, 1
    %p82 = por %p80, %p81
    %p83 = scmp.ne.s32.totalorder %s75, %s78
    %p84 = scmp.eq.s32.totalorder %s13, 0
    %p85 = por %p83, %p84
    %p86 = scmp.ne.s32.totalorder %s75, %s78
    %p87 = scmp.eq.s32.totalorder %s18, 1
    %p88 = por %p86, %p87
    %p89 = scmp.ne.s32.totalorder %s78, %s79
    %p90 = scmp.eq.s32.totalorder %s18, 0
    %p91 = por %p89, %p90
    %p92 = scmp.ne.s32.totalorder %s78, %s79
    %p93 = scmp.eq.s32.totalorder %s19, 1
    %p94 = por %p92, %p93
    %p96 = scmp.ne.s32.totalorder %s79, %s95
    %p97 = scmp.eq.s32.totalorder %s19, 0
    %p98 = por %p96, %p97
    %s99 = ssub.s32 %s13, %s20
    %p100 = scmp.eq.s32.totalorder %s99, 0
    %s102 = sadd.s32 %s101, 1
    %s103 = scalar_select %p100, %s101, %s102
    %p106 = pneg %p100
    %p107 = scmp.eq.s32.totalorder %s13, 1
    %p108 = por %p106, %p107
    %p109 = scmp.ne.s32.totalorder %s101, %s104
    %p110 = scmp.eq.s32.totalorder %s13, 0
    %p111 = por %p109, %p110
    %p112 = scmp.ne.s32.totalorder %s101, %s104
    %p113 = scmp.eq.s32.totalorder %s18, 1
    %p114 = por %p112, %p113
    %p115 = scmp.ne.s32.totalorder %s104, %s105
    %p116 = scmp.eq.s32.totalorder %s18, 0
    %p117 = por %p115, %p116
    %p118 = scmp.ne.s32.totalorder %s104, %s105
    %p119 = scmp.eq.s32.totalorder %s19, 1
    %p120 = por %p118, %p119
    %p122 = scmp.ne.s32.totalorder %s105, %s121
    %p123 = scmp.eq.s32.totalorder %s19, 0
    %p124 = por %p122, %p123
    %s126 = sadd.s32 %s125, 1
    %p129 = scmp.eq.s32.totalorder %s13, 1
    %p130 = scmp.ne.s32.totalorder %s125, %s127
    %p131 = scmp.eq.s32.totalorder %s13, 0
    %p132 = por %p130, %p131
    %p133 = scmp.ne.s32.totalorder %s125, %s127
    %p134 = scmp.eq.s32.totalorder %s18, 1
    %p135 = por %p133, %p134
    %p136 = scmp.ne.s32.totalorder %s127, %s128
    %p137 = scmp.eq.s32.totalorder %s18, 0
    %p138 = por %p136, %p137
    %p139 = scmp.ne.s32.totalorder %s127, %s128
    %p140 = scmp.eq.s32.totalorder %s19, 1
    %p141 = por %p139, %p140
    %p143 = scmp.ne.s32.totalorder %s128, %s142
    %p144 = scmp.eq.s32.totalorder %s19, 0
    %p145 = por %p143, %p144
    %s147 = sadd.s32 %s146, 1
    %p150 = scmp.eq.s32.totalorder %s13, 1
    %p151 = scmp.ne.s32.totalorder %s146, %s148
    %p152 = scmp.eq.s32.totalorder %s13, 0
    %p153 = por %p151, %p152
    %p154 = scmp.ne.s32.totalorder %s146, %s148
    %p155 = scmp.eq.s32.totalorder %s18, 1
    %p156 = por %p154, %p155
    %p157 = scmp.ne.s32.totalorder %s148, %s149
    %p158 = scmp.eq.s32.totalorder %s18, 0
    %p159 = por %p157, %p158
    %p160 = scmp.ne.s32.totalorder %s148, %s149
    %p161 = scmp.eq.s32.totalorder %s19, 1
    %p162 = por %p160, %p161
    %p164 = scmp.ne.s32.totalorder %s149, %s163
    %p165 = scmp.eq.s32.totalorder %s19, 0
    %p166 = por %p164, %p165
    %s168 = sadd.s32 %s167, 1
    %p171 = scmp.eq.s32.totalorder %s13, 1
    %p172 = scmp.ne.s32.totalorder %s167, %s169
    %p173 = scmp.eq.s32.totalorder %s13, 0
    %p174 = por %p172, %p173
    %p175 = scmp.ne.s32.totalorder %s167, %s169
    %p176 = scmp.eq.s32.totalorder %s18, 1
    %p177 = por %p175, %p176
    %p178 = scmp.ne.s32.totalorder %s169, %s170
    %p179 = scmp.eq.s32.totalorder %s18, 0
    %p180 = por %p178, %p179
    %p181 = scmp.ne.s32.totalorder %s169, %s170
    %p182 = scmp.eq.s32.totalorder %s19, 1
    %p183 = por %p181, %p182
    %p185 = scmp.ne.s32.totalorder %s170, %s184
    %p186 = scmp.eq.s32.totalorder %s19, 0
    %p187 = por %p185, %p186
    %s188 = ssub.s32 %s13, %s20
    %p189 = scmp.eq.s32.totalorder %s188, 0
    %s191 = sadd.s32 %s190, 1
    %s192 = scalar_select %p189, %s190, %s191
    %p195 = pneg %p189
    %p196 = scmp.eq.s32.totalorder %s13, 1
    %p197 = por %p195, %p196
    %p198 = scmp.ne.s32.totalorder %s190, %s193
    %p199 = scmp.eq.s32.totalorder %s13, 0
    %p200 = por %p198, %p199
    %p201 = scmp.ne.s32.totalorder %s190, %s193
    %p202 = scmp.eq.s32.totalorder %s18, 1
    %p203 = por %p201, %p202
    %p204 = scmp.ne.s32.totalorder %s193, %s194
    %p205 = scmp.eq.s32.totalorder %s18, 0
    %p206 = por %p204, %p205
    %p207 = scmp.ne.s32.totalorder %s193, %s194
    %p208 = scmp.eq.s32.totalorder %s19, 1
    %p209 = por %p207, %p208
    %p211 = scmp.ne.s32.totalorder %s194, %s210
    %p212 = scmp.eq.s32.totalorder %s19, 0
    %p213 = por %p211, %p212
    %p214 = scmp.le.s32.totalorder 1, %s13
    %p215 = scmp.lt.s32.totalorder %s13, 3
    %p216 = pnand %p214, %p215
    %p217 = pneg %p216
    // Predicated region
    $region9: #{basic_block_forward.2} parent=5 // pred_check
      _
    $region10: #{basic_block_forward.2} parent=5 // pred_check_branch
      %219 = sbr.rel (%p216) target = $region12
    $region11: #{basic_block_forward.2} parent=5 // pred_region
      %s220 = ssub.s32 %s13, 1
      // Predicated region
      $region13: #{basic_block_forward.2} parent=11 // pred_check
        %p221 = pneg %p138
      $region14: #{basic_block_forward.2} parent=11 // pred_check_branch
        %223 = sbr.rel (%p221) target = $region16
      $region15: #{basic_block_forward.2} parent=11 // pred_region
        _
      $region16: #{basic_block_forward.2} parent=11 // pred_fallthru
        _
      // Predicated region
      $region17: #{basic_block_forward.2} parent=11 // pred_check
        %p224 = pneg %p159
      $region18: #{basic_block_forward.2} parent=11 // pred_check_branch
        %226 = sbr.rel (%p224) target = $region20
      $region19: #{basic_block_forward.2} parent=11 // pred_region
        _
      $region20: #{basic_block_forward.2} parent=11 // pred_fallthru
        _
      // Predicated region
      $region21: #{basic_block_forward.2} parent=11 // pred_check
        %p227 = pneg %p180
      $region22: #{basic_block_forward.2} parent=11 // pred_check_branch
        %229 = sbr.rel (%p227) target = $region24
      $region23: #{basic_block_forward.2} parent=11 // pred_region
        _
      $region24: #{basic_block_forward.2} parent=11 // pred_fallthru
        _
    $region12: #{basic_block_forward.2} parent=5 // pred_fallthru
      _
    %p230 = scmp.lt.s32.totalorder %s13, 2
    // Predicated region
    $region25: #{basic_block_forward.2} parent=5 // pred_check
      %p231 = pneg %p230
    $region26: #{basic_block_forward.2} parent=5 // pred_check_branch
      %233 = sbr.rel (%p231) target = $region28
    $region27: #{basic_block_forward.2} parent=5 // pred_region
      // Predicated region
      $region29: #{basic_block_forward.2} parent=27 // pred_check
        %p234 = pneg %p33
      $region30: #{basic_block_forward.2} parent=27 // pred_check_branch
        %236 = sbr.rel (%p234) target = $region32
      $region31: #{basic_block_forward.2} parent=27 // pred_region
        %p237 = scmp.lt.s32.totalorder %s13, 1
        %s238 = scalar_select %p237, %s13, 1
        %s239 = smul.addr %s238, 18
        %s240 = smul.addr %s239, 4
        %s241 = scalar_lea.vmem %s0, %s240
      $region32: #{basic_block_forward.2} parent=27 // pred_fallthru
        _
      // Predicated region
      $region33: #{basic_block_forward.2} parent=27 // pred_check
        %p242 = pneg %p59
      $region34: #{basic_block_forward.2} parent=27 // pred_check_branch
        %244 = sbr.rel (%p242) target = $region36
      $region35: #{basic_block_forward.2} parent=27 // pred_region
        %p245 = scmp.lt.s32.totalorder %s13, 1
        %s246 = scalar_select %p245, %s13, 1
        %s247 = smul.addr %s246, 18
        %s248 = smul.addr %s247, 4
        %s249 = scalar_lea.vmem %s1, %s248
      $region36: #{basic_block_forward.2} parent=27 // pred_fallthru
        _
      // Predicated region
      $region37: #{basic_block_forward.2} parent=27 // pred_check
        %p250 = pneg %p85
      $region38: #{basic_block_forward.2} parent=27 // pred_check_branch
        %252 = sbr.rel (%p250) target = $region40
      $region39: #{basic_block_forward.2} parent=27 // pred_region
        %p253 = scmp.lt.s32.totalorder %s13, 1
        %s254 = scalar_select %p253, %s13, 1
        %s255 = smul.addr %s254, 18
        %s256 = smul.addr %s255, 4
        %s257 = scalar_lea.vmem %s2, %s256
      $region40: #{basic_block_forward.2} parent=27 // pred_fallthru
        _
      // Predicated region
      $region41: #{basic_block_forward.2} parent=27 // pred_check
        %p258 = pneg %p111
      $region42: #{basic_block_forward.2} parent=27 // pred_check_branch
        %260 = sbr.rel (%p258) target = $region44
      $region43: #{basic_block_forward.2} parent=27 // pred_region
        %p261 = scmp.lt.s32.totalorder %s13, 1
        %s262 = scalar_select %p261, %s13, 1
        %s263 = smul.addr %s262, 18
        %s264 = smul.addr %s263, 4
        %s265 = scalar_lea.vmem %s3, %s264
      $region44: #{basic_block_forward.2} parent=27 // pred_fallthru
        _
    $region28: #{basic_block_forward.2} parent=5 // pred_fallthru
      _
    %p266 = scmp.le.s32.totalorder 1, %s13
    %p267 = scmp.lt.s32.totalorder %s13, 3
    %p268 = pnand %p266, %p267
    %p269 = pneg %p268
    // Predicated region
    $region45: #{basic_block_forward.2} parent=5 // pred_check
      _
    $region46: #{basic_block_forward.2} parent=5 // pred_check_branch
      %271 = sbr.rel (%p268) target = $region48
    $region47: #{basic_block_forward.2} parent=5 // pred_region
      %s272 = ssub.s32 %s13, 1
      %p273 = scmp.lt.s32.totalorder %s18, 1
      %s274 = scalar_select %p273, %s18, 1
      %s275 = smul.addr %s274, 18
      %s276 = smul.addr %s275, 4
      %s277 = scalar_lea.vmem %s0, %s276
      %p278 = pneg %p39
      %p279 = pneg %p36
      %p280 = scmp.lt.s32.totalorder %s18, 1
      %s281 = scalar_select %p280, %s18, 1
      %s282 = smul.addr %s281, 18
      %s283 = smul.addr %s282, 4
      %s284 = scalar_lea.vmem %s1, %s283
      %p285 = pneg %p65
      %p286 = pneg %p62
      %p287 = scmp.lt.s32.totalorder %s18, 1
      %s288 = scalar_select %p287, %s18, 1
      %s289 = smul.addr %s288, 18
      %s290 = smul.addr %s289, 4
      %s291 = scalar_lea.vmem %s2, %s290
      %p292 = pneg %p91
      %p293 = pneg %p88
      %p294 = scmp.lt.s32.totalorder %s18, 1
      %s295 = scalar_select %p294, %s18, 1
      %s296 = smul.addr %s295, 18
      %s297 = smul.addr %s296, 4
      %s298 = scalar_lea.vmem %s3, %s297
      %p299 = pneg %p117
      %p300 = pneg %p114
      %p301 = pneg %p138
      %p302 = pneg %p135
      %p303 = pneg %p159
      %p304 = pneg %p156
      %p305 = pneg %p180
      %p306 = pneg %p177
      %p307 = pneg %p206
      %p308 = pneg %p203
      %p309 = scmp.lt.s32.totalorder %s18, 1
      %s310 = scalar_select %p309, %s18, 1
      %s311 = smul.addr %s310, 8
      %s312 = smul.addr %s311, 4
      %s313 = scalar_lea.vmem %s7, %s312
      %p314 = scmp.lt.s32.totalorder %s18, 1
      %s315 = scalar_select %p314, %s18, 1
      %s316 = smul.addr %s315, 18
      %s317 = smul.addr %s316, 4
      %s318 = scalar_lea.vmem %s0, %s317
      %p319 = scmp.lt.s32.totalorder %s18, 1
      %s320 = scalar_select %p319, %s18, 1
      %s321 = smul.addr %s320, 18
      %s322 = smul.addr %s321, 4
      %s323 = scalar_lea.vmem %s1, %s322
      %p324 = scmp.lt.s32.totalorder %s18, 1
      %s325 = scalar_select %p324, %s18, 1
      %s326 = smul.addr %s325, 18
      %s327 = smul.addr %s326, 4
      %s328 = scalar_lea.vmem %s2, %s327
      %p329 = scmp.lt.s32.totalorder %s18, 1
      %s330 = scalar_select %p329, %s18, 1
      %s331 = smul.addr %s330, 18
      %s332 = smul.addr %s331, 4
      %s333 = scalar_lea.vmem %s3, %s332
      %p334 = scmp.lt.s32.totalorder %s18, 1
      %s335 = scalar_select %p334, %s18, 1
      %s336 = smul.addr %s335, 8
      %s337 = smul.addr %s336, 4
      %s338 = scalar_lea.vmem %s7, %s337
      %v340 = vld [vmem:[%s318] sm:$0xf]
      %v341 = vld [vmem:[%s318 + $0x8] sm:$0xf]
      %v342 = vld [vmem:[%s318 + $0x10] sm:$0xf]
      %v343 = vld [vmem:[%s318 + $0x18] sm:$0xf]
      %v344 = vld [vmem:[%s318 + $0x20] sm:$0xf]
      %v345 = vld [vmem:[%s318 + $0x28] sm:$0xf]
      %v346 = vld [vmem:[%s318 + $0x30] sm:$0xf]
      %v347 = vld [vmem:[%s318 + $0x38] sm:$0xf]
      %v348 = vld [vmem:[%s4] sm:$0xf]
      %v349 = vld [vmem:[%s4 + $0x4] sm:$0xf]
      %v350 = vld [vmem:[%s4 + $0x8] sm:$0xf]
      %v351 = vld [vmem:[%s4 + $0xc] sm:$0xf]
      %v352 = vld [vmem:[%s4 + $0x10] sm:$0xf]
      %v353 = vld [vmem:[%s4 + $0x14] sm:$0xf]
      %v354 = vld [vmem:[%s4 + $0x18] sm:$0xf]
      %v355 = vld [vmem:[%s4 + $0x1c] sm:$0xf]
      %v356 = vld [vmem:[%s4 + $0x20] sm:$0xf]
      %v357 = vld [vmem:[%s4 + $0x24] sm:$0xf]
      %v358 = vld [vmem:[%s4 + $0x28] sm:$0xf]
      %v359 = vld [vmem:[%s4 + $0x2c] sm:$0xf]
      %v360 = vld [vmem:[%s4 + $0x30] sm:$0xf]
      %v361 = vld [vmem:[%s4 + $0x34] sm:$0xf]
      %v362 = vld [vmem:[%s4 + $0x38] sm:$0xf]
      %v363 = vld [vmem:[%s4 + $0x3c] sm:$0xf]
      %v364 = vld [vmem:[%s323] sm:$0xf]
      %v365 = vld [vmem:[%s323 + $0x8] sm:$0xf]
      %v366 = vld [vmem:[%s323 + $0x10] sm:$0xf]
      %v367 = vld [vmem:[%s323 + $0x18] sm:$0xf]
      %v368 = vld [vmem:[%s323 + $0x20] sm:$0xf]
      %v369 = vld [vmem:[%s323 + $0x28] sm:$0xf]
      %v370 = vld [vmem:[%s323 + $0x30] sm:$0xf]
      %v371 = vld [vmem:[%s323 + $0x38] sm:$0xf]
      %s372 = scalar_lea.vmem %s4, 64
      %v373 = vld [vmem:[%s372] sm:$0xf]
      %v374 = vld [vmem:[%s372 + $0x4] sm:$0xf]
      %v375 = vld [vmem:[%s372 + $0x8] sm:$0xf]
      %v376 = vld [vmem:[%s372 + $0xc] sm:$0xf]
      %v377 = vld [vmem:[%s372 + $0x10] sm:$0xf]
      %v378 = vld [vmem:[%s372 + $0x14] sm:$0xf]
      %v379 = vld [vmem:[%s372 + $0x18] sm:$0xf]
      %v380 = vld [vmem:[%s372 + $0x1c] sm:$0xf]
      %v381 = vld [vmem:[%s372 + $0x20] sm:$0xf]
      %v382 = vld [vmem:[%s372 + $0x24] sm:$0xf]
      %v383 = vld [vmem:[%s372 + $0x28] sm:$0xf]
      %v384 = vld [vmem:[%s372 + $0x2c] sm:$0xf]
      %v385 = vld [vmem:[%s372 + $0x30] sm:$0xf]
      %v386 = vld [vmem:[%s372 + $0x34] sm:$0xf]
      %v387 = vld [vmem:[%s372 + $0x38] sm:$0xf]
      %v388 = vld [vmem:[%s372 + $0x3c] sm:$0xf]
      %v397 = vunpack.c.l.b16 %v364
      %v398 = vunpack.c.l.b16 %v365
      %v399 = vunpack.c.l.b16 %v366
      %v400 = vunpack.c.l.b16 %v367
      %v401 = vunpack.c.l.b16 %v368
      %v402 = vunpack.c.l.b16 %v369
      %v403 = vunpack.c.l.b16 %v370
      %v404 = vunpack.c.l.b16 %v371
      %v405 = vpack.c.b16 %v398, %v397
      %v406 = vpack.c.b16 %v400, %v399
      %v407 = vpack.c.b16 %v402, %v401
      %v408 = vpack.c.b16 %v404, %v403
      %v429 = vunpack.c.l.b16 %v373
      %v430 = vunpack.c.l.b16 %v374
      %v431 = vunpack.c.l.b16 %v375
      %v432 = vunpack.c.l.b16 %v376
      %v433 = vunpack.c.l.b16 %v377
      %v434 = vunpack.c.l.b16 %v378
      %v435 = vunpack.c.l.b16 %v379
      %v436 = vunpack.c.l.b16 %v380
      %v437 = vunpack.c.l.b16 %v381
      %v438 = vunpack.c.l.b16 %v382
      %v439 = vunpack.c.l.b16 %v383
      %v440 = vunpack.c.l.b16 %v384
      %v441 = vunpack.c.l.b16 %v385
      %v442 = vunpack.c.l.b16 %v386
      %v443 = vunpack.c.l.b16 %v387
      %v444 = vunpack.c.l.b16 %v388
      %v445 = vpack.c.b16 %v430, %v429
      %v446 = vpack.c.b16 %v432, %v431
      %v447 = vpack.c.b16 %v434, %v433
      %v448 = vpack.c.b16 %v436, %v435
      %v449 = vpack.c.b16 %v438, %v437
      %v450 = vpack.c.b16 %v440, %v439
      %v451 = vpack.c.b16 %v442, %v441
      %v452 = vpack.c.b16 %v444, %v443
      %461 = vmatprep.subr.bf16.mxu0 0
      %462 = vmatpush1.bf16.msra.mxu0 %v452
      %463 = vmatprep.subr.bf16.mxu0 0
      %464 = vmatpush1.bf16.msra.mxu0 %v451
      %465 = vmatprep.subr.bf16.mxu0 0
      %466 = vmatpush1.bf16.msra.mxu0 %v450
      %467 = vmatprep.subr.bf16.mxu0 0
      %468 = vmatpush1.bf16.msra.mxu0 %v449
      %469 = vmatprep.subr.bf16.mxu0 0
      %470 = vmatpush1.bf16.msra.mxu0 %v448
      %471 = vmatprep.subr.bf16.mxu0 0
      %472 = vmatpush1.bf16.msra.mxu0 %v447
      %473 = vmatprep.subr.bf16.mxu0 0
      %474 = vmatpush1.bf16.msra.mxu0 %v446
      %475 = vmatprep.subr.bf16.mxu0 0
      %476 = vmatpush1.bf16.msra.mxu0 %v445
      %477 = vmatprep.subr.bf16.mxu0 0
      %478 = vmatpush2.bf16.msra.mxu0 0
      %479 = vmatprep.subr.bf16.mxu0 0
      %480 = vmatpush2.bf16.msra.mxu0 0
      %481 = vmatprep.subr.bf16.mxu0 0
      %482 = vmatpush2.bf16.msra.mxu0 0
      %483 = vmatprep.subr.bf16.mxu0 0
      %484 = vmatpush2.bf16.msra.mxu0 0
      %485 = vmatprep.subr.bf16.mxu0 0
      %486 = vmatpush2.bf16.msra.mxu0 0
      %487 = vmatprep.subr.bf16.mxu0 0
      %488 = vmatpush2.bf16.msra.mxu0 0
      %489 = vmatprep.subr.bf16.mxu0 0
      %490 = vmatpush2.bf16.msra.mxu0 0
      %491 = vmatprep.subr.bf16.mxu0 0
      %492 = vmatpush2.bf16.msra.mxu0 0
      %493 = vmatprep.mubr.bf16.mxu0 0
      %494 = vmatmul.mubr.bf16.gmra.mxu0 %v405
      %v495 = vpop.f32.mrf.mxu0
      %v496 = vadd.f32 0.0, %v495
      %v497 = vpop.f32.mrf.mxu0
      %v498 = vpop.f32.mrf.mxu0
      %v499 = vadd.f32 0.0, %v498
      %v500 = vpop.f32.mrf.mxu0
      %501 = vmatprep.mubr.bf16.mxu0 0
      %502 = vmatmul.mubr.bf16.gmra.mxu0 %v406
      %v503 = vpop.f32.mrf.mxu0
      %v504 = vadd.f32 0.0, %v503
      %v505 = vpop.f32.mrf.mxu0
      %v506 = vpop.f32.mrf.mxu0
      %v507 = vadd.f32 0.0, %v506
      %v508 = vpop.f32.mrf.mxu0
      %509 = vmatprep.mubr.bf16.mxu0 0
      %510 = vmatmul.mubr.bf16.gmra.mxu0 %v407
      %v511 = vpop.f32.mrf.mxu0
      %v512 = vadd.f32 0.0, %v511
      %v513 = vpop.f32.mrf.mxu0
      %v514 = vpop.f32.mrf.mxu0
      %v515 = vadd.f32 0.0, %v514
      %v516 = vpop.f32.mrf.mxu0
      %517 = vmatprep.mubr.bf16.mxu0 0
      %518 = vmatmul.mubr.bf16.gmra.mxu0 %v408
      %v519 = vpop.f32.mrf.mxu0
      %v520 = vadd.f32 0.0, %v519
      %v521 = vpop.f32.mrf.mxu0
      %v522 = vpop.f32.mrf.mxu0
      %v523 = vadd.f32 0.0, %v522
      %v524 = vpop.f32.mrf.mxu0
      %525 = vdwg.mxu0
      %v534 = vunpack.c.l.b16 %v340
      %v535 = vunpack.c.l.b16 %v341
      %v536 = vunpack.c.l.b16 %v342
      %v537 = vunpack.c.l.b16 %v343
      %v538 = vunpack.c.l.b16 %v344
      %v539 = vunpack.c.l.b16 %v345
      %v540 = vunpack.c.l.b16 %v346
      %v541 = vunpack.c.l.b16 %v347
      %v542 = vpack.c.b16 %v535, %v534
      %v543 = vpack.c.b16 %v537, %v536
      %v544 = vpack.c.b16 %v539, %v538
      %v545 = vpack.c.b16 %v541, %v540
      %v566 = vunpack.c.l.b16 %v348
      %v567 = vunpack.c.l.b16 %v349
      %v568 = vunpack.c.l.b16 %v350
      %v569 = vunpack.c.l.b16 %v351
      %v570 = vunpack.c.l.b16 %v352
      %v571 = vunpack.c.l.b16 %v353
      %v572 = vunpack.c.l.b16 %v354
      %v573 = vunpack.c.l.b16 %v355
      %v574 = vunpack.c.l.b16 %v356
      %v575 = vunpack.c.l.b16 %v357
      %v576 = vunpack.c.l.b16 %v358
      %v577 = vunpack.c.l.b16 %v359
      %v578 = vunpack.c.l.b16 %v360
      %v579 = vunpack.c.l.b16 %v361
      %v580 = vunpack.c.l.b16 %v362
      %v581 = vunpack.c.l.b16 %v363
      %v582 = vpack.c.b16 %v567, %v566
      %v583 = vpack.c.b16 %v569, %v568
      %v584 = vpack.c.b16 %v571, %v570
      %v585 = vpack.c.b16 %v573, %v572
      %v586 = vpack.c.b16 %v575, %v574
      %v587 = vpack.c.b16 %v577, %v576
      %v588 = vpack.c.b16 %v579, %v578
      %v589 = vpack.c.b16 %v581, %v580
      %598 = vmatprep.subr.bf16.mxu0 0
      %599 = vmatpush1.bf16.msra.mxu0 %v589
      %600 = vmatprep.subr.bf16.mxu0 0
      %601 = vmatpush1.bf16.msra.mxu0 %v588
      %602 = vmatprep.subr.bf16.mxu0 0
      %603 = vmatpush1.bf16.msra.mxu0 %v587
      %604 = vmatprep.subr.bf16.mxu0 0
      %605 = vmatpush1.bf16.msra.mxu0 %v586
      %606 = vmatprep.subr.bf16.mxu0 0
      %607 = vmatpush1.bf16.msra.mxu0 %v585
      %608 = vmatprep.subr.bf16.mxu0 0
      %609 = vmatpush1.bf16.msra.mxu0 %v584
      %610 = vmatprep.subr.bf16.mxu0 0
      %611 = vmatpush1.bf16.msra.mxu0 %v583
      %612 = vmatprep.subr.bf16.mxu0 0
      %613 = vmatpush1.bf16.msra.mxu0 %v582
      %614 = vmatprep.subr.bf16.mxu0 0
      %615 = vmatpush2.bf16.msra.mxu0 0
      %616 = vmatprep.subr.bf16.mxu0 0
      %617 = vmatpush2.bf16.msra.mxu0 0
      %618 = vmatprep.subr.bf16.mxu0 0
      %619 = vmatpush2.bf16.msra.mxu0 0
      %620 = vmatprep.subr.bf16.mxu0 0
      %621 = vmatpush2.bf16.msra.mxu0 0
      %622 = vmatprep.subr.bf16.mxu0 0
      %623 = vmatpush2.bf16.msra.mxu0 0
      %624 = vmatprep.subr.bf16.mxu0 0
      %625 = vmatpush2.bf16.msra.mxu0 0
      %626 = vmatprep.subr.bf16.mxu0 0
      %627 = vmatpush2.bf16.msra.mxu0 0
      %628 = vmatprep.subr.bf16.mxu0 0
      %629 = vmatpush2.bf16.msra.mxu0 0
      %630 = vmatprep.mubr.bf16.mxu0 0
      %631 = vmatmul.mubr.bf16.gmra.mxu0 %v542
      %v632 = vpop.f32.mrf.mxu0
      %v633 = vadd.f32 %v496, %v632
      %v634 = vpop.f32.mrf.mxu0
      %v635 = vpop.f32.mrf.mxu0
      %v636 = vadd.f32 %v499, %v635
      %v637 = vpop.f32.mrf.mxu0
      %638 = vmatprep.mubr.bf16.mxu0 0
      %639 = vmatmul.mubr.bf16.gmra.mxu0 %v543
      %v640 = vpop.f32.mrf.mxu0
      %v641 = vadd.f32 %v504, %v640
      %v642 = vpop.f32.mrf.mxu0
      %v643 = vpop.f32.mrf.mxu0
      %v644 = vadd.f32 %v507, %v643
      %v645 = vpop.f32.mrf.mxu0
      %646 = vmatprep.mubr.bf16.mxu0 0
      %647 = vmatmul.mubr.bf16.gmra.mxu0 %v544
      %v648 = vpop.f32.mrf.mxu0
      %v649 = vadd.f32 %v512, %v648
      %v650 = vpop.f32.mrf.mxu0
      %v651 = vpop.f32.mrf.mxu0
      %v652 = vadd.f32 %v515, %v651
      %v653 = vpop.f32.mrf.mxu0
      %654 = vmatprep.mubr.bf16.mxu0 0
      %655 = vmatmul.mubr.bf16.gmra.mxu0 %v545
      %v656 = vpop.f32.mrf.mxu0
      %v657 = vadd.f32 %v520, %v656
      %v658 = vpop.f32.mrf.mxu0
      %v659 = vpop.f32.mrf.mxu0
      %v660 = vadd.f32 %v523, %v659
      %v661 = vpop.f32.mrf.mxu0
      %662 = vdwg.mxu0
      %v663 = vld [vmem:[%s318] sm:$0xf]
      %v664 = vld [vmem:[%s318 + $0x4] sm:$0x1]
      %v665 = vld [vmem:[%s318 + $0x8] sm:$0xf]
      %v666 = vld [vmem:[%s318 + $0xc] sm:$0x1]
      %v667 = vld [vmem:[%s318 + $0x10] sm:$0xf]
      %v668 = vld [vmem:[%s318 + $0x14] sm:$0x1]
      %v669 = vld [vmem:[%s318 + $0x18] sm:$0xf]
      %v670 = vld [vmem:[%s318 + $0x1c] sm:$0x1]
      %v671 = vld [vmem:[%s318 + $0x20] sm:$0xf]
      %v672 = vld [vmem:[%s318 + $0x24] sm:$0x1]
      %v673 = vld [vmem:[%s318 + $0x28] sm:$0xf]
      %v674 = vld [vmem:[%s318 + $0x2c] sm:$0x1]
      %v675 = vld [vmem:[%s318 + $0x30] sm:$0xf]
      %v676 = vld [vmem:[%s318 + $0x34] sm:$0x1]
      %v677 = vld [vmem:[%s318 + $0x38] sm:$0xf]
      %v678 = vld [vmem:[%s318 + $0x3c] sm:$0x1]
      %vm679 = vsmask.f32 3328
      %vm680 = vsmask.f32 7440
      %vm681 = vmor %vm679, %vm680
      %v683 = vshrl.u32 %v663, 16
      %v685 = vrot.slane %v683, 4
      %v686 = vshll.u32 %v663, 16
      %v688 = vrot.slane %v686, 5
      %v689 = vor.u32 %v685, %v688
      %v690 = vrot.slane %v689, 4
      %v692 = vshll.u32 %v664, 16
      %v694 = vrot.slane %v692, 5
      %v695 = vsel %vm681, %v690, %v694
      %v697 = vshrl.u32 %v665, 16
      %v699 = vrot.slane %v697, 4
      %v700 = vshll.u32 %v665, 16
      %v702 = vrot.slane %v700, 5
      %v703 = vor.u32 %v699, %v702
      %v704 = vrot.slane %v703, 4
      %v706 = vshll.u32 %v666, 16
      %v708 = vrot.slane %v706, 5
      %v709 = vsel %vm681, %v704, %v708
      %v711 = vshrl.u32 %v667, 16
      %v713 = vrot.slane %v711, 4
      %v714 = vshll.u32 %v667, 16
      %v716 = vrot.slane %v714, 5
      %v717 = vor.u32 %v713, %v716
      %v718 = vrot.slane %v717, 4
      %v720 = vshll.u32 %v668, 16
      %v722 = vrot.slane %v720, 5
      %v723 = vsel %vm681, %v718, %v722
      %v725 = vshrl.u32 %v669, 16
      %v727 = vrot.slane %v725, 4
      %v728 = vshll.u32 %v669, 16
      %v730 = vrot.slane %v728, 5
      %v731 = vor.u32 %v727, %v730
      %v732 = vrot.slane %v731, 4
      %v734 = vshll.u32 %v670, 16
      %v736 = vrot.slane %v734, 5
      %v737 = vsel %vm681, %v732, %v736
      %v739 = vshrl.u32 %v671, 16
      %v741 = vrot.slane %v739, 4
      %v742 = vshll.u32 %v671, 16
      %v744 = vrot.slane %v742, 5
      %v745 = vor.u32 %v741, %v744
      %v746 = vrot.slane %v745, 4
      %v748 = vshll.u32 %v672, 16
      %v750 = vrot.slane %v748, 5
      %v751 = vsel %vm681, %v746, %v750
      %v753 = vshrl.u32 %v673, 16
      %v755 = vrot.slane %v753, 4
      %v756 = vshll.u32 %v673, 16
      %v758 = vrot.slane %v756, 5
      %v759 = vor.u32 %v755, %v758
      %v760 = vrot.slane %v759, 4
      %v762 = vshll.u32 %v674, 16
      %v764 = vrot.slane %v762, 5
      %v765 = vsel %vm681, %v760, %v764
      %v767 = vshrl.u32 %v675, 16
      %v769 = vrot.slane %v767, 4
      %v770 = vshll.u32 %v675, 16
      %v772 = vrot.slane %v770, 5
      %v773 = vor.u32 %v769, %v772
      %v774 = vrot.slane %v773, 4
      %v776 = vshll.u32 %v676, 16
      %v778 = vrot.slane %v776, 5
      %v779 = vsel %vm681, %v774, %v778
      %v781 = vshrl.u32 %v677, 16
      %v783 = vrot.slane %v781, 4
      %v784 = vshll.u32 %v677, 16
      %v786 = vrot.slane %v784, 5
      %v787 = vor.u32 %v783, %v786
      %v788 = vrot.slane %v787, 4
      %v790 = vshll.u32 %v678, 16
      %v792 = vrot.slane %v790, 5
      %v793 = vsel %vm681, %v788, %v792
      %s794 = scalar_lea.vmem %s4, 128
      %v795 = vld [vmem:[%s794] sm:$0xf]
      %v796 = vld [vmem:[%s794 + $0x4] sm:$0xf]
      %v797 = vld [vmem:[%s794 + $0x8] sm:$0xf]
      %v798 = vld [vmem:[%s794 + $0xc] sm:$0xf]
      %v799 = vld [vmem:[%s794 + $0x10] sm:$0xf]
      %v800 = vld [vmem:[%s794 + $0x14] sm:$0xf]
      %v801 = vld [vmem:[%s794 + $0x18] sm:$0xf]
      %v802 = vld [vmem:[%s794 + $0x1c] sm:$0xf]
      %v803 = vld [vmem:[%s794 + $0x20] sm:$0xf]
      %v804 = vld [vmem:[%s794 + $0x24] sm:$0xf]
      %v805 = vld [vmem:[%s794 + $0x28] sm:$0xf]
      %v806 = vld [vmem:[%s794 + $0x2c] sm:$0xf]
      %v807 = vld [vmem:[%s794 + $0x30] sm:$0xf]
      %v808 = vld [vmem:[%s794 + $0x34] sm:$0xf]
      %v809 = vld [vmem:[%s794 + $0x38] sm:$0xf]
      %v810 = vld [vmem:[%s794 + $0x3c] sm:$0xf]
      %v811 = vunpack.c.l.b16 %v695
      %v812 = vunpack.c.l.b16 %v709
      %v813 = vunpack.c.l.b16 %v723
      %v814 = vunpack.c.l.b16 %v737
      %v815 = vunpack.c.l.b16 %v751
      %v816 = vunpack.c.l.b16 %v765
      %v817 = vunpack.c.l.b16 %v779
      %v818 = vunpack.c.l.b16 %v793
      %v819 = vpack.c.b16 %v812, %v811
      %v820 = vpack.c.b16 %v814, %v813
      %v821 = vpack.c.b16 %v816, %v815
      %v822 = vpack.c.b16 %v818, %v817
      %v843 = vunpack.c.l.b16 %v795
      %v844 = vunpack.c.l.b16 %v796
      %v845 = vunpack.c.l.b16 %v797
      %v846 = vunpack.c.l.b16 %v798
      %v847 = vunpack.c.l.b16 %v799
      %v848 = vunpack.c.l.b16 %v800
      %v849 = vunpack.c.l.b16 %v801
      %v850 = vunpack.c.l.b16 %v802
      %v851 = vunpack.c.l.b16 %v803
      %v852 = vunpack.c.l.b16 %v804
      %v853 = vunpack.c.l.b16 %v805
      %v854 = vunpack.c.l.b16 %v806
      %v855 = vunpack.c.l.b16 %v807
      %v856 = vunpack.c.l.b16 %v808
      %v857 = vunpack.c.l.b16 %v809
      %v858 = vunpack.c.l.b16 %v810
      %v859 = vpack.c.b16 %v844, %v843
      %v860 = vpack.c.b16 %v846, %v845
      %v861 = vpack.c.b16 %v848, %v847
      %v862 = vpack.c.b16 %v850, %v849
      %v863 = vpack.c.b16 %v852, %v851
      %v864 = vpack.c.b16 %v854, %v853
      %v865 = vpack.c.b16 %v856, %v855
      %v866 = vpack.c.b16 %v858, %v857
      %875 = vmatprep.subr.bf16.mxu0 0
      %876 = vmatpush1.bf16.msra.mxu0 %v866
      %877 = vmatprep.subr.bf16.mxu0 0
      %878 = vmatpush1.bf16.msra.mxu0 %v865
      %879 = vmatprep.subr.bf16.mxu0 0
      %880 = vmatpush1.bf16.msra.mxu0 %v864
      %881 = vmatprep.subr.bf16.mxu0 0
      %882 = vmatpush1.bf16.msra.mxu0 %v863
      %883 = vmatprep.subr.bf16.mxu0 0
      %884 = vmatpush1.bf16.msra.mxu0 %v862
      %885 = vmatprep.subr.bf16.mxu0 0
      %886 = vmatpush1.bf16.msra.mxu0 %v861
      %887 = vmatprep.subr.bf16.mxu0 0
      %888 = vmatpush1.bf16.msra.mxu0 %v860
      %889 = vmatprep.subr.bf16.mxu0 0
      %890 = vmatpush1.bf16.msra.mxu0 %v859
      %891 = vmatprep.subr.bf16.mxu0 0
      %892 = vmatpush2.bf16.msra.mxu0 0
      %893 = vmatprep.subr.bf16.mxu0 0
      %894 = vmatpush2.bf16.msra.mxu0 0
      %895 = vmatprep.subr.bf16.mxu0 0
      %896 = vmatpush2.bf16.msra.mxu0 0
      %897 = vmatprep.subr.bf16.mxu0 0
      %898 = vmatpush2.bf16.msra.mxu0 0
      %899 = vmatprep.subr.bf16.mxu0 0
      %900 = vmatpush2.bf16.msra.mxu0 0
      %901 = vmatprep.subr.bf16.mxu0 0
      %902 = vmatpush2.bf16.msra.mxu0 0
      %903 = vmatprep.subr.bf16.mxu0 0
      %904 = vmatpush2.bf16.msra.mxu0 0
      %905 = vmatprep.subr.bf16.mxu0 0
      %906 = vmatpush2.bf16.msra.mxu0 0
      %907 = vmatprep.mubr.bf16.mxu0 0
      %908 = vmatmul.mubr.bf16.gmra.mxu0 %v819
      %v909 = vpop.f32.mrf.mxu0
      %v910 = vadd.f32 0.0, %v909
      %v911 = vpop.f32.mrf.mxu0
      %v912 = vpop.f32.mrf.mxu0
      %v913 = vadd.f32 0.0, %v912
      %v914 = vpop.f32.mrf.mxu0
      %915 = vmatprep.mubr.bf16.mxu0 0
      %916 = vmatmul.mubr.bf16.gmra.mxu0 %v820
      %v917 = vpop.f32.mrf.mxu0
      %v918 = vadd.f32 0.0, %v917
      %v919 = vpop.f32.mrf.mxu0
      %v920 = vpop.f32.mrf.mxu0
      %v921 = vadd.f32 0.0, %v920
      %v922 = vpop.f32.mrf.mxu0
      %923 = vmatprep.mubr.bf16.mxu0 0
      %924 = vmatmul.mubr.bf16.gmra.mxu0 %v821
      %v925 = vpop.f32.mrf.mxu0
      %v926 = vadd.f32 0.0, %v925
      %v927 = vpop.f32.mrf.mxu0
      %v928 = vpop.f32.mrf.mxu0
      %v929 = vadd.f32 0.0, %v928
      %v930 = vpop.f32.mrf.mxu0
      %931 = vmatprep.mubr.bf16.mxu0 0
      %932 = vmatmul.mubr.bf16.gmra.mxu0 %v822
      %v933 = vpop.f32.mrf.mxu0
      %v934 = vadd.f32 0.0, %v933
      %v935 = vpop.f32.mrf.mxu0
      %v936 = vpop.f32.mrf.mxu0
      %v937 = vadd.f32 0.0, %v936
      %v938 = vpop.f32.mrf.mxu0
      %939 = vdwg.mxu0
      %v940 = vadd.f32 %v633, %v910
      %v941 = vadd.f32 %v636, %v913
      %v942 = vadd.f32 %v641, %v918
      %v943 = vadd.f32 %v644, %v921
      %v944 = vadd.f32 %v649, %v926
      %v945 = vadd.f32 %v652, %v929
      %v946 = vadd.f32 %v657, %v934
      %v947 = vadd.f32 %v660, %v937
      %v948 = vld [vmem:[%s328] sm:$0xf]
      %v949 = vld [vmem:[%s328 + $0x8] sm:$0xf]
      %v950 = vld [vmem:[%s328 + $0x10] sm:$0xf]
      %v951 = vld [vmem:[%s328 + $0x18] sm:$0xf]
      %v952 = vld [vmem:[%s328 + $0x20] sm:$0xf]
      %v953 = vld [vmem:[%s328 + $0x28] sm:$0xf]
      %v954 = vld [vmem:[%s328 + $0x30] sm:$0xf]
      %v955 = vld [vmem:[%s328 + $0x38] sm:$0xf]
      %s956 = scalar_lea.vmem %s4, 192
      %v957 = vld [vmem:[%s956] sm:$0xf]
      %v958 = vld [vmem:[%s956 + $0x4] sm:$0xf]
      %v959 = vld [vmem:[%s956 + $0x8] sm:$0xf]
      %v960 = vld [vmem:[%s956 + $0xc] sm:$0xf]
      %v961 = vld [vmem:[%s956 + $0x10] sm:$0xf]
      %v962 = vld [vmem:[%s956 + $0x14] sm:$0xf]
      %v963 = vld [vmem:[%s956 + $0x18] sm:$0xf]
      %v964 = vld [vmem:[%s956 + $0x1c] sm:$0xf]
      %v965 = vld [vmem:[%s956 + $0x20] sm:$0xf]
      %v966 = vld [vmem:[%s956 + $0x24] sm:$0xf]
      %v967 = vld [vmem:[%s956 + $0x28] sm:$0xf]
      %v968 = vld [vmem:[%s956 + $0x2c] sm:$0xf]
      %v969 = vld [vmem:[%s956 + $0x30] sm:$0xf]
      %v970 = vld [vmem:[%s956 + $0x34] sm:$0xf]
      %v971 = vld [vmem:[%s956 + $0x38] sm:$0xf]
      %v972 = vld [vmem:[%s956 + $0x3c] sm:$0xf]
      %v981 = vunpack.c.l.b16 %v948
      %v982 = vunpack.c.l.b16 %v949
      %v983 = vunpack.c.l.b16 %v950
      %v984 = vunpack.c.l.b16 %v951
      %v985 = vunpack.c.l.b16 %v952
      %v986 = vunpack.c.l.b16 %v953
      %v987 = vunpack.c.l.b16 %v954
      %v988 = vunpack.c.l.b16 %v955
      %v989 = vpack.c.b16 %v982, %v981
      %v990 = vpack.c.b16 %v984, %v983
      %v991 = vpack.c.b16 %v986, %v985
      %v992 = vpack.c.b16 %v988, %v987
      %v1013 = vunpack.c.l.b16 %v957
      %v1014 = vunpack.c.l.b16 %v958
      %v1015 = vunpack.c.l.b16 %v959
      %v1016 = vunpack.c.l.b16 %v960
      %v1017 = vunpack.c.l.b16 %v961
      %v1018 = vunpack.c.l.b16 %v962
      %v1019 = vunpack.c.l.b16 %v963
      %v1020 = vunpack.c.l.b16 %v964
      %v1021 = vunpack.c.l.b16 %v965
      %v1022 = vunpack.c.l.b16 %v966
      %v1023 = vunpack.c.l.b16 %v967
      %v1024 = vunpack.c.l.b16 %v968
      %v1025 = vunpack.c.l.b16 %v969
      %v1026 = vunpack.c.l.b16 %v970
      %v1027 = vunpack.c.l.b16 %v971
      %v1028 = vunpack.c.l.b16 %v972
      %v1029 = vpack.c.b16 %v1014, %v1013
      %v1030 = vpack.c.b16 %v1016, %v1015
      %v1031 = vpack.c.b16 %v1018, %v1017
      %v1032 = vpack.c.b16 %v1020, %v1019
      %v1033 = vpack.c.b16 %v1022, %v1021
      %v1034 = vpack.c.b16 %v1024, %v1023
      %v1035 = vpack.c.b16 %v1026, %v1025
      %v1036 = vpack.c.b16 %v1028, %v1027
      %1045 = vmatprep.subr.bf16.mxu0 0
      %1046 = vmatpush1.bf16.msra.mxu0 %v1036
      %1047 = vmatprep.subr.bf16.mxu0 0
      %1048 = vmatpush1.bf16.msra.mxu0 %v1035
      %1049 = vmatprep.subr.bf16.mxu0 0
      %1050 = vmatpush1.bf16.msra.mxu0 %v1034
      %1051 = vmatprep.subr.bf16.mxu0 0
      %1052 = vmatpush1.bf16.msra.mxu0 %v1033
      %1053 = vmatprep.subr.bf16.mxu0 0
      %1054 = vmatpush1.bf16.msra.mxu0 %v1032
      %1055 = vmatprep.subr.bf16.mxu0 0
      %1056 = vmatpush1.bf16.msra.mxu0 %v1031
      %1057 = vmatprep.subr.bf16.mxu0 0
      %1058 = vmatpush1.bf16.msra.mxu0 %v1030
      %1059 = vmatprep.subr.bf16.mxu0 0
      %1060 = vmatpush1.bf16.msra.mxu0 %v1029
      %1061 = vmatprep.subr.bf16.mxu0 0
      %1062 = vmatpush2.bf16.msra.mxu0 0
      %1063 = vmatprep.subr.bf16.mxu0 0
      %1064 = vmatpush2.bf16.msra.mxu0 0
      %1065 = vmatprep.subr.bf16.mxu0 0
      %1066 = vmatpush2.bf16.msra.mxu0 0
      %1067 = vmatprep.subr.bf16.mxu0 0
      %1068 = vmatpush2.bf16.msra.mxu0 0
      %1069 = vmatprep.subr.bf16.mxu0 0
      %1070 = vmatpush2.bf16.msra.mxu0 0
      %1071 = vmatprep.subr.bf16.mxu0 0
      %1072 = vmatpush2.bf16.msra.mxu0 0
      %1073 = vmatprep.subr.bf16.mxu0 0
      %1074 = vmatpush2.bf16.msra.mxu0 0
      %1075 = vmatprep.subr.bf16.mxu0 0
      %1076 = vmatpush2.bf16.msra.mxu0 0
      %1077 = vmatprep.mubr.bf16.mxu0 0
      %1078 = vmatmul.mubr.bf16.gmra.mxu0 %v989
      %v1079 = vpop.f32.mrf.mxu0
      %v1080 = vadd.f32 0.0, %v1079
      %v1081 = vpop.f32.mrf.mxu0
      %v1082 = vpop.f32.mrf.mxu0
      %v1083 = vadd.f32 0.0, %v1082
      %v1084 = vpop.f32.mrf.mxu0
      %1085 = vmatprep.mubr.bf16.mxu0 0
      %1086 = vmatmul.mubr.bf16.gmra.mxu0 %v990
      %v1087 = vpop.f32.mrf.mxu0
      %v1088 = vadd.f32 0.0, %v1087
      %v1089 = vpop.f32.mrf.mxu0
      %v1090 = vpop.f32.mrf.mxu0
      %v1091 = vadd.f32 0.0, %v1090
      %v1092 = vpop.f32.mrf.mxu0
      %1093 = vmatprep.mubr.bf16.mxu0 0
      %1094 = vmatmul.mubr.bf16.gmra.mxu0 %v991
      %v1095 = vpop.f32.mrf.mxu0
      %v1096 = vadd.f32 0.0, %v1095
      %v1097 = vpop.f32.mrf.mxu0
      %v1098 = vpop.f32.mrf.mxu0
      %v1099 = vadd.f32 0.0, %v1098
      %v1100 = vpop.f32.mrf.mxu0
      %1101 = vmatprep.mubr.bf16.mxu0 0
      %1102 = vmatmul.mubr.bf16.gmra.mxu0 %v992
      %v1103 = vpop.f32.mrf.mxu0
      %v1104 = vadd.f32 0.0, %v1103
      %v1105 = vpop.f32.mrf.mxu0
      %v1106 = vpop.f32.mrf.mxu0
      %v1107 = vadd.f32 0.0, %v1106
      %v1108 = vpop.f32.mrf.mxu0
      %1109 = vdwg.mxu0
      %v1110 = vadd.f32 %v940, %v1080
      %v1111 = vadd.f32 %v941, %v1083
      %v1112 = vadd.f32 %v942, %v1088
      %v1113 = vadd.f32 %v943, %v1091
      %v1114 = vadd.f32 %v944, %v1096
      %v1115 = vadd.f32 %v945, %v1099
      %v1116 = vadd.f32 %v946, %v1104
      %v1117 = vadd.f32 %v947, %v1107
      %v1118 = vld [vmem:[%s333] sm:$0xf]
      %v1119 = vld [vmem:[%s333 + $0x8] sm:$0xf]
      %v1120 = vld [vmem:[%s333 + $0x10] sm:$0xf]
      %v1121 = vld [vmem:[%s333 + $0x18] sm:$0xf]
      %v1122 = vld [vmem:[%s333 + $0x20] sm:$0xf]
      %v1123 = vld [vmem:[%s333 + $0x28] sm:$0xf]
      %v1124 = vld [vmem:[%s333 + $0x30] sm:$0xf]
      %v1125 = vld [vmem:[%s333 + $0x38] sm:$0xf]
      %s1126 = scalar_lea.vmem %s4, 256
      %v1127 = vld [vmem:[%s1126] sm:$0xf]
      %v1128 = vld [vmem:[%s1126 + $0x4] sm:$0xf]
      %v1129 = vld [vmem:[%s1126 + $0x8] sm:$0xf]
      %v1130 = vld [vmem:[%s1126 + $0xc] sm:$0xf]
      %v1131 = vld [vmem:[%s1126 + $0x10] sm:$0xf]
      %v1132 = vld [vmem:[%s1126 + $0x14] sm:$0xf]
      %v1133 = vld [vmem:[%s1126 + $0x18] sm:$0xf]
      %v1134 = vld [vmem:[%s1126 + $0x1c] sm:$0xf]
      %v1135 = vld [vmem:[%s1126 + $0x20] sm:$0xf]
      %v1136 = vld [vmem:[%s1126 + $0x24] sm:$0xf]
      %v1137 = vld [vmem:[%s1126 + $0x28] sm:$0xf]
      %v1138 = vld [vmem:[%s1126 + $0x2c] sm:$0xf]
      %v1139 = vld [vmem:[%s1126 + $0x30] sm:$0xf]
      %v1140 = vld [vmem:[%s1126 + $0x34] sm:$0xf]
      %v1141 = vld [vmem:[%s1126 + $0x38] sm:$0xf]
      %v1142 = vld [vmem:[%s1126 + $0x3c] sm:$0xf]
      %v1151 = vunpack.c.l.b16 %v1118
      %v1152 = vunpack.c.l.b16 %v1119
      %v1153 = vunpack.c.l.b16 %v1120
      %v1154 = vunpack.c.l.b16 %v1121
      %v1155 = vunpack.c.l.b16 %v1122
      %v1156 = vunpack.c.l.b16 %v1123
      %v1157 = vunpack.c.l.b16 %v1124
      %v1158 = vunpack.c.l.b16 %v1125
      %v1159 = vpack.c.b16 %v1152, %v1151
      %v1160 = vpack.c.b16 %v1154, %v1153
      %v1161 = vpack.c.b16 %v1156, %v1155
      %v1162 = vpack.c.b16 %v1158, %v1157
      %v1183 = vunpack.c.l.b16 %v1127
      %v1184 = vunpack.c.l.b16 %v1128
      %v1185 = vunpack.c.l.b16 %v1129
      %v1186 = vunpack.c.l.b16 %v1130
      %v1187 = vunpack.c.l.b16 %v1131
      %v1188 = vunpack.c.l.b16 %v1132
      %v1189 = vunpack.c.l.b16 %v1133
      %v1190 = vunpack.c.l.b16 %v1134
      %v1191 = vunpack.c.l.b16 %v1135
      %v1192 = vunpack.c.l.b16 %v1136
      %v1193 = vunpack.c.l.b16 %v1137
      %v1194 = vunpack.c.l.b16 %v1138
      %v1195 = vunpack.c.l.b16 %v1139
      %v1196 = vunpack.c.l.b16 %v1140
      %v1197 = vunpack.c.l.b16 %v1141
      %v1198 = vunpack.c.l.b16 %v1142
      %v1199 = vpack.c.b16 %v1184, %v1183
      %v1200 = vpack.c.b16 %v1186, %v1185
      %v1201 = vpack.c.b16 %v1188, %v1187
      %v1202 = vpack.c.b16 %v1190, %v1189
      %v1203 = vpack.c.b16 %v1192, %v1191
      %v1204 = vpack.c.b16 %v1194, %v1193
      %v1205 = vpack.c.b16 %v1196, %v1195
      %v1206 = vpack.c.b16 %v1198, %v1197
      %1215 = vmatprep.subr.bf16.mxu0 0
      %1216 = vmatpush1.bf16.msra.mxu0 %v1206
      %1217 = vmatprep.subr.bf16.mxu0 0
      %1218 = vmatpush1.bf16.msra.mxu0 %v1205
      %1219 = vmatprep.subr.bf16.mxu0 0
      %1220 = vmatpush1.bf16.msra.mxu0 %v1204
      %1221 = vmatprep.subr.bf16.mxu0 0
      %1222 = vmatpush1.bf16.msra.mxu0 %v1203
      %1223 = vmatprep.subr.bf16.mxu0 0
      %1224 = vmatpush1.bf16.msra.mxu0 %v1202
      %1225 = vmatprep.subr.bf16.mxu0 0
      %1226 = vmatpush1.bf16.msra.mxu0 %v1201
      %1227 = vmatprep.subr.bf16.mxu0 0
      %1228 = vmatpush1.bf16.msra.mxu0 %v1200
      %1229 = vmatprep.subr.bf16.mxu0 0
      %1230 = vmatpush1.bf16.msra.mxu0 %v1199
      %1231 = vmatprep.subr.bf16.mxu0 0
      %1232 = vmatpush2.bf16.msra.mxu0 0
      %1233 = vmatprep.subr.bf16.mxu0 0
      %1234 = vmatpush2.bf16.msra.mxu0 0
      %1235 = vmatprep.subr.bf16.mxu0 0
      %1236 = vmatpush2.bf16.msra.mxu0 0
      %1237 = vmatprep.subr.bf16.mxu0 0
      %1238 = vmatpush2.bf16.msra.mxu0 0
      %1239 = vmatprep.subr.bf16.mxu0 0
      %1240 = vmatpush2.bf16.msra.mxu0 0
      %1241 = vmatprep.subr.bf16.mxu0 0
      %1242 = vmatpush2.bf16.msra.mxu0 0
      %1243 = vmatprep.subr.bf16.mxu0 0
      %1244 = vmatpush2.bf16.msra.mxu0 0
      %1245 = vmatprep.subr.bf16.mxu0 0
      %1246 = vmatpush2.bf16.msra.mxu0 0
      %1247 = vmatprep.mubr.bf16.mxu0 0
      %1248 = vmatmul.mubr.bf16.gmra.mxu0 %v1159
      %v1249 = vpop.f32.mrf.mxu0
      %v1250 = vadd.f32 0.0, %v1249
      %v1251 = vpop.f32.mrf.mxu0
      %v1252 = vpop.f32.mrf.mxu0
      %v1253 = vadd.f32 0.0, %v1252
      %v1254 = vpop.f32.mrf.mxu0
      %1255 = vmatprep.mubr.bf16.mxu0 0
      %1256 = vmatmul.mubr.bf16.gmra.mxu0 %v1160
      %v1257 = vpop.f32.mrf.mxu0
      %v1258 = vadd.f32 0.0, %v1257
      %v1259 = vpop.f32.mrf.mxu0
      %v1260 = vpop.f32.mrf.mxu0
      %v1261 = vadd.f32 0.0, %v1260
      %v1262 = vpop.f32.mrf.mxu0
      %1263 = vmatprep.mubr.bf16.mxu0 0
      %1264 = vmatmul.mubr.bf16.gmra.mxu0 %v1161
      %v1265 = vpop.f32.mrf.mxu0
      %v1266 = vadd.f32 0.0, %v1265
      %v1267 = vpop.f32.mrf.mxu0
      %v1268 = vpop.f32.mrf.mxu0
      %v1269 = vadd.f32 0.0, %v1268
      %v1270 = vpop.f32.mrf.mxu0
      %1271 = vmatprep.mubr.bf16.mxu0 0
      %1272 = vmatmul.mubr.bf16.gmra.mxu0 %v1162
      %v1273 = vpop.f32.mrf.mxu0
      %v1274 = vadd.f32 0.0, %v1273
      %v1275 = vpop.f32.mrf.mxu0
      %v1276 = vpop.f32.mrf.mxu0
      %v1277 = vadd.f32 0.0, %v1276
      %v1278 = vpop.f32.mrf.mxu0
      %1279 = vdwg.mxu0
      %v1280 = vadd.f32 %v1110, %v1250
      %v1281 = vadd.f32 %v1111, %v1253
      %v1282 = vadd.f32 %v1112, %v1258
      %v1283 = vadd.f32 %v1113, %v1261
      %v1284 = vadd.f32 %v1114, %v1266
      %v1285 = vadd.f32 %v1115, %v1269
      %v1286 = vadd.f32 %v1116, %v1274
      %v1287 = vadd.f32 %v1117, %v1277
      %v1288 = vld [vmem:[%s328] sm:$0xf]
      %v1289 = vld [vmem:[%s328 + $0x4] sm:$0x1]
      %v1290 = vld [vmem:[%s328 + $0x8] sm:$0xf]
      %v1291 = vld [vmem:[%s328 + $0xc] sm:$0x1]
      %v1292 = vld [vmem:[%s328 + $0x10] sm:$0xf]
      %v1293 = vld [vmem:[%s328 + $0x14] sm:$0x1]
      %v1294 = vld [vmem:[%s328 + $0x18] sm:$0xf]
      %v1295 = vld [vmem:[%s328 + $0x1c] sm:$0x1]
      %v1296 = vld [vmem:[%s328 + $0x20] sm:$0xf]
      %v1297 = vld [vmem:[%s328 + $0x24] sm:$0x1]
      %v1298 = vld [vmem:[%s328 + $0x28] sm:$0xf]
      %v1299 = vld [vmem:[%s328 + $0x2c] sm:$0x1]
      %v1300 = vld [vmem:[%s328 + $0x30] sm:$0xf]
      %v1301 = vld [vmem:[%s328 + $0x34] sm:$0x1]
      %v1302 = vld [vmem:[%s328 + $0x38] sm:$0xf]
      %v1303 = vld [vmem:[%s328 + $0x3c] sm:$0x1]
      %v1305 = vshrl.u32 %v1288, 16
      %v1307 = vrot.slane %v1305, 4
      %v1308 = vshll.u32 %v1288, 16
      %v1310 = vrot.slane %v1308, 5
      %v1311 = vor.u32 %v1307, %v1310
      %v1312 = vrot.slane %v1311, 4
      %v1314 = vshll.u32 %v1289, 16
      %v1316 = vrot.slane %v1314, 5
      %v1317 = vsel %vm681, %v1312, %v1316
      %v1319 = vshrl.u32 %v1290, 16
      %v1321 = vrot.slane %v1319, 4
      %v1322 = vshll.u32 %v1290, 16
      %v1324 = vrot.slane %v1322, 5
      %v1325 = vor.u32 %v1321, %v1324
      %v1326 = vrot.slane %v1325, 4
      %v1328 = vshll.u32 %v1291, 16
      %v1330 = vrot.slane %v1328, 5
      %v1331 = vsel %vm681, %v1326, %v1330
      %v1333 = vshrl.u32 %v1292, 16
      %v1335 = vrot.slane %v1333, 4
      %v1336 = vshll.u32 %v1292, 16
      %v1338 = vrot.slane %v1336, 5
      %v1339 = vor.u32 %v1335, %v1338
      %v1340 = vrot.slane %v1339, 4
      %v1342 = vshll.u32 %v1293, 16
      %v1344 = vrot.slane %v1342, 5
      %v1345 = vsel %vm681, %v1340, %v1344
      %v1347 = vshrl.u32 %v1294, 16
      %v1349 = vrot.slane %v1347, 4
      %v1350 = vshll.u32 %v1294, 16
      %v1352 = vrot.slane %v1350, 5
      %v1353 = vor.u32 %v1349, %v1352
      %v1354 = vrot.slane %v1353, 4
      %v1356 = vshll.u32 %v1295, 16
      %v1358 = vrot.slane %v1356, 5
      %v1359 = vsel %vm681, %v1354, %v1358
      %v1361 = vshrl.u32 %v1296, 16
      %v1363 = vrot.slane %v1361, 4
      %v1364 = vshll.u32 %v1296, 16
      %v1366 = vrot.slane %v1364, 5
      %v1367 = vor.u32 %v1363, %v1366
      %v1368 = vrot.slane %v1367, 4
      %v1370 = vshll.u32 %v1297, 16
      %v1372 = vrot.slane %v1370, 5
      %v1373 = vsel %vm681, %v1368, %v1372
      %v1375 = vshrl.u32 %v1298, 16
      %v1377 = vrot.slane %v1375, 4
      %v1378 = vshll.u32 %v1298, 16
      %v1380 = vrot.slane %v1378, 5
      %v1381 = vor.u32 %v1377, %v1380
      %v1382 = vrot.slane %v1381, 4
      %v1384 = vshll.u32 %v1299, 16
      %v1386 = vrot.slane %v1384, 5
      %v1387 = vsel %vm681, %v1382, %v1386
      %v1389 = vshrl.u32 %v1300, 16
      %v1391 = vrot.slane %v1389, 4
      %v1392 = vshll.u32 %v1300, 16
      %v1394 = vrot.slane %v1392, 5
      %v1395 = vor.u32 %v1391, %v1394
      %v1396 = vrot.slane %v1395, 4
      %v1398 = vshll.u32 %v1301, 16
      %v1400 = vrot.slane %v1398, 5
      %v1401 = vsel %vm681, %v1396, %v1400
      %v1403 = vshrl.u32 %v1302, 16
      %v1405 = vrot.slane %v1403, 4
      %v1406 = vshll.u32 %v1302, 16
      %v1408 = vrot.slane %v1406, 5
      %v1409 = vor.u32 %v1405, %v1408
      %v1410 = vrot.slane %v1409, 4
      %v1412 = vshll.u32 %v1303, 16
      %v1414 = vrot.slane %v1412, 5
      %v1415 = vsel %vm681, %v1410, %v1414
      %s1416 = scalar_lea.vmem %s4, 320
      %v1417 = vld [vmem:[%s1416] sm:$0xf]
      %v1418 = vld [vmem:[%s1416 + $0x4] sm:$0xf]
      %v1419 = vld [vmem:[%s1416 + $0x8] sm:$0xf]
      %v1420 = vld [vmem:[%s1416 + $0xc] sm:$0xf]
      %v1421 = vld [vmem:[%s1416 + $0x10] sm:$0xf]
      %v1422 = vld [vmem:[%s1416 + $0x14] sm:$0xf]
      %v1423 = vld [vmem:[%s1416 + $0x18] sm:$0xf]
      %v1424 = vld [vmem:[%s1416 + $0x1c] sm:$0xf]
      %v1425 = vld [vmem:[%s1416 + $0x20] sm:$0xf]
      %v1426 = vld [vmem:[%s1416 + $0x24] sm:$0xf]
      %v1427 = vld [vmem:[%s1416 + $0x28] sm:$0xf]
      %v1428 = vld [vmem:[%s1416 + $0x2c] sm:$0xf]
      %v1429 = vld [vmem:[%s1416 + $0x30] sm:$0xf]
      %v1430 = vld [vmem:[%s1416 + $0x34] sm:$0xf]
      %v1431 = vld [vmem:[%s1416 + $0x38] sm:$0xf]
      %v1432 = vld [vmem:[%s1416 + $0x3c] sm:$0xf]
      %v1433 = vunpack.c.l.b16 %v1317
      %v1434 = vunpack.c.l.b16 %v1331
      %v1435 = vunpack.c.l.b16 %v1345
      %v1436 = vunpack.c.l.b16 %v1359
      %v1437 = vunpack.c.l.b16 %v1373
      %v1438 = vunpack.c.l.b16 %v1387
      %v1439 = vunpack.c.l.b16 %v1401
      %v1440 = vunpack.c.l.b16 %v1415
      %v1441 = vpack.c.b16 %v1434, %v1433
      %v1442 = vpack.c.b16 %v1436, %v1435
      %v1443 = vpack.c.b16 %v1438, %v1437
      %v1444 = vpack.c.b16 %v1440, %v1439
      %v1465 = vunpack.c.l.b16 %v1417
      %v1466 = vunpack.c.l.b16 %v1418
      %v1467 = vunpack.c.l.b16 %v1419
      %v1468 = vunpack.c.l.b16 %v1420
      %v1469 = vunpack.c.l.b16 %v1421
      %v1470 = vunpack.c.l.b16 %v1422
      %v1471 = vunpack.c.l.b16 %v1423
      %v1472 = vunpack.c.l.b16 %v1424
      %v1473 = vunpack.c.l.b16 %v1425
      %v1474 = vunpack.c.l.b16 %v1426
      %v1475 = vunpack.c.l.b16 %v1427
      %v1476 = vunpack.c.l.b16 %v1428
      %v1477 = vunpack.c.l.b16 %v1429
      %v1478 = vunpack.c.l.b16 %v1430
      %v1479 = vunpack.c.l.b16 %v1431
      %v1480 = vunpack.c.l.b16 %v1432
      %v1481 = vpack.c.b16 %v1466, %v1465
      %v1482 = vpack.c.b16 %v1468, %v1467
      %v1483 = vpack.c.b16 %v1470, %v1469
      %v1484 = vpack.c.b16 %v1472, %v1471
      %v1485 = vpack.c.b16 %v1474, %v1473
      %v1486 = vpack.c.b16 %v1476, %v1475
      %v1487 = vpack.c.b16 %v1478, %v1477
      %v1488 = vpack.c.b16 %v1480, %v1479
      %1497 = vmatprep.subr.bf16.mxu0 0
      %1498 = vmatpush1.bf16.msra.mxu0 %v1488
      %1499 = vmatprep.subr.bf16.mxu0 0
      %1500 = vmatpush1.bf16.msra.mxu0 %v1487
      %1501 = vmatprep.subr.bf16.mxu0 0
      %1502 = vmatpush1.bf16.msra.mxu0 %v1486
      %1503 = vmatprep.subr.bf16.mxu0 0
      %1504 = vmatpush1.bf16.msra.mxu0 %v1485
      %1505 = vmatprep.subr.bf16.mxu0 0
      %1506 = vmatpush1.bf16.msra.mxu0 %v1484
      %1507 = vmatprep.subr.bf16.mxu0 0
      %1508 = vmatpush1.bf16.msra.mxu0 %v1483
      %1509 = vmatprep.subr.bf16.mxu0 0
      %1510 = vmatpush1.bf16.msra.mxu0 %v1482
      %1511 = vmatprep.subr.bf16.mxu0 0
      %1512 = vmatpush1.bf16.msra.mxu0 %v1481
      %1513 = vmatprep.subr.bf16.mxu0 0
      %1514 = vmatpush2.bf16.msra.mxu0 0
      %1515 = vmatprep.subr.bf16.mxu0 0
      %1516 = vmatpush2.bf16.msra.mxu0 0
      %1517 = vmatprep.subr.bf16.mxu0 0
      %1518 = vmatpush2.bf16.msra.mxu0 0
      %1519 = vmatprep.subr.bf16.mxu0 0
      %1520 = vmatpush2.bf16.msra.mxu0 0
      %1521 = vmatprep.subr.bf16.mxu0 0
      %1522 = vmatpush2.bf16.msra.mxu0 0
      %1523 = vmatprep.subr.bf16.mxu0 0
      %1524 = vmatpush2.bf16.msra.mxu0 0
      %1525 = vmatprep.subr.bf16.mxu0 0
      %1526 = vmatpush2.bf16.msra.mxu0 0
      %1527 = vmatprep.subr.bf16.mxu0 0
      %1528 = vmatpush2.bf16.msra.mxu0 0
      %1529 = vmatprep.mubr.bf16.mxu0 0
      %1530 = vmatmul.mubr.bf16.gmra.mxu0 %v1441
      %v1531 = vpop.f32.mrf.mxu0
      %v1532 = vadd.f32 0.0, %v1531
      %v1533 = vpop.f32.mrf.mxu0
      %v1534 = vpop.f32.mrf.mxu0
      %v1535 = vadd.f32 0.0, %v1534
      %v1536 = vpop.f32.mrf.mxu0
      %1537 = vmatprep.mubr.bf16.mxu0 0
      %1538 = vmatmul.mubr.bf16.gmra.mxu0 %v1442
      %v1539 = vpop.f32.mrf.mxu0
      %v1540 = vadd.f32 0.0, %v1539
      %v1541 = vpop.f32.mrf.mxu0
      %v1542 = vpop.f32.mrf.mxu0
      %v1543 = vadd.f32 0.0, %v1542
      %v1544 = vpop.f32.mrf.mxu0
      %1545 = vmatprep.mubr.bf16.mxu0 0
      %1546 = vmatmul.mubr.bf16.gmra.mxu0 %v1443
      %v1547 = vpop.f32.mrf.mxu0
      %v1548 = vadd.f32 0.0, %v1547
      %v1549 = vpop.f32.mrf.mxu0
      %v1550 = vpop.f32.mrf.mxu0
      %v1551 = vadd.f32 0.0, %v1550
      %v1552 = vpop.f32.mrf.mxu0
      %1553 = vmatprep.mubr.bf16.mxu0 0
      %1554 = vmatmul.mubr.bf16.gmra.mxu0 %v1444
      %v1555 = vpop.f32.mrf.mxu0
      %v1556 = vadd.f32 0.0, %v1555
      %v1557 = vpop.f32.mrf.mxu0
      %v1558 = vpop.f32.mrf.mxu0
      %v1559 = vadd.f32 0.0, %v1558
      %v1560 = vpop.f32.mrf.mxu0
      %1561 = vdwg.mxu0
      %v1562 = vadd.f32 %v1280, %v1532
      %v1563 = vadd.f32 %v1281, %v1535
      %v1564 = vadd.f32 %v1282, %v1540
      %v1565 = vadd.f32 %v1283, %v1543
      %v1566 = vadd.f32 %v1284, %v1548
      %v1567 = vadd.f32 %v1285, %v1551
      %v1568 = vadd.f32 %v1286, %v1556
      %v1569 = vadd.f32 %v1287, %v1559
      %s1570 = scalar_lea.vmem %s318, 8
      %v1571 = vld [vmem:[%s1570] sm:$0xf]
      %v1572 = vld [vmem:[%s1570 + $0x8] sm:$0xf]
      %v1573 = vld [vmem:[%s1570 + $0x10] sm:$0xf]
      %v1574 = vld [vmem:[%s1570 + $0x18] sm:$0xf]
      %v1575 = vld [vmem:[%s1570 + $0x20] sm:$0xf]
      %v1576 = vld [vmem:[%s1570 + $0x28] sm:$0xf]
      %v1577 = vld [vmem:[%s1570 + $0x30] sm:$0xf]
      %v1578 = vld [vmem:[%s1570 + $0x38] sm:$0xf]
      %s1579 = scalar_lea.vmem %s4, 384
      %v1580 = vld [vmem:[%s1579] sm:$0xf]
      %v1581 = vld [vmem:[%s1579 + $0x4] sm:$0xf]
      %v1582 = vld [vmem:[%s1579 + $0x8] sm:$0xf]
      %v1583 = vld [vmem:[%s1579 + $0xc] sm:$0xf]
      %v1584 = vld [vmem:[%s1579 + $0x10] sm:$0xf]
      %v1585 = vld [vmem:[%s1579 + $0x14] sm:$0xf]
      %v1586 = vld [vmem:[%s1579 + $0x18] sm:$0xf]
      %v1587 = vld [vmem:[%s1579 + $0x1c] sm:$0xf]
      %v1588 = vld [vmem:[%s1579 + $0x20] sm:$0xf]
      %v1589 = vld [vmem:[%s1579 + $0x24] sm:$0xf]
      %v1590 = vld [vmem:[%s1579 + $0x28] sm:$0xf]
      %v1591 = vld [vmem:[%s1579 + $0x2c] sm:$0xf]
      %v1592 = vld [vmem:[%s1579 + $0x30] sm:$0xf]
      %v1593 = vld [vmem:[%s1579 + $0x34] sm:$0xf]
      %v1594 = vld [vmem:[%s1579 + $0x38] sm:$0xf]
      %v1595 = vld [vmem:[%s1579 + $0x3c] sm:$0xf]
      %v1604 = vunpack.c.l.b16 %v1571
      %v1605 = vunpack.c.l.b16 %v1572
      %v1606 = vunpack.c.l.b16 %v1573
      %v1607 = vunpack.c.l.b16 %v1574
      %v1608 = vunpack.c.l.b16 %v1575
      %v1609 = vunpack.c.l.b16 %v1576
      %v1610 = vunpack.c.l.b16 %v1577
      %v1611 = vunpack.c.l.b16 %v1578
      %v1612 = vpack.c.b16 %v1605, %v1604
      %v1613 = vpack.c.b16 %v1607, %v1606
      %v1614 = vpack.c.b16 %v1609, %v1608
      %v1615 = vpack.c.b16 %v1611, %v1610
      %v1636 = vunpack.c.l.b16 %v1580
      %v1637 = vunpack.c.l.b16 %v1581
      %v1638 = vunpack.c.l.b16 %v1582
      %v1639 = vunpack.c.l.b16 %v1583
      %v1640 = vunpack.c.l.b16 %v1584
      %v1641 = vunpack.c.l.b16 %v1585
      %v1642 = vunpack.c.l.b16 %v1586
      %v1643 = vunpack.c.l.b16 %v1587
      %v1644 = vunpack.c.l.b16 %v1588
      %v1645 = vunpack.c.l.b16 %v1589
      %v1646 = vunpack.c.l.b16 %v1590
      %v1647 = vunpack.c.l.b16 %v1591
      %v1648 = vunpack.c.l.b16 %v1592
      %v1649 = vunpack.c.l.b16 %v1593
      %v1650 = vunpack.c.l.b16 %v1594
      %v1651 = vunpack.c.l.b16 %v1595
      %v1652 = vpack.c.b16 %v1637, %v1636
      %v1653 = vpack.c.b16 %v1639, %v1638
      %v1654 = vpack.c.b16 %v1641, %v1640
      %v1655 = vpack.c.b16 %v1643, %v1642
      %v1656 = vpack.c.b16 %v1645, %v1644
      %v1657 = vpack.c.b16 %v1647, %v1646
      %v1658 = vpack.c.b16 %v1649, %v1648
      %v1659 = vpack.c.b16 %v1651, %v1650
      %1668 = vmatprep.subr.bf16.mxu0 0
      %1669 = vmatpush1.bf16.msra.mxu0 %v1659
      %1670 = vmatprep.subr.bf16.mxu0 0
      %1671 = vmatpush1.bf16.msra.mxu0 %v1658
      %1672 = vmatprep.subr.bf16.mxu0 0
      %1673 = vmatpush1.bf16.msra.mxu0 %v1657
      %1674 = vmatprep.subr.bf16.mxu0 0
      %1675 = vmatpush1.bf16.msra.mxu0 %v1656
      %1676 = vmatprep.subr.bf16.mxu0 0
      %1677 = vmatpush1.bf16.msra.mxu0 %v1655
      %1678 = vmatprep.subr.bf16.mxu0 0
      %1679 = vmatpush1.bf16.msra.mxu0 %v1654
      %1680 = vmatprep.subr.bf16.mxu0 0
      %1681 = vmatpush1.bf16.msra.mxu0 %v1653
      %1682 = vmatprep.subr.bf16.mxu0 0
      %1683 = vmatpush1.bf16.msra.mxu0 %v1652
      %1684 = vmatprep.subr.bf16.mxu0 0
      %1685 = vmatpush2.bf16.msra.mxu0 0
      %1686 = vmatprep.subr.bf16.mxu0 0
      %1687 = vmatpush2.bf16.msra.mxu0 0
      %1688 = vmatprep.subr.bf16.mxu0 0
      %1689 = vmatpush2.bf16.msra.mxu0 0
      %1690 = vmatprep.subr.bf16.mxu0 0
      %1691 = vmatpush2.bf16.msra.mxu0 0
      %1692 = vmatprep.subr.bf16.mxu0 0
      %1693 = vmatpush2.bf16.msra.mxu0 0
      %1694 = vmatprep.subr.bf16.mxu0 0
      %1695 = vmatpush2.bf16.msra.mxu0 0
      %1696 = vmatprep.subr.bf16.mxu0 0
      %1697 = vmatpush2.bf16.msra.mxu0 0
      %1698 = vmatprep.subr.bf16.mxu0 0
      %1699 = vmatpush2.bf16.msra.mxu0 0
      %1700 = vmatprep.mubr.bf16.mxu0 0
      %1701 = vmatmul.mubr.bf16.gmra.mxu0 %v1612
      %v1702 = vpop.f32.mrf.mxu0
      %v1703 = vadd.f32 0.0, %v1702
      %v1704 = vpop.f32.mrf.mxu0
      %v1705 = vpop.f32.mrf.mxu0
      %v1706 = vadd.f32 0.0, %v1705
      %v1707 = vpop.f32.mrf.mxu0
      %1708 = vmatprep.mubr.bf16.mxu0 0
      %1709 = vmatmul.mubr.bf16.gmra.mxu0 %v1613
      %v1710 = vpop.f32.mrf.mxu0
      %v1711 = vadd.f32 0.0, %v1710
      %v1712 = vpop.f32.mrf.mxu0
      %v1713 = vpop.f32.mrf.mxu0
      %v1714 = vadd.f32 0.0, %v1713
      %v1715 = vpop.f32.mrf.mxu0
      %1716 = vmatprep.mubr.bf16.mxu0 0
      %1717 = vmatmul.mubr.bf16.gmra.mxu0 %v1614
      %v1718 = vpop.f32.mrf.mxu0
      %v1719 = vadd.f32 0.0, %v1718
      %v1720 = vpop.f32.mrf.mxu0
      %v1721 = vpop.f32.mrf.mxu0
      %v1722 = vadd.f32 0.0, %v1721
      %v1723 = vpop.f32.mrf.mxu0
      %1724 = vmatprep.mubr.bf16.mxu0 0
      %1725 = vmatmul.mubr.bf16.gmra.mxu0 %v1615
      %v1726 = vpop.f32.mrf.mxu0
      %v1727 = vadd.f32 0.0, %v1726
      %v1728 = vpop.f32.mrf.mxu0
      %v1729 = vpop.f32.mrf.mxu0
      %v1730 = vadd.f32 0.0, %v1729
      %v1731 = vpop.f32.mrf.mxu0
      %1732 = vdwg.mxu0
      %v1733 = vadd.f32 %v1562, %v1703
      %v1734 = vadd.f32 %v1563, %v1706
      %v1735 = vadd.f32 %v1564, %v1711
      %v1736 = vadd.f32 %v1565, %v1714
      %v1737 = vadd.f32 %v1566, %v1719
      %v1738 = vadd.f32 %v1567, %v1722
      %v1739 = vadd.f32 %v1568, %v1727
      %v1740 = vadd.f32 %v1569, %v1730
      %s1741 = scalar_lea.vmem %s323, 8
      %v1742 = vld [vmem:[%s1741] sm:$0xf]
      %v1743 = vld [vmem:[%s1741 + $0x8] sm:$0xf]
      %v1744 = vld [vmem:[%s1741 + $0x10] sm:$0xf]
      %v1745 = vld [vmem:[%s1741 + $0x18] sm:$0xf]
      %v1746 = vld [vmem:[%s1741 + $0x20] sm:$0xf]
      %v1747 = vld [vmem:[%s1741 + $0x28] sm:$0xf]
      %v1748 = vld [vmem:[%s1741 + $0x30] sm:$0xf]
      %v1749 = vld [vmem:[%s1741 + $0x38] sm:$0xf]
      %s1750 = scalar_lea.vmem %s4, 448
      %v1751 = vld [vmem:[%s1750] sm:$0xf]
      %v1752 = vld [vmem:[%s1750 + $0x4] sm:$0xf]
      %v1753 = vld [vmem:[%s1750 + $0x8] sm:$0xf]
      %v1754 = vld [vmem:[%s1750 + $0xc] sm:$0xf]
      %v1755 = vld [vmem:[%s1750 + $0x10] sm:$0xf]
      %v1756 = vld [vmem:[%s1750 + $0x14] sm:$0xf]
      %v1757 = vld [vmem:[%s1750 + $0x18] sm:$0xf]
      %v1758 = vld [vmem:[%s1750 + $0x1c] sm:$0xf]
      %v1759 = vld [vmem:[%s1750 + $0x20] sm:$0xf]
      %v1760 = vld [vmem:[%s1750 + $0x24] sm:$0xf]
      %v1761 = vld [vmem:[%s1750 + $0x28] sm:$0xf]
      %v1762 = vld [vmem:[%s1750 + $0x2c] sm:$0xf]
      %v1763 = vld [vmem:[%s1750 + $0x30] sm:$0xf]
      %v1764 = vld [vmem:[%s1750 + $0x34] sm:$0xf]
      %v1765 = vld [vmem:[%s1750 + $0x38] sm:$0xf]
      %v1766 = vld [vmem:[%s1750 + $0x3c] sm:$0xf]
      %v1775 = vunpack.c.l.b16 %v1742
      %v1776 = vunpack.c.l.b16 %v1743
      %v1777 = vunpack.c.l.b16 %v1744
      %v1778 = vunpack.c.l.b16 %v1745
      %v1779 = vunpack.c.l.b16 %v1746
      %v1780 = vunpack.c.l.b16 %v1747
      %v1781 = vunpack.c.l.b16 %v1748
      %v1782 = vunpack.c.l.b16 %v1749
      %v1783 = vpack.c.b16 %v1776, %v1775
      %v1784 = vpack.c.b16 %v1778, %v1777
      %v1785 = vpack.c.b16 %v1780, %v1779
      %v1786 = vpack.c.b16 %v1782, %v1781
      %v1807 = vunpack.c.l.b16 %v1751
      %v1808 = vunpack.c.l.b16 %v1752
      %v1809 = vunpack.c.l.b16 %v1753
      %v1810 = vunpack.c.l.b16 %v1754
      %v1811 = vunpack.c.l.b16 %v1755
      %v1812 = vunpack.c.l.b16 %v1756
      %v1813 = vunpack.c.l.b16 %v1757
      %v1814 = vunpack.c.l.b16 %v1758
      %v1815 = vunpack.c.l.b16 %v1759
      %v1816 = vunpack.c.l.b16 %v1760
      %v1817 = vunpack.c.l.b16 %v1761
      %v1818 = vunpack.c.l.b16 %v1762
      %v1819 = vunpack.c.l.b16 %v1763
      %v1820 = vunpack.c.l.b16 %v1764
      %v1821 = vunpack.c.l.b16 %v1765
      %v1822 = vunpack.c.l.b16 %v1766
      %v1823 = vpack.c.b16 %v1808, %v1807
      %v1824 = vpack.c.b16 %v1810, %v1809
      %v1825 = vpack.c.b16 %v1812, %v1811
      %v1826 = vpack.c.b16 %v1814, %v1813
      %v1827 = vpack.c.b16 %v1816, %v1815
      %v1828 = vpack.c.b16 %v1818, %v1817
      %v1829 = vpack.c.b16 %v1820, %v1819
      %v1830 = vpack.c.b16 %v1822, %v1821
      %1839 = vmatprep.subr.bf16.mxu0 0
      %1840 = vmatpush1.bf16.msra.mxu0 %v1830
      %1841 = vmatprep.subr.bf16.mxu0 0
      %1842 = vmatpush1.bf16.msra.mxu0 %v1829
      %1843 = vmatprep.subr.bf16.mxu0 0
      %1844 = vmatpush1.bf16.msra.mxu0 %v1828
      %1845 = vmatprep.subr.bf16.mxu0 0
      %1846 = vmatpush1.bf16.msra.mxu0 %v1827
      %1847 = vmatprep.subr.bf16.mxu0 0
      %1848 = vmatpush1.bf16.msra.mxu0 %v1826
      %1849 = vmatprep.subr.bf16.mxu0 0
      %1850 = vmatpush1.bf16.msra.mxu0 %v1825
      %1851 = vmatprep.subr.bf16.mxu0 0
      %1852 = vmatpush1.bf16.msra.mxu0 %v1824
      %1853 = vmatprep.subr.bf16.mxu0 0
      %1854 = vmatpush1.bf16.msra.mxu0 %v1823
      %1855 = vmatprep.subr.bf16.mxu0 0
      %1856 = vmatpush2.bf16.msra.mxu0 0
      %1857 = vmatprep.subr.bf16.mxu0 0
      %1858 = vmatpush2.bf16.msra.mxu0 0
      %1859 = vmatprep.subr.bf16.mxu0 0
      %1860 = vmatpush2.bf16.msra.mxu0 0
      %1861 = vmatprep.subr.bf16.mxu0 0
      %1862 = vmatpush2.bf16.msra.mxu0 0
      %1863 = vmatprep.subr.bf16.mxu0 0
      %1864 = vmatpush2.bf16.msra.mxu0 0
      %1865 = vmatprep.subr.bf16.mxu0 0
      %1866 = vmatpush2.bf16.msra.mxu0 0
      %1867 = vmatprep.subr.bf16.mxu0 0
      %1868 = vmatpush2.bf16.msra.mxu0 0
      %1869 = vmatprep.subr.bf16.mxu0 0
      %1870 = vmatpush2.bf16.msra.mxu0 0
      %1871 = vmatprep.mubr.bf16.mxu0 0
      %1872 = vmatmul.mubr.bf16.gmra.mxu0 %v1783
      %v1873 = vpop.f32.mrf.mxu0
      %v1874 = vadd.f32 0.0, %v1873
      %v1875 = vpop.f32.mrf.mxu0
      %v1876 = vpop.f32.mrf.mxu0
      %v1877 = vadd.f32 0.0, %v1876
      %v1878 = vpop.f32.mrf.mxu0
      %1879 = vmatprep.mubr.bf16.mxu0 0
      %1880 = vmatmul.mubr.bf16.gmra.mxu0 %v1784
      %v1881 = vpop.f32.mrf.mxu0
      %v1882 = vadd.f32 0.0, %v1881
      %v1883 = vpop.f32.mrf.mxu0
      %v1884 = vpop.f32.mrf.mxu0
      %v1885 = vadd.f32 0.0, %v1884
      %v1886 = vpop.f32.mrf.mxu0
      %1887 = vmatprep.mubr.bf16.mxu0 0
      %1888 = vmatmul.mubr.bf16.gmra.mxu0 %v1785
      %v1889 = vpop.f32.mrf.mxu0
      %v1890 = vadd.f32 0.0, %v1889
      %v1891 = vpop.f32.mrf.mxu0
      %v1892 = vpop.f32.mrf.mxu0
      %v1893 = vadd.f32 0.0, %v1892
      %v1894 = vpop.f32.mrf.mxu0
      %1895 = vmatprep.mubr.bf16.mxu0 0
      %1896 = vmatmul.mubr.bf16.gmra.mxu0 %v1786
      %v1897 = vpop.f32.mrf.mxu0
      %v1898 = vadd.f32 0.0, %v1897
      %v1899 = vpop.f32.mrf.mxu0
      %v1900 = vpop.f32.mrf.mxu0
      %v1901 = vadd.f32 0.0, %v1900
      %v1902 = vpop.f32.mrf.mxu0
      %1903 = vdwg.mxu0
      %v1904 = vadd.f32 %v1733, %v1874
      %v1905 = vadd.f32 %v1734, %v1877
      %v1906 = vadd.f32 %v1735, %v1882
      %v1907 = vadd.f32 %v1736, %v1885
      %v1908 = vadd.f32 %v1737, %v1890
      %v1909 = vadd.f32 %v1738, %v1893
      %v1910 = vadd.f32 %v1739, %v1898
      %v1911 = vadd.f32 %v1740, %v1901
      %v1912 = vld [vmem:[%s1570] sm:$0xf]
      %v1913 = vld [vmem:[%s1570 + $0x4] sm:$0x1]
      %v1914 = vld [vmem:[%s1570 + $0x8] sm:$0xf]
      %v1915 = vld [vmem:[%s1570 + $0xc] sm:$0x1]
      %v1916 = vld [vmem:[%s1570 + $0x10] sm:$0xf]
      %v1917 = vld [vmem:[%s1570 + $0x14] sm:$0x1]
      %v1918 = vld [vmem:[%s1570 + $0x18] sm:$0xf]
      %v1919 = vld [vmem:[%s1570 + $0x1c] sm:$0x1]
      %v1920 = vld [vmem:[%s1570 + $0x20] sm:$0xf]
      %v1921 = vld [vmem:[%s1570 + $0x24] sm:$0x1]
      %v1922 = vld [vmem:[%s1570 + $0x28] sm:$0xf]
      %v1923 = vld [vmem:[%s1570 + $0x2c] sm:$0x1]
      %v1924 = vld [vmem:[%s1570 + $0x30] sm:$0xf]
      %v1925 = vld [vmem:[%s1570 + $0x34] sm:$0x1]
      %v1926 = vld [vmem:[%s1570 + $0x38] sm:$0xf]
      %v1927 = vld [vmem:[%s1570 + $0x3c] sm:$0x1]
      %v1929 = vshrl.u32 %v1912, 16
      %v1931 = vrot.slane %v1929, 4
      %v1932 = vshll.u32 %v1912, 16
      %v1934 = vrot.slane %v1932, 5
      %v1935 = vor.u32 %v1931, %v1934
      %v1936 = vrot.slane %v1935, 4
      %v1938 = vshll.u32 %v1913, 16
      %v1940 = vrot.slane %v1938, 5
      %v1941 = vsel %vm681, %v1936, %v1940
      %v1943 = vshrl.u32 %v1914, 16
      %v1945 = vrot.slane %v1943, 4
      %v1946 = vshll.u32 %v1914, 16
      %v1948 = vrot.slane %v1946, 5
      %v1949 = vor.u32 %v1945, %v1948
      %v1950 = vrot.slane %v1949, 4
      %v1952 = vshll.u32 %v1915, 16
      %v1954 = vrot.slane %v1952, 5
      %v1955 = vsel %vm681, %v1950, %v1954
      %v1957 = vshrl.u32 %v1916, 16
      %v1959 = vrot.slane %v1957, 4
      %v1960 = vshll.u32 %v1916, 16
      %v1962 = vrot.slane %v1960, 5
      %v1963 = vor.u32 %v1959, %v1962
      %v1964 = vrot.slane %v1963, 4
      %v1966 = vshll.u32 %v1917, 16
      %v1968 = vrot.slane %v1966, 5
      %v1969 = vsel %vm681, %v1964, %v1968
      %v1971 = vshrl.u32 %v1918, 16
      %v1973 = vrot.slane %v1971, 4
      %v1974 = vshll.u32 %v1918, 16
      %v1976 = vrot.slane %v1974, 5
      %v1977 = vor.u32 %v1973, %v1976
      %v1978 = vrot.slane %v1977, 4
      %v1980 = vshll.u32 %v1919, 16
      %v1982 = vrot.slane %v1980, 5
      %v1983 = vsel %vm681, %v1978, %v1982
      %v1985 = vshrl.u32 %v1920, 16
      %v1987 = vrot.slane %v1985, 4
      %v1988 = vshll.u32 %v1920, 16
      %v1990 = vrot.slane %v1988, 5
      %v1991 = vor.u32 %v1987, %v1990
      %v1992 = vrot.slane %v1991, 4
      %v1994 = vshll.u32 %v1921, 16
      %v1996 = vrot.slane %v1994, 5
      %v1997 = vsel %vm681, %v1992, %v1996
      %v1999 = vshrl.u32 %v1922, 16
      %v2001 = vrot.slane %v1999, 4
      %v2002 = vshll.u32 %v1922, 16
      %v2004 = vrot.slane %v2002, 5
      %v2005 = vor.u32 %v2001, %v2004
      %v2006 = vrot.slane %v2005, 4
      %v2008 = vshll.u32 %v1923, 16
      %v2010 = vrot.slane %v2008, 5
      %v2011 = vsel %vm681, %v2006, %v2010
      %v2013 = vshrl.u32 %v1924, 16
      %v2015 = vrot.slane %v2013, 4
      %v2016 = vshll.u32 %v1924, 16
      %v2018 = vrot.slane %v2016, 5
      %v2019 = vor.u32 %v2015, %v2018
      %v2020 = vrot.slane %v2019, 4
      %v2022 = vshll.u32 %v1925, 16
      %v2024 = vrot.slane %v2022, 5
      %v2025 = vsel %vm681, %v2020, %v2024
      %v2027 = vshrl.u32 %v1926, 16
      %v2029 = vrot.slane %v2027, 4
      %v2030 = vshll.u32 %v1926, 16
      %v2032 = vrot.slane %v2030, 5
      %v2033 = vor.u32 %v2029, %v2032
      %v2034 = vrot.slane %v2033, 4
      %v2036 = vshll.u32 %v1927, 16
      %v2038 = vrot.slane %v2036, 5
      %v2039 = vsel %vm681, %v2034, %v2038
      %s2040 = scalar_lea.vmem %s4, 512
      %v2041 = vld [vmem:[%s2040] sm:$0xf]
      %v2042 = vld [vmem:[%s2040 + $0x4] sm:$0xf]
      %v2043 = vld [vmem:[%s2040 + $0x8] sm:$0xf]
      %v2044 = vld [vmem:[%s2040 + $0xc] sm:$0xf]
      %v2045 = vld [vmem:[%s2040 + $0x10] sm:$0xf]
      %v2046 = vld [vmem:[%s2040 + $0x14] sm:$0xf]
      %v2047 = vld [vmem:[%s2040 + $0x18] sm:$0xf]
      %v2048 = vld [vmem:[%s2040 + $0x1c] sm:$0xf]
      %v2049 = vld [vmem:[%s2040 + $0x20] sm:$0xf]
      %v2050 = vld [vmem:[%s2040 + $0x24] sm:$0xf]
      %v2051 = vld [vmem:[%s2040 + $0x28] sm:$0xf]
      %v2052 = vld [vmem:[%s2040 + $0x2c] sm:$0xf]
      %v2053 = vld [vmem:[%s2040 + $0x30] sm:$0xf]
      %v2054 = vld [vmem:[%s2040 + $0x34] sm:$0xf]
      %v2055 = vld [vmem:[%s2040 + $0x38] sm:$0xf]
      %v2056 = vld [vmem:[%s2040 + $0x3c] sm:$0xf]
      %v2057 = vunpack.c.l.b16 %v1941
      %v2058 = vunpack.c.l.b16 %v1955
      %v2059 = vunpack.c.l.b16 %v1969
      %v2060 = vunpack.c.l.b16 %v1983
      %v2061 = vunpack.c.l.b16 %v1997
      %v2062 = vunpack.c.l.b16 %v2011
      %v2063 = vunpack.c.l.b16 %v2025
      %v2064 = vunpack.c.l.b16 %v2039
      %v2065 = vpack.c.b16 %v2058, %v2057
      %v2066 = vpack.c.b16 %v2060, %v2059
      %v2067 = vpack.c.b16 %v2062, %v2061
      %v2068 = vpack.c.b16 %v2064, %v2063
      %v2089 = vunpack.c.l.b16 %v2041
      %v2090 = vunpack.c.l.b16 %v2042
      %v2091 = vunpack.c.l.b16 %v2043
      %v2092 = vunpack.c.l.b16 %v2044
      %v2093 = vunpack.c.l.b16 %v2045
      %v2094 = vunpack.c.l.b16 %v2046
      %v2095 = vunpack.c.l.b16 %v2047
      %v2096 = vunpack.c.l.b16 %v2048
      %v2097 = vunpack.c.l.b16 %v2049
      %v2098 = vunpack.c.l.b16 %v2050
      %v2099 = vunpack.c.l.b16 %v2051
      %v2100 = vunpack.c.l.b16 %v2052
      %v2101 = vunpack.c.l.b16 %v2053
      %v2102 = vunpack.c.l.b16 %v2054
      %v2103 = vunpack.c.l.b16 %v2055
      %v2104 = vunpack.c.l.b16 %v2056
      %v2105 = vpack.c.b16 %v2090, %v2089
      %v2106 = vpack.c.b16 %v2092, %v2091
      %v2107 = vpack.c.b16 %v2094, %v2093
      %v2108 = vpack.c.b16 %v2096, %v2095
      %v2109 = vpack.c.b16 %v2098, %v2097
      %v2110 = vpack.c.b16 %v2100, %v2099
      %v2111 = vpack.c.b16 %v2102, %v2101
      %v2112 = vpack.c.b16 %v2104, %v2103
      %2121 = vmatprep.subr.bf16.mxu0 0
      %2122 = vmatpush1.bf16.msra.mxu0 %v2112
      %2123 = vmatprep.subr.bf16.mxu0 0
      %2124 = vmatpush1.bf16.msra.mxu0 %v2111
      %2125 = vmatprep.subr.bf16.mxu0 0
      %2126 = vmatpush1.bf16.msra.mxu0 %v2110
      %2127 = vmatprep.subr.bf16.mxu0 0
      %2128 = vmatpush1.bf16.msra.mxu0 %v2109
      %2129 = vmatprep.subr.bf16.mxu0 0
      %2130 = vmatpush1.bf16.msra.mxu0 %v2108
      %2131 = vmatprep.subr.bf16.mxu0 0
      %2132 = vmatpush1.bf16.msra.mxu0 %v2107
      %2133 = vmatprep.subr.bf16.mxu0 0
      %2134 = vmatpush1.bf16.msra.mxu0 %v2106
      %2135 = vmatprep.subr.bf16.mxu0 0
      %2136 = vmatpush1.bf16.msra.mxu0 %v2105
      %2137 = vmatprep.subr.bf16.mxu0 0
      %2138 = vmatpush2.bf16.msra.mxu0 0
      %2139 = vmatprep.subr.bf16.mxu0 0
      %2140 = vmatpush2.bf16.msra.mxu0 0
      %2141 = vmatprep.subr.bf16.mxu0 0
      %2142 = vmatpush2.bf16.msra.mxu0 0
      %2143 = vmatprep.subr.bf16.mxu0 0
      %2144 = vmatpush2.bf16.msra.mxu0 0
      %2145 = vmatprep.subr.bf16.mxu0 0
      %2146 = vmatpush2.bf16.msra.mxu0 0
      %2147 = vmatprep.subr.bf16.mxu0 0
      %2148 = vmatpush2.bf16.msra.mxu0 0
      %2149 = vmatprep.subr.bf16.mxu0 0
      %2150 = vmatpush2.bf16.msra.mxu0 0
      %2151 = vmatprep.subr.bf16.mxu0 0
      %2152 = vmatpush2.bf16.msra.mxu0 0
      %2153 = vmatprep.mubr.bf16.mxu0 0
      %2154 = vmatmul.mubr.bf16.gmra.mxu0 %v2065
      %v2155 = vpop.f32.mrf.mxu0
      %v2156 = vadd.f32 0.0, %v2155
      %v2157 = vpop.f32.mrf.mxu0
      %v2158 = vpop.f32.mrf.mxu0
      %v2159 = vadd.f32 0.0, %v2158
      %v2160 = vpop.f32.mrf.mxu0
      %2161 = vmatprep.mubr.bf16.mxu0 0
      %2162 = vmatmul.mubr.bf16.gmra.mxu0 %v2066
      %v2163 = vpop.f32.mrf.mxu0
      %v2164 = vadd.f32 0.0, %v2163
      %v2165 = vpop.f32.mrf.mxu0
      %v2166 = vpop.f32.mrf.mxu0
      %v2167 = vadd.f32 0.0, %v2166
      %v2168 = vpop.f32.mrf.mxu0
      %2169 = vmatprep.mubr.bf16.mxu0 0
      %2170 = vmatmul.mubr.bf16.gmra.mxu0 %v2067
      %v2171 = vpop.f32.mrf.mxu0
      %v2172 = vadd.f32 0.0, %v2171
      %v2173 = vpop.f32.mrf.mxu0
      %v2174 = vpop.f32.mrf.mxu0
      %v2175 = vadd.f32 0.0, %v2174
      %v2176 = vpop.f32.mrf.mxu0
      %2177 = vmatprep.mubr.bf16.mxu0 0
      %2178 = vmatmul.mubr.bf16.gmra.mxu0 %v2068
      %v2179 = vpop.f32.mrf.mxu0
      %v2180 = vadd.f32 0.0, %v2179
      %v2181 = vpop.f32.mrf.mxu0
      %v2182 = vpop.f32.mrf.mxu0
      %v2183 = vadd.f32 0.0, %v2182
      %v2184 = vpop.f32.mrf.mxu0
      %2185 = vdwg.mxu0
      %v2186 = vadd.f32 %v1904, %v2156
      %v2187 = vadd.f32 %v1905, %v2159
      %v2188 = vadd.f32 %v1906, %v2164
      %v2189 = vadd.f32 %v1907, %v2167
      %v2190 = vadd.f32 %v1908, %v2172
      %v2191 = vadd.f32 %v1909, %v2175
      %v2192 = vadd.f32 %v1910, %v2180
      %v2193 = vadd.f32 %v1911, %v2183
      %v2194 = vld [vmem:[%s5] sm:$0x1]
      %v2196 = vlaneseq
      %v2197 = vshrl.u32 %v2196, 7
      %v2198 = vsub.s32 0, %v2197
      %v2199 = vrot.slane %v2194, %v2198
      %v2201 = vmul.f32 %v2186, %v2199
      %v2202 = vmul.f32 %v2187, %v2199
      %v2203 = vmul.f32 %v2188, %v2199
      %v2204 = vmul.f32 %v2189, %v2199
      %v2205 = vmul.f32 %v2190, %v2199
      %v2206 = vmul.f32 %v2191, %v2199
      %v2207 = vmul.f32 %v2192, %v2199
      %v2208 = vmul.f32 %v2193, %v2199
      %v2209 = vld [vmem:[%s6] sm:$0x1]
      %v2211 = vlaneseq
      %v2212 = vshrl.u32 %v2211, 7
      %v2213 = vsub.s32 0, %v2212
      %v2214 = vrot.slane %v2209, %v2213
      %v2216 = vadd.f32 %v2201, %v2214
      %v2217 = vadd.f32 %v2202, %v2214
      %v2218 = vadd.f32 %v2203, %v2214
      %v2219 = vadd.f32 %v2204, %v2214
      %v2220 = vadd.f32 %v2205, %v2214
      %v2221 = vadd.f32 %v2206, %v2214
      %v2222 = vadd.f32 %v2207, %v2214
      %v2223 = vadd.f32 %v2208, %v2214
      %v2224 = vmax.f32 %v2216, 0.0
      %v2225 = vmax.f32 %v2217, 0.0
      %v2226 = vmax.f32 %v2218, 0.0
      %v2227 = vmax.f32 %v2219, 0.0
      %v2228 = vmax.f32 %v2220, 0.0
      %v2229 = vmax.f32 %v2221, 0.0
      %v2230 = vmax.f32 %v2222, 0.0
      %v2231 = vmax.f32 %v2223, 0.0
      %v2232 = vpack.c.bf16 %v2224, %v2224
      %v2233 = vpack.c.bf16 %v2225, %v2225
      %v2234 = vpack.c.bf16 %v2226, %v2226
      %v2235 = vpack.c.bf16 %v2227, %v2227
      %v2236 = vpack.c.bf16 %v2228, %v2228
      %v2237 = vpack.c.bf16 %v2229, %v2229
      %v2238 = vpack.c.bf16 %v2230, %v2230
      %v2239 = vpack.c.bf16 %v2231, %v2231
      %2240 = vst [vmem:[%s338] sm:$0xf] %v2232
      %2241 = vst [vmem:[%s338 + $0x4] sm:$0xf] %v2233
      %2242 = vst [vmem:[%s338 + $0x8] sm:$0xf] %v2234
      %2243 = vst [vmem:[%s338 + $0xc] sm:$0xf] %v2235
      %2244 = vst [vmem:[%s338 + $0x10] sm:$0xf] %v2236
      %2245 = vst [vmem:[%s338 + $0x14] sm:$0xf] %v2237
      %2246 = vst [vmem:[%s338 + $0x18] sm:$0xf] %v2238
      %2247 = vst [vmem:[%s338 + $0x1c] sm:$0xf] %v2239
      %p2248 = scmp.lt.s32.totalorder %s18, 1
      %s2249 = scalar_select %p2248, %s18, 1
      %s2250 = smul.addr %s2249, 8
      %s2251 = smul.addr %s2250, 4
      %s2252 = scalar_lea.vmem %s7, %s2251
      // Predicated region
      $region49: #{basic_block_forward.2} parent=47 // pred_check
        %p2253 = pneg %p203
      $region50: #{basic_block_forward.2} parent=47 // pred_check_branch
        %2255 = sbr.rel (%p2253) target = $region52
      $region51: #{basic_block_forward.2} parent=47 // pred_region
        _
      $region52: #{basic_block_forward.2} parent=47 // pred_fallthru
        _
    $region48: #{basic_block_forward.2} parent=5 // pred_fallthru
      _
    %p2256 = scmp.le.s32.totalorder 2, %s13
    // Predicated region
    $region53: #{basic_block_forward.2} parent=5 // pred_check
      %p2257 = pneg %p2256
    $region54: #{basic_block_forward.2} parent=5 // pred_check_branch
      %2259 = sbr.rel (%p2257) target = $region56
    $region55: #{basic_block_forward.2} parent=5 // pred_region
      %s2260 = ssub.s32 %s13, 2
      // Predicated region
      $region57: #{basic_block_forward.2} parent=55 // pred_check
        %p2261 = pneg %p209
      $region58: #{basic_block_forward.2} parent=55 // pred_check_branch
        %2263 = sbr.rel (%p2261) target = $region60
      $region59: #{basic_block_forward.2} parent=55 // pred_region
        %p2264 = scmp.lt.s32.totalorder %s19, 1
        %s2265 = scalar_select %p2264, %s19, 1
        %s2266 = smul.addr %s2265, 8
        %s2267 = smul.addr %s2266, 4
        %s2268 = scalar_lea.vmem %s7, %s2267
      $region60: #{basic_block_forward.2} parent=55 // pred_fallthru
        _
    $region56: #{basic_block_forward.2} parent=5 // pred_fallthru
      _
  $region6: #{basic_block_forward.2} parent=0 // loop_footer
    %s17 = sadd.s32 1, %s13
  $region7: #{basic_block_forward.2} parent=0 // loop_footer_branch
    %12 = sbr.rel target = $region3
  $region8: #{basic_block_forward.2} parent=0 // loop_exit
    _

// kernel: basic_block_forward.3
$region0: #{basic_block_forward.3}
  #allocation0 [shape = 'u32[]', space=smem, size = 0x4, offset = 0x4, fixed_abs, tag = 'smem constant byte address 0x4 - core index']
  #allocation1 [shape = 'u32[144,128]{1,0:T(1,128)}', space=vmem, size = 0x12000, scoped, tag = 'internal scratch']
  %s0 = inlined_call_operand.vmem [shape: bf16[2,10,10,128], index: 0, kind: input, shape index: {}]
  %s1 = inlined_call_operand.vmem [shape: bf16[9,128,128], index: 1, kind: input, shape index: {}]
  %s2 = inlined_call_operand.vmem [shape: f32[1,128], index: 2, kind: input, shape index: {}]
  %s3 = inlined_call_operand.vmem [shape: f32[1,128], index: 3, kind: input, shape index: {}]
  %s4 = inlined_call_operand.vmem [shape: bf16[2,8,8,128], index: 4, kind: input, shape index: {}]
  %s5 = inlined_call_operand.vmem [shape: bf16[128,128], index: 5, kind: input, shape index: {}]
  %s6 = inlined_call_operand.vmem [shape: f32[1,128], index: 6, kind: input, shape index: {}]
  %s7 = inlined_call_operand.vmem [shape: f32[1,128], index: 7, kind: input, shape index: {}]
  %s8 = inlined_call_operand.vmem [shape: f32[2,8,8,128], index: 8, kind: output, shape index: {}]
  %s9 = sld [smem:[#allocation0]]
  $region65: #{basic_block_forward.3} parent=0
    _
  %s11 = ssub.s32 1, %s9
  %s12 = scalar_select 0, %s11, %s9
  loop: start=0, step=1, limit=4
  $region2: #{basic_block_forward.3} parent=0 // loop_pre_header
    _
  $region3: #{basic_block_forward.3} parent=0 // loop_header
    %s14 = sphi 0, %s18
    %p15 = scmp.ge.s32.totalorder %s14, 4
    %s24 = sphi 0, %s26
    %s27 = sphi 0, %s24
    %s28 = sphi 0, %s27
    %s44 = sphi 0, %s28
    %s48 = sphi 0, %s48
    %s50 = sphi 0, %s48
    %s51 = sphi 0, %s50
    %s65 = sphi 0, %s51
    %s69 = sphi 0, %s69
    %s71 = sphi 0, %s69
    %s72 = sphi 0, %s71
    %s86 = sphi 0, %s72
    %s90 = sphi 0, %s90
    %s92 = sphi 0, %s90
    %s93 = sphi 0, %s92
    %s107 = sphi 0, %s93
    %s113 = sphi 0, %s115
    %s116 = sphi 0, %s113
    %s117 = sphi 0, %s116
    %s133 = sphi 0, %s117
    %s137 = sphi 0, %s137
    %s139 = sphi 0, %s137
    %s140 = sphi 0, %s139
    %s154 = sphi 0, %s140
    %s158 = sphi 0, %s158
    %s160 = sphi 0, %s158
    %s161 = sphi 0, %s160
    %s175 = sphi 0, %s161
    %s179 = sphi 0, %s179
    %s181 = sphi 0, %s179
    %s182 = sphi 0, %s181
    %s196 = sphi 0, %s182
    %s202 = sphi 0, %s204
    %s205 = sphi 0, %s202
    %s206 = sphi 0, %s205
    %s222 = sphi 0, %s206
  $region4: #{basic_block_forward.3} parent=0 // loop_header_branch
    %17 = sbr.rel (%p15) target = $region8
  $region5: #{basic_block_forward.3} parent=0 // loop_body
    %s19 = ssub.s32 %s14, 1
    %s20 = ssub.s32 %s14, 2
    %s21 = sadd.s32 %s14, 1
    %s22 = ssub.s32 %s14, %s21
    %p23 = scmp.eq.s32.totalorder %s22, 0
    %s25 = sadd.s32 %s24, 1
    %s26 = scalar_select %p23, %s24, %s25
    %p29 = pneg %p23
    %p30 = scmp.eq.s32.totalorder %s14, 1
    %p31 = por %p29, %p30
    %p32 = scmp.ne.s32.totalorder %s24, %s27
    %p33 = scmp.eq.s32.totalorder %s14, 0
    %p34 = por %p32, %p33
    %p35 = scmp.ne.s32.totalorder %s24, %s27
    %p36 = scmp.eq.s32.totalorder %s19, 1
    %p37 = por %p35, %p36
    %p38 = scmp.ne.s32.totalorder %s27, %s28
    %p39 = scmp.eq.s32.totalorder %s19, 0
    %p40 = por %p38, %p39
    %p41 = scmp.ne.s32.totalorder %s27, %s28
    %p42 = scmp.eq.s32.totalorder %s20, 1
    %p43 = por %p41, %p42
    %p45 = scmp.ne.s32.totalorder %s28, %s44
    %p46 = scmp.eq.s32.totalorder %s20, 0
    %p47 = por %p45, %p46
    %s49 = sadd.s32 %s48, 1
    %p52 = scmp.eq.s32.totalorder %s14, 1
    %p53 = scmp.ne.s32.totalorder %s48, %s50
    %p54 = scmp.eq.s32.totalorder %s14, 0
    %p55 = por %p53, %p54
    %p56 = scmp.ne.s32.totalorder %s48, %s50
    %p57 = scmp.eq.s32.totalorder %s19, 1
    %p58 = por %p56, %p57
    %p59 = scmp.ne.s32.totalorder %s50, %s51
    %p60 = scmp.eq.s32.totalorder %s19, 0
    %p61 = por %p59, %p60
    %p62 = scmp.ne.s32.totalorder %s50, %s51
    %p63 = scmp.eq.s32.totalorder %s20, 1
    %p64 = por %p62, %p63
    %p66 = scmp.ne.s32.totalorder %s51, %s65
    %p67 = scmp.eq.s32.totalorder %s20, 0
    %p68 = por %p66, %p67
    %s70 = sadd.s32 %s69, 1
    %p73 = scmp.eq.s32.totalorder %s14, 1
    %p74 = scmp.ne.s32.totalorder %s69, %s71
    %p75 = scmp.eq.s32.totalorder %s14, 0
    %p76 = por %p74, %p75
    %p77 = scmp.ne.s32.totalorder %s69, %s71
    %p78 = scmp.eq.s32.totalorder %s19, 1
    %p79 = por %p77, %p78
    %p80 = scmp.ne.s32.totalorder %s71, %s72
    %p81 = scmp.eq.s32.totalorder %s19, 0
    %p82 = por %p80, %p81
    %p83 = scmp.ne.s32.totalorder %s71, %s72
    %p84 = scmp.eq.s32.totalorder %s20, 1
    %p85 = por %p83, %p84
    %p87 = scmp.ne.s32.totalorder %s72, %s86
    %p88 = scmp.eq.s32.totalorder %s20, 0
    %p89 = por %p87, %p88
    %s91 = sadd.s32 %s90, 1
    %p94 = scmp.eq.s32.totalorder %s14, 1
    %p95 = scmp.ne.s32.totalorder %s90, %s92
    %p96 = scmp.eq.s32.totalorder %s14, 0
    %p97 = por %p95, %p96
    %p98 = scmp.ne.s32.totalorder %s90, %s92
    %p99 = scmp.eq.s32.totalorder %s19, 1
    %p100 = por %p98, %p99
    %p101 = scmp.ne.s32.totalorder %s92, %s93
    %p102 = scmp.eq.s32.totalorder %s19, 0
    %p103 = por %p101, %p102
    %p104 = scmp.ne.s32.totalorder %s92, %s93
    %p105 = scmp.eq.s32.totalorder %s20, 1
    %p106 = por %p104, %p105
    %p108 = scmp.ne.s32.totalorder %s93, %s107
    %p109 = scmp.eq.s32.totalorder %s20, 0
    %p110 = por %p108, %p109
    %s111 = ssub.s32 %s14, %s21
    %p112 = scmp.eq.s32.totalorder %s111, 0
    %s114 = sadd.s32 %s113, 1
    %s115 = scalar_select %p112, %s113, %s114
    %p118 = pneg %p112
    %p119 = scmp.eq.s32.totalorder %s14, 1
    %p120 = por %p118, %p119
    %p121 = scmp.ne.s32.totalorder %s113, %s116
    %p122 = scmp.eq.s32.totalorder %s14, 0
    %p123 = por %p121, %p122
    %p124 = scmp.ne.s32.totalorder %s113, %s116
    %p125 = scmp.eq.s32.totalorder %s19, 1
    %p126 = por %p124, %p125
    %p127 = scmp.ne.s32.totalorder %s116, %s117
    %p128 = scmp.eq.s32.totalorder %s19, 0
    %p129 = por %p127, %p128
    %p130 = scmp.ne.s32.totalorder %s116, %s117
    %p131 = scmp.eq.s32.totalorder %s20, 1
    %p132 = por %p130, %p131
    %p134 = scmp.ne.s32.totalorder %s117, %s133
    %p135 = scmp.eq.s32.totalorder %s20, 0
    %p136 = por %p134, %p135
    %s138 = sadd.s32 %s137, 1
    %p141 = scmp.eq.s32.totalorder %s14, 1
    %p142 = scmp.ne.s32.totalorder %s137, %s139
    %p143 = scmp.eq.s32.totalorder %s14, 0
    %p144 = por %p142, %p143
    %p145 = scmp.ne.s32.totalorder %s137, %s139
    %p146 = scmp.eq.s32.totalorder %s19, 1
    %p147 = por %p145, %p146
    %p148 = scmp.ne.s32.totalorder %s139, %s140
    %p149 = scmp.eq.s32.totalorder %s19, 0
    %p150 = por %p148, %p149
    %p151 = scmp.ne.s32.totalorder %s139, %s140
    %p152 = scmp.eq.s32.totalorder %s20, 1
    %p153 = por %p151, %p152
    %p155 = scmp.ne.s32.totalorder %s140, %s154
    %p156 = scmp.eq.s32.totalorder %s20, 0
    %p157 = por %p155, %p156
    %s159 = sadd.s32 %s158, 1
    %p162 = scmp.eq.s32.totalorder %s14, 1
    %p163 = scmp.ne.s32.totalorder %s158, %s160
    %p164 = scmp.eq.s32.totalorder %s14, 0
    %p165 = por %p163, %p164
    %p166 = scmp.ne.s32.totalorder %s158, %s160
    %p167 = scmp.eq.s32.totalorder %s19, 1
    %p168 = por %p166, %p167
    %p169 = scmp.ne.s32.totalorder %s160, %s161
    %p170 = scmp.eq.s32.totalorder %s19, 0
    %p171 = por %p169, %p170
    %p172 = scmp.ne.s32.totalorder %s160, %s161
    %p173 = scmp.eq.s32.totalorder %s20, 1
    %p174 = por %p172, %p173
    %p176 = scmp.ne.s32.totalorder %s161, %s175
    %p177 = scmp.eq.s32.totalorder %s20, 0
    %p178 = por %p176, %p177
    %s180 = sadd.s32 %s179, 1
    %p183 = scmp.eq.s32.totalorder %s14, 1
    %p184 = scmp.ne.s32.totalorder %s179, %s181
    %p185 = scmp.eq.s32.totalorder %s14, 0
    %p186 = por %p184, %p185
    %p187 = scmp.ne.s32.totalorder %s179, %s181
    %p188 = scmp.eq.s32.totalorder %s19, 1
    %p189 = por %p187, %p188
    %p190 = scmp.ne.s32.totalorder %s181, %s182
    %p191 = scmp.eq.s32.totalorder %s19, 0
    %p192 = por %p190, %p191
    %p193 = scmp.ne.s32.totalorder %s181, %s182
    %p194 = scmp.eq.s32.totalorder %s20, 1
    %p195 = por %p193, %p194
    %p197 = scmp.ne.s32.totalorder %s182, %s196
    %p198 = scmp.eq.s32.totalorder %s20, 0
    %p199 = por %p197, %p198
    %s200 = ssub.s32 %s14, %s21
    %p201 = scmp.eq.s32.totalorder %s200, 0
    %s203 = sadd.s32 %s202, 1
    %s204 = scalar_select %p201, %s202, %s203
    %p207 = pneg %p201
    %p208 = scmp.eq.s32.totalorder %s14, 1
    %p209 = por %p207, %p208
    %p210 = scmp.ne.s32.totalorder %s202, %s205
    %p211 = scmp.eq.s32.totalorder %s14, 0
    %p212 = por %p210, %p211
    %p213 = scmp.ne.s32.totalorder %s202, %s205
    %p214 = scmp.eq.s32.totalorder %s19, 1
    %p215 = por %p213, %p214
    %p216 = scmp.ne.s32.totalorder %s205, %s206
    %p217 = scmp.eq.s32.totalorder %s19, 0
    %p218 = por %p216, %p217
    %p219 = scmp.ne.s32.totalorder %s205, %s206
    %p220 = scmp.eq.s32.totalorder %s20, 1
    %p221 = por %p219, %p220
    %p223 = scmp.ne.s32.totalorder %s206, %s222
    %p224 = scmp.eq.s32.totalorder %s20, 0
    %p225 = por %p223, %p224
    %p226 = scmp.le.s32.totalorder 1, %s14
    %p227 = scmp.lt.s32.totalorder %s14, 3
    %p228 = pnand %p226, %p227
    %p229 = pneg %p228
    // Predicated region
    $region9: #{basic_block_forward.3} parent=5 // pred_check
      _
    $region10: #{basic_block_forward.3} parent=5 // pred_check_branch
      %231 = sbr.rel (%p228) target = $region12
    $region11: #{basic_block_forward.3} parent=5 // pred_region
      %s232 = ssub.s32 %s14, 1
      // Predicated region
      $region13: #{basic_block_forward.3} parent=11 // pred_check
        %p233 = pneg %p61
      $region14: #{basic_block_forward.3} parent=11 // pred_check_branch
        %235 = sbr.rel (%p233) target = $region16
      $region15: #{basic_block_forward.3} parent=11 // pred_region
        _
      $region16: #{basic_block_forward.3} parent=11 // pred_fallthru
        _
      // Predicated region
      $region17: #{basic_block_forward.3} parent=11 // pred_check
        %p236 = pneg %p82
      $region18: #{basic_block_forward.3} parent=11 // pred_check_branch
        %238 = sbr.rel (%p236) target = $region20
      $region19: #{basic_block_forward.3} parent=11 // pred_region
        _
      $region20: #{basic_block_forward.3} parent=11 // pred_fallthru
        _
      // Predicated region
      $region21: #{basic_block_forward.3} parent=11 // pred_check
        %p239 = pneg %p103
      $region22: #{basic_block_forward.3} parent=11 // pred_check_branch
        %241 = sbr.rel (%p239) target = $region24
      $region23: #{basic_block_forward.3} parent=11 // pred_region
        _
      $region24: #{basic_block_forward.3} parent=11 // pred_fallthru
        _
      // Predicated region
      $region25: #{basic_block_forward.3} parent=11 // pred_check
        %p242 = pneg %p150
      $region26: #{basic_block_forward.3} parent=11 // pred_check_branch
        %244 = sbr.rel (%p242) target = $region28
      $region27: #{basic_block_forward.3} parent=11 // pred_region
        _
      $region28: #{basic_block_forward.3} parent=11 // pred_fallthru
        _
      // Predicated region
      $region29: #{basic_block_forward.3} parent=11 // pred_check
        %p245 = pneg %p171
      $region30: #{basic_block_forward.3} parent=11 // pred_check_branch
        %247 = sbr.rel (%p245) target = $region32
      $region31: #{basic_block_forward.3} parent=11 // pred_region
        _
      $region32: #{basic_block_forward.3} parent=11 // pred_fallthru
        _
      // Predicated region
      $region33: #{basic_block_forward.3} parent=11 // pred_check
        %p248 = pneg %p192
      $region34: #{basic_block_forward.3} parent=11 // pred_check_branch
        %250 = sbr.rel (%p248) target = $region36
      $region35: #{basic_block_forward.3} parent=11 // pred_region
        _
      $region36: #{basic_block_forward.3} parent=11 // pred_fallthru
        _
    $region12: #{basic_block_forward.3} parent=5 // pred_fallthru
      _
    %p251 = scmp.lt.s32.totalorder %s14, 2
    // Predicated region
    $region37: #{basic_block_forward.3} parent=5 // pred_check
      %p252 = pneg %p251
    $region38: #{basic_block_forward.3} parent=5 // pred_check_branch
      %254 = sbr.rel (%p252) target = $region40
    $region39: #{basic_block_forward.3} parent=5 // pred_region
      // Predicated region
      $region41: #{basic_block_forward.3} parent=39 // pred_check
        %p255 = pneg %p34
      $region42: #{basic_block_forward.3} parent=39 // pred_check_branch
        %257 = sbr.rel (%p255) target = $region44
      $region43: #{basic_block_forward.3} parent=39 // pred_region
        %p258 = scmp.lt.s32.totalorder %s14, 1
        %s259 = scalar_select %p258, %s14, 1
        %s260 = smul.addr %s259, 20
        %s261 = smul.addr %s260, 4
        %s262 = scalar_lea.vmem %s0, %s261
      $region44: #{basic_block_forward.3} parent=39 // pred_fallthru
        _
      // Predicated region
      $region45: #{basic_block_forward.3} parent=39 // pred_check
        %p263 = pneg %p123
      $region46: #{basic_block_forward.3} parent=39 // pred_check_branch
        %265 = sbr.rel (%p263) target = $region48
      $region47: #{basic_block_forward.3} parent=39 // pred_region
        %p266 = scmp.lt.s32.totalorder %s14, 1
        %s267 = scalar_select %p266, %s14, 1
        %s268 = smul.addr %s267, 8
        %s269 = smul.addr %s268, 4
        %s270 = scalar_lea.vmem %s4, %s269
      $region48: #{basic_block_forward.3} parent=39 // pred_fallthru
        _
    $region40: #{basic_block_forward.3} parent=5 // pred_fallthru
      _
    %p271 = scmp.le.s32.totalorder 1, %s14
    %p272 = scmp.lt.s32.totalorder %s14, 3
    %p273 = pnand %p271, %p272
    %p274 = pneg %p273
    // Predicated region
    $region49: #{basic_block_forward.3} parent=5 // pred_check
      _
    $region50: #{basic_block_forward.3} parent=5 // pred_check_branch
      %276 = sbr.rel (%p273) target = $region52
    $region51: #{basic_block_forward.3} parent=5 // pred_region
      %s277 = ssub.s32 %s14, 1
      %p278 = scmp.lt.s32.totalorder %s19, 1
      %s279 = scalar_select %p278, %s19, 1
      %s280 = smul.addr %s279, 20
      %s281 = smul.addr %s280, 4
      %s282 = scalar_lea.vmem %s0, %s281
      %p283 = pneg %p40
      %p284 = pneg %p37
      %p285 = pneg %p61
      %p286 = pneg %p58
      %p287 = pneg %p82
      %p288 = pneg %p79
      %p289 = pneg %p103
      %p290 = pneg %p100
      %p291 = scmp.lt.s32.totalorder %s19, 1
      %s292 = scalar_select %p291, %s19, 1
      %s293 = smul.addr %s292, 8
      %s294 = smul.addr %s293, 4
      %s295 = scalar_lea.vmem %s4, %s294
      %p296 = pneg %p129
      %p297 = pneg %p126
      %p298 = pneg %p150
      %p299 = pneg %p147
      %p300 = pneg %p171
      %p301 = pneg %p168
      %p302 = pneg %p192
      %p303 = pneg %p189
      %p304 = pneg %p218
      %p305 = pneg %p215
      %p306 = scmp.lt.s32.totalorder %s19, 1
      %s307 = scalar_select %p306, %s19, 1
      %s308 = smul.addr %s307, 8
      %s309 = smul.addr %s308, 8
      %s310 = scalar_lea.vmem %s8, %s309
      %p311 = scmp.lt.s32.totalorder %s19, 1
      %s312 = scalar_select %p311, %s19, 1
      %s313 = smul.addr %s312, 20
      %s314 = smul.addr %s313, 4
      %s315 = scalar_lea.vmem %s0, %s314
      %p316 = scmp.lt.s32.totalorder %s19, 1
      %s317 = scalar_select %p316, %s19, 1
      %s318 = smul.addr %s317, 8
      %s319 = smul.addr %s318, 4
      %s320 = scalar_lea.vmem %s4, %s319
      %p321 = scmp.lt.s32.totalorder %s19, 1
      %s322 = scalar_select %p321, %s19, 1
      %s323 = smul.addr %s322, 8
      %s324 = smul.addr %s323, 8
      %s325 = scalar_lea.vmem %s8, %s324
      %v327 = vld [vmem:[%s315] sm:$0xf]
      %v328 = vld [vmem:[%s315 + $0x8] sm:$0xf]
      %v329 = vld [vmem:[%s315 + $0x10] sm:$0xf]
      %v330 = vld [vmem:[%s315 + $0x18] sm:$0xf]
      %v331 = vld [vmem:[%s315 + $0x20] sm:$0xf]
      %v332 = vld [vmem:[%s315 + $0x28] sm:$0xf]
      %v333 = vld [vmem:[%s315 + $0x30] sm:$0xf]
      %v334 = vld [vmem:[%s315 + $0x38] sm:$0xf]
      %v335 = vld [vmem:[%s1] sm:$0xf]
      %v336 = vld [vmem:[%s1 + $0x4] sm:$0xf]
      %v337 = vld [vmem:[%s1 + $0x8] sm:$0xf]
      %v338 = vld [vmem:[%s1 + $0xc] sm:$0xf]
      %v339 = vld [vmem:[%s1 + $0x10] sm:$0xf]
      %v340 = vld [vmem:[%s1 + $0x14] sm:$0xf]
      %v341 = vld [vmem:[%s1 + $0x18] sm:$0xf]
      %v342 = vld [vmem:[%s1 + $0x1c] sm:$0xf]
      %v343 = vld [vmem:[%s1 + $0x20] sm:$0xf]
      %v344 = vld [vmem:[%s1 + $0x24] sm:$0xf]
      %v345 = vld [vmem:[%s1 + $0x28] sm:$0xf]
      %v346 = vld [vmem:[%s1 + $0x2c] sm:$0xf]
      %v347 = vld [vmem:[%s1 + $0x30] sm:$0xf]
      %v348 = vld [vmem:[%s1 + $0x34] sm:$0xf]
      %v349 = vld [vmem:[%s1 + $0x38] sm:$0xf]
      %v350 = vld [vmem:[%s1 + $0x3c] sm:$0xf]
      %v351 = vld [vmem:[%s315 + $0x4] sm:$0x1]
      %v352 = vld [vmem:[%s315 + $0xc] sm:$0x1]
      %v353 = vld [vmem:[%s315 + $0x14] sm:$0x1]
      %v354 = vld [vmem:[%s315 + $0x1c] sm:$0x1]
      %v355 = vld [vmem:[%s315 + $0x24] sm:$0x1]
      %v356 = vld [vmem:[%s315 + $0x2c] sm:$0x1]
      %v357 = vld [vmem:[%s315 + $0x34] sm:$0x1]
      %v358 = vld [vmem:[%s315 + $0x3c] sm:$0x1]
      %vm359 = vsmask.f32 3328
      %vm360 = vsmask.f32 7440
      %vm361 = vmor %vm359, %vm360
      %v363 = vshrl.u32 %v327, 16
      %v365 = vrot.slane %v363, 4
      %v366 = vshll.u32 %v327, 16
      %v368 = vrot.slane %v366, 5
      %v369 = vor.u32 %v365, %v368
      %v370 = vrot.slane %v369, 4
      %v372 = vshll.u32 %v351, 16
      %v374 = vrot.slane %v372, 5
      %v375 = vsel %vm361, %v370, %v374
      %v377 = vshrl.u32 %v328, 16
      %v379 = vrot.slane %v377, 4
      %v380 = vshll.u32 %v328, 16
      %v382 = vrot.slane %v380, 5
      %v383 = vor.u32 %v379, %v382
      %v384 = vrot.slane %v383, 4
      %v386 = vshll.u32 %v352, 16
      %v388 = vrot.slane %v386, 5
      %v389 = vsel %vm361, %v384, %v388
      %v391 = vshrl.u32 %v329, 16
      %v393 = vrot.slane %v391, 4
      %v394 = vshll.u32 %v329, 16
      %v396 = vrot.slane %v394, 5
      %v397 = vor.u32 %v393, %v396
      %v398 = vrot.slane %v397, 4
      %v400 = vshll.u32 %v353, 16
      %v402 = vrot.slane %v400, 5
      %v403 = vsel %vm361, %v398, %v402
      %v405 = vshrl.u32 %v330, 16
      %v407 = vrot.slane %v405, 4
      %v408 = vshll.u32 %v330, 16
      %v410 = vrot.slane %v408, 5
      %v411 = vor.u32 %v407, %v410
      %v412 = vrot.slane %v411, 4
      %v414 = vshll.u32 %v354, 16
      %v416 = vrot.slane %v414, 5
      %v417 = vsel %vm361, %v412, %v416
      %v419 = vshrl.u32 %v331, 16
      %v421 = vrot.slane %v419, 4
      %v422 = vshll.u32 %v331, 16
      %v424 = vrot.slane %v422, 5
      %v425 = vor.u32 %v421, %v424
      %v426 = vrot.slane %v425, 4
      %v428 = vshll.u32 %v355, 16
      %v430 = vrot.slane %v428, 5
      %v431 = vsel %vm361, %v426, %v430
      %v433 = vshrl.u32 %v332, 16
      %v435 = vrot.slane %v433, 4
      %v436 = vshll.u32 %v332, 16
      %v438 = vrot.slane %v436, 5
      %v439 = vor.u32 %v435, %v438
      %v440 = vrot.slane %v439, 4
      %v442 = vshll.u32 %v356, 16
      %v444 = vrot.slane %v442, 5
      %v445 = vsel %vm361, %v440, %v444
      %v447 = vshrl.u32 %v333, 16
      %v449 = vrot.slane %v447, 4
      %v450 = vshll.u32 %v333, 16
      %v452 = vrot.slane %v450, 5
      %v453 = vor.u32 %v449, %v452
      %v454 = vrot.slane %v453, 4
      %v456 = vshll.u32 %v357, 16
      %v458 = vrot.slane %v456, 5
      %v459 = vsel %vm361, %v454, %v458
      %v461 = vshrl.u32 %v334, 16
      %v463 = vrot.slane %v461, 4
      %v464 = vshll.u32 %v334, 16
      %v466 = vrot.slane %v464, 5
      %v467 = vor.u32 %v463, %v466
      %v468 = vrot.slane %v467, 4
      %v470 = vshll.u32 %v358, 16
      %v472 = vrot.slane %v470, 5
      %v473 = vsel %vm361, %v468, %v472
      %s474 = scalar_lea.vmem %s1, 64
      %v475 = vld [vmem:[%s474] sm:$0xf]
      %v476 = vld [vmem:[%s474 + $0x4] sm:$0xf]
      %v477 = vld [vmem:[%s474 + $0x8] sm:$0xf]
      %v478 = vld [vmem:[%s474 + $0xc] sm:$0xf]
      %v479 = vld [vmem:[%s474 + $0x10] sm:$0xf]
      %v480 = vld [vmem:[%s474 + $0x14] sm:$0xf]
      %v481 = vld [vmem:[%s474 + $0x18] sm:$0xf]
      %v482 = vld [vmem:[%s474 + $0x1c] sm:$0xf]
      %v483 = vld [vmem:[%s474 + $0x20] sm:$0xf]
      %v484 = vld [vmem:[%s474 + $0x24] sm:$0xf]
      %v485 = vld [vmem:[%s474 + $0x28] sm:$0xf]
      %v486 = vld [vmem:[%s474 + $0x2c] sm:$0xf]
      %v487 = vld [vmem:[%s474 + $0x30] sm:$0xf]
      %v488 = vld [vmem:[%s474 + $0x34] sm:$0xf]
      %v489 = vld [vmem:[%s474 + $0x38] sm:$0xf]
      %v490 = vld [vmem:[%s474 + $0x3c] sm:$0xf]
      %v491 = vunpack.c.l.b16 %v375
      %v492 = vunpack.c.l.b16 %v389
      %v493 = vunpack.c.l.b16 %v403
      %v494 = vunpack.c.l.b16 %v417
      %v495 = vunpack.c.l.b16 %v431
      %v496 = vunpack.c.l.b16 %v445
      %v497 = vunpack.c.l.b16 %v459
      %v498 = vunpack.c.l.b16 %v473
      %v499 = vpack.c.b16 %v492, %v491
      %v500 = vpack.c.b16 %v494, %v493
      %v501 = vpack.c.b16 %v496, %v495
      %v502 = vpack.c.b16 %v498, %v497
      %v523 = vunpack.c.l.b16 %v475
      %v524 = vunpack.c.l.b16 %v476
      %v525 = vunpack.c.l.b16 %v477
      %v526 = vunpack.c.l.b16 %v478
      %v527 = vunpack.c.l.b16 %v479
      %v528 = vunpack.c.l.b16 %v480
      %v529 = vunpack.c.l.b16 %v481
      %v530 = vunpack.c.l.b16 %v482
      %v531 = vunpack.c.l.b16 %v483
      %v532 = vunpack.c.l.b16 %v484
      %v533 = vunpack.c.l.b16 %v485
      %v534 = vunpack.c.l.b16 %v486
      %v535 = vunpack.c.l.b16 %v487
      %v536 = vunpack.c.l.b16 %v488
      %v537 = vunpack.c.l.b16 %v489
      %v538 = vunpack.c.l.b16 %v490
      %v539 = vpack.c.b16 %v524, %v523
      %v540 = vpack.c.b16 %v526, %v525
      %v541 = vpack.c.b16 %v528, %v527
      %v542 = vpack.c.b16 %v530, %v529
      %v543 = vpack.c.b16 %v532, %v531
      %v544 = vpack.c.b16 %v534, %v533
      %v545 = vpack.c.b16 %v536, %v535
      %v546 = vpack.c.b16 %v538, %v537
      %555 = vmatprep.subr.bf16.mxu0 0
      %556 = vmatpush1.bf16.msra.mxu0 %v546
      %557 = vmatprep.subr.bf16.mxu0 0
      %558 = vmatpush1.bf16.msra.mxu0 %v545
      %559 = vmatprep.subr.bf16.mxu0 0
      %560 = vmatpush1.bf16.msra.mxu0 %v544
      %561 = vmatprep.subr.bf16.mxu0 0
      %562 = vmatpush1.bf16.msra.mxu0 %v543
      %563 = vmatprep.subr.bf16.mxu0 0
      %564 = vmatpush1.bf16.msra.mxu0 %v542
      %565 = vmatprep.subr.bf16.mxu0 0
      %566 = vmatpush1.bf16.msra.mxu0 %v541
      %567 = vmatprep.subr.bf16.mxu0 0
      %568 = vmatpush1.bf16.msra.mxu0 %v540
      %569 = vmatprep.subr.bf16.mxu0 0
      %570 = vmatpush1.bf16.msra.mxu0 %v539
      %571 = vmatprep.subr.bf16.mxu0 0
      %572 = vmatpush2.bf16.msra.mxu0 0
      %573 = vmatprep.subr.bf16.mxu0 0
      %574 = vmatpush2.bf16.msra.mxu0 0
      %575 = vmatprep.subr.bf16.mxu0 0
      %576 = vmatpush2.bf16.msra.mxu0 0
      %577 = vmatprep.subr.bf16.mxu0 0
      %578 = vmatpush2.bf16.msra.mxu0 0
      %579 = vmatprep.subr.bf16.mxu0 0
      %580 = vmatpush2.bf16.msra.mxu0 0
      %581 = vmatprep.subr.bf16.mxu0 0
      %582 = vmatpush2.bf16.msra.mxu0 0
      %583 = vmatprep.subr.bf16.mxu0 0
      %584 = vmatpush2.bf16.msra.mxu0 0
      %585 = vmatprep.subr.bf16.mxu0 0
      %586 = vmatpush2.bf16.msra.mxu0 0
      %587 = vmatprep.mubr.bf16.mxu0 0
      %588 = vmatmul.mubr.bf16.gmra.mxu0 %v499
      %v589 = vpop.f32.mrf.mxu0
      %v590 = vadd.f32 0.0, %v589
      %v591 = vpop.f32.mrf.mxu0
      %v592 = vpop.f32.mrf.mxu0
      %v593 = vadd.f32 0.0, %v592
      %v594 = vpop.f32.mrf.mxu0
      %595 = vmatprep.mubr.bf16.mxu0 0
      %596 = vmatmul.mubr.bf16.gmra.mxu0 %v500
      %v597 = vpop.f32.mrf.mxu0
      %v598 = vadd.f32 0.0, %v597
      %v599 = vpop.f32.mrf.mxu0
      %v600 = vpop.f32.mrf.mxu0
      %v601 = vadd.f32 0.0, %v600
      %v602 = vpop.f32.mrf.mxu0
      %603 = vmatprep.mubr.bf16.mxu0 0
      %604 = vmatmul.mubr.bf16.gmra.mxu0 %v501
      %v605 = vpop.f32.mrf.mxu0
      %v606 = vadd.f32 0.0, %v605
      %v607 = vpop.f32.mrf.mxu0
      %v608 = vpop.f32.mrf.mxu0
      %v609 = vadd.f32 0.0, %v608
      %v610 = vpop.f32.mrf.mxu0
      %611 = vmatprep.mubr.bf16.mxu0 0
      %612 = vmatmul.mubr.bf16.gmra.mxu0 %v502
      %v613 = vpop.f32.mrf.mxu0
      %v614 = vadd.f32 0.0, %v613
      %v615 = vpop.f32.mrf.mxu0
      %v616 = vpop.f32.mrf.mxu0
      %v617 = vadd.f32 0.0, %v616
      %v618 = vpop.f32.mrf.mxu0
      %619 = vdwg.mxu0
      %v628 = vunpack.c.l.b16 %v327
      %v629 = vunpack.c.l.b16 %v328
      %v630 = vunpack.c.l.b16 %v329
      %v631 = vunpack.c.l.b16 %v330
      %v632 = vunpack.c.l.b16 %v331
      %v633 = vunpack.c.l.b16 %v332
      %v634 = vunpack.c.l.b16 %v333
      %v635 = vunpack.c.l.b16 %v334
      %v636 = vpack.c.b16 %v629, %v628
      %v637 = vpack.c.b16 %v631, %v630
      %v638 = vpack.c.b16 %v633, %v632
      %v639 = vpack.c.b16 %v635, %v634
      %v660 = vunpack.c.l.b16 %v335
      %v661 = vunpack.c.l.b16 %v336
      %v662 = vunpack.c.l.b16 %v337
      %v663 = vunpack.c.l.b16 %v338
      %v664 = vunpack.c.l.b16 %v339
      %v665 = vunpack.c.l.b16 %v340
      %v666 = vunpack.c.l.b16 %v341
      %v667 = vunpack.c.l.b16 %v342
      %v668 = vunpack.c.l.b16 %v343
      %v669 = vunpack.c.l.b16 %v344
      %v670 = vunpack.c.l.b16 %v345
      %v671 = vunpack.c.l.b16 %v346
      %v672 = vunpack.c.l.b16 %v347
      %v673 = vunpack.c.l.b16 %v348
      %v674 = vunpack.c.l.b16 %v349
      %v675 = vunpack.c.l.b16 %v350
      %v676 = vpack.c.b16 %v661, %v660
      %v677 = vpack.c.b16 %v663, %v662
      %v678 = vpack.c.b16 %v665, %v664
      %v679 = vpack.c.b16 %v667, %v666
      %v680 = vpack.c.b16 %v669, %v668
      %v681 = vpack.c.b16 %v671, %v670
      %v682 = vpack.c.b16 %v673, %v672
      %v683 = vpack.c.b16 %v675, %v674
      %692 = vmatprep.subr.bf16.mxu0 0
      %693 = vmatpush1.bf16.msra.mxu0 %v683
      %694 = vmatprep.subr.bf16.mxu0 0
      %695 = vmatpush1.bf16.msra.mxu0 %v682
      %696 = vmatprep.subr.bf16.mxu0 0
      %697 = vmatpush1.bf16.msra.mxu0 %v681
      %698 = vmatprep.subr.bf16.mxu0 0
      %699 = vmatpush1.bf16.msra.mxu0 %v680
      %700 = vmatprep.subr.bf16.mxu0 0
      %701 = vmatpush1.bf16.msra.mxu0 %v679
      %702 = vmatprep.subr.bf16.mxu0 0
      %703 = vmatpush1.bf16.msra.mxu0 %v678
      %704 = vmatprep.subr.bf16.mxu0 0
      %705 = vmatpush1.bf16.msra.mxu0 %v677
      %706 = vmatprep.subr.bf16.mxu0 0
      %707 = vmatpush1.bf16.msra.mxu0 %v676
      %708 = vmatprep.subr.bf16.mxu0 0
      %709 = vmatpush2.bf16.msra.mxu0 0
      %710 = vmatprep.subr.bf16.mxu0 0
      %711 = vmatpush2.bf16.msra.mxu0 0
      %712 = vmatprep.subr.bf16.mxu0 0
      %713 = vmatpush2.bf16.msra.mxu0 0
      %714 = vmatprep.subr.bf16.mxu0 0
      %715 = vmatpush2.bf16.msra.mxu0 0
      %716 = vmatprep.subr.bf16.mxu0 0
      %717 = vmatpush2.bf16.msra.mxu0 0
      %718 = vmatprep.subr.bf16.mxu0 0
      %719 = vmatpush2.bf16.msra.mxu0 0
      %720 = vmatprep.subr.bf16.mxu0 0
      %721 = vmatpush2.bf16.msra.mxu0 0
      %722 = vmatprep.subr.bf16.mxu0 0
      %723 = vmatpush2.bf16.msra.mxu0 0
      %724 = vmatprep.mubr.bf16.mxu0 0
      %725 = vmatmul.mubr.bf16.gmra.mxu0 %v636
      %v726 = vpop.f32.mrf.mxu0
      %v727 = vadd.f32 %v590, %v726
      %v728 = vpop.f32.mrf.mxu0
      %v729 = vpop.f32.mrf.mxu0
      %v730 = vadd.f32 %v593, %v729
      %v731 = vpop.f32.mrf.mxu0
      %732 = vmatprep.mubr.bf16.mxu0 0
      %733 = vmatmul.mubr.bf16.gmra.mxu0 %v637
      %v734 = vpop.f32.mrf.mxu0
      %v735 = vadd.f32 %v598, %v734
      %v736 = vpop.f32.mrf.mxu0
      %v737 = vpop.f32.mrf.mxu0
      %v738 = vadd.f32 %v601, %v737
      %v739 = vpop.f32.mrf.mxu0
      %740 = vmatprep.mubr.bf16.mxu0 0
      %741 = vmatmul.mubr.bf16.gmra.mxu0 %v638
      %v742 = vpop.f32.mrf.mxu0
      %v743 = vadd.f32 %v606, %v742
      %v744 = vpop.f32.mrf.mxu0
      %v745 = vpop.f32.mrf.mxu0
      %v746 = vadd.f32 %v609, %v745
      %v747 = vpop.f32.mrf.mxu0
      %748 = vmatprep.mubr.bf16.mxu0 0
      %749 = vmatmul.mubr.bf16.gmra.mxu0 %v639
      %v750 = vpop.f32.mrf.mxu0
      %v751 = vadd.f32 %v614, %v750
      %v752 = vpop.f32.mrf.mxu0
      %v753 = vpop.f32.mrf.mxu0
      %v754 = vadd.f32 %v617, %v753
      %v755 = vpop.f32.mrf.mxu0
      %756 = vdwg.mxu0
      %v757 = vld [vmem:[%s315] sm:$0xe]
      %v758 = vld [vmem:[%s315 + $0x8] sm:$0xe]
      %v759 = vld [vmem:[%s315 + $0x10] sm:$0xe]
      %v760 = vld [vmem:[%s315 + $0x18] sm:$0xe]
      %v761 = vld [vmem:[%s315 + $0x20] sm:$0xe]
      %v762 = vld [vmem:[%s315 + $0x28] sm:$0xe]
      %v763 = vld [vmem:[%s315 + $0x30] sm:$0xe]
      %v764 = vld [vmem:[%s315 + $0x38] sm:$0xe]
      %vm781 = vcmask 1042432
      %vm782 = vcmask 1046532
      %vm783 = vmor %vm781, %vm782
      %v784 = vrot.slane %v757, 5
      %v785 = vrot.slane %v784, 4
      %v786 = vrot.slane %v351, 5
      %v787 = vsel %vm783, %v785, %v786
      %v788 = vrot.slane %v758, 5
      %v789 = vrot.slane %v788, 4
      %v790 = vrot.slane %v352, 5
      %v791 = vsel %vm783, %v789, %v790
      %v792 = vrot.slane %v759, 5
      %v793 = vrot.slane %v792, 4
      %v794 = vrot.slane %v353, 5
      %v795 = vsel %vm783, %v793, %v794
      %v796 = vrot.slane %v760, 5
      %v797 = vrot.slane %v796, 4
      %v798 = vrot.slane %v354, 5
      %v799 = vsel %vm783, %v797, %v798
      %v800 = vrot.slane %v761, 5
      %v801 = vrot.slane %v800, 4
      %v802 = vrot.slane %v355, 5
      %v803 = vsel %vm783, %v801, %v802
      %v804 = vrot.slane %v762, 5
      %v805 = vrot.slane %v804, 4
      %v806 = vrot.slane %v356, 5
      %v807 = vsel %vm783, %v805, %v806
      %v808 = vrot.slane %v763, 5
      %v809 = vrot.slane %v808, 4
      %v810 = vrot.slane %v357, 5
      %v811 = vsel %vm783, %v809, %v810
      %v812 = vrot.slane %v764, 5
      %v813 = vrot.slane %v812, 4
      %v814 = vrot.slane %v358, 5
      %v815 = vsel %vm783, %v813, %v814
      %s816 = scalar_lea.vmem %s1, 128
      %v817 = vld [vmem:[%s816] sm:$0xf]
      %v818 = vld [vmem:[%s816 + $0x4] sm:$0xf]
      %v819 = vld [vmem:[%s816 + $0x8] sm:$0xf]
      %v820 = vld [vmem:[%s816 + $0xc] sm:$0xf]
      %v821 = vld [vmem:[%s816 + $0x10] sm:$0xf]
      %v822 = vld [vmem:[%s816 + $0x14] sm:$0xf]
      %v823 = vld [vmem:[%s816 + $0x18] sm:$0xf]
      %v824 = vld [vmem:[%s816 + $0x1c] sm:$0xf]
      %v825 = vld [vmem:[%s816 + $0x20] sm:$0xf]
      %v826 = vld [vmem:[%s816 + $0x24] sm:$0xf]
      %v827 = vld [vmem:[%s816 + $0x28] sm:$0xf]
      %v828 = vld [vmem:[%s816 + $0x2c] sm:$0xf]
      %v829 = vld [vmem:[%s816 + $0x30] sm:$0xf]
      %v830 = vld [vmem:[%s816 + $0x34] sm:$0xf]
      %v831 = vld [vmem:[%s816 + $0x38] sm:$0xf]
      %v832 = vld [vmem:[%s816 + $0x3c] sm:$0xf]
      %v833 = vunpack.c.l.b16 %v787
      %v834 = vunpack.c.l.b16 %v791
      %v835 = vunpack.c.l.b16 %v795
      %v836 = vunpack.c.l.b16 %v799
      %v837 = vunpack.c.l.b16 %v803
      %v838 = vunpack.c.l.b16 %v807
      %v839 = vunpack.c.l.b16 %v811
      %v840 = vunpack.c.l.b16 %v815
      %v841 = vpack.c.b16 %v834, %v833
      %v842 = vpack.c.b16 %v836, %v835
      %v843 = vpack.c.b16 %v838, %v837
      %v844 = vpack.c.b16 %v840, %v839
      %v865 = vunpack.c.l.b16 %v817
      %v866 = vunpack.c.l.b16 %v818
      %v867 = vunpack.c.l.b16 %v819
      %v868 = vunpack.c.l.b16 %v820
      %v869 = vunpack.c.l.b16 %v821
      %v870 = vunpack.c.l.b16 %v822
      %v871 = vunpack.c.l.b16 %v823
      %v872 = vunpack.c.l.b16 %v824
      %v873 = vunpack.c.l.b16 %v825
      %v874 = vunpack.c.l.b16 %v826
      %v875 = vunpack.c.l.b16 %v827
      %v876 = vunpack.c.l.b16 %v828
      %v877 = vunpack.c.l.b16 %v829
      %v878 = vunpack.c.l.b16 %v830
      %v879 = vunpack.c.l.b16 %v831
      %v880 = vunpack.c.l.b16 %v832
      %v881 = vpack.c.b16 %v866, %v865
      %v882 = vpack.c.b16 %v868, %v867
      %v883 = vpack.c.b16 %v870, %v869
      %v884 = vpack.c.b16 %v872, %v871
      %v885 = vpack.c.b16 %v874, %v873
      %v886 = vpack.c.b16 %v876, %v875
      %v887 = vpack.c.b16 %v878, %v877
      %v888 = vpack.c.b16 %v880, %v879
      %897 = vmatprep.subr.bf16.mxu0 0
      %898 = vmatpush1.bf16.msra.mxu0 %v888
      %899 = vmatprep.subr.bf16.mxu0 0
      %900 = vmatpush1.bf16.msra.mxu0 %v887
      %901 = vmatprep.subr.bf16.mxu0 0
      %902 = vmatpush1.bf16.msra.mxu0 %v886
      %903 = vmatprep.subr.bf16.mxu0 0
      %904 = vmatpush1.bf16.msra.mxu0 %v885
      %905 = vmatprep.subr.bf16.mxu0 0
      %906 = vmatpush1.bf16.msra.mxu0 %v884
      %907 = vmatprep.subr.bf16.mxu0 0
      %908 = vmatpush1.bf16.msra.mxu0 %v883
      %909 = vmatprep.subr.bf16.mxu0 0
      %910 = vmatpush1.bf16.msra.mxu0 %v882
      %911 = vmatprep.subr.bf16.mxu0 0
      %912 = vmatpush1.bf16.msra.mxu0 %v881
      %913 = vmatprep.subr.bf16.mxu0 0
      %914 = vmatpush2.bf16.msra.mxu0 0
      %915 = vmatprep.subr.bf16.mxu0 0
      %916 = vmatpush2.bf16.msra.mxu0 0
      %917 = vmatprep.subr.bf16.mxu0 0
      %918 = vmatpush2.bf16.msra.mxu0 0
      %919 = vmatprep.subr.bf16.mxu0 0
      %920 = vmatpush2.bf16.msra.mxu0 0
      %921 = vmatprep.subr.bf16.mxu0 0
      %922 = vmatpush2.bf16.msra.mxu0 0
      %923 = vmatprep.subr.bf16.mxu0 0
      %924 = vmatpush2.bf16.msra.mxu0 0
      %925 = vmatprep.subr.bf16.mxu0 0
      %926 = vmatpush2.bf16.msra.mxu0 0
      %927 = vmatprep.subr.bf16.mxu0 0
      %928 = vmatpush2.bf16.msra.mxu0 0
      %929 = vmatprep.mubr.bf16.mxu0 0
      %930 = vmatmul.mubr.bf16.gmra.mxu0 %v841
      %v931 = vpop.f32.mrf.mxu0
      %v932 = vadd.f32 0.0, %v931
      %v933 = vpop.f32.mrf.mxu0
      %v934 = vpop.f32.mrf.mxu0
      %v935 = vadd.f32 0.0, %v934
      %v936 = vpop.f32.mrf.mxu0
      %937 = vmatprep.mubr.bf16.mxu0 0
      %938 = vmatmul.mubr.bf16.gmra.mxu0 %v842
      %v939 = vpop.f32.mrf.mxu0
      %v940 = vadd.f32 0.0, %v939
      %v941 = vpop.f32.mrf.mxu0
      %v942 = vpop.f32.mrf.mxu0
      %v943 = vadd.f32 0.0, %v942
      %v944 = vpop.f32.mrf.mxu0
      %945 = vmatprep.mubr.bf16.mxu0 0
      %946 = vmatmul.mubr.bf16.gmra.mxu0 %v843
      %v947 = vpop.f32.mrf.mxu0
      %v948 = vadd.f32 0.0, %v947
      %v949 = vpop.f32.mrf.mxu0
      %v950 = vpop.f32.mrf.mxu0
      %v951 = vadd.f32 0.0, %v950
      %v952 = vpop.f32.mrf.mxu0
      %953 = vmatprep.mubr.bf16.mxu0 0
      %954 = vmatmul.mubr.bf16.gmra.mxu0 %v844
      %v955 = vpop.f32.mrf.mxu0
      %v956 = vadd.f32 0.0, %v955
      %v957 = vpop.f32.mrf.mxu0
      %v958 = vpop.f32.mrf.mxu0
      %v959 = vadd.f32 0.0, %v958
      %v960 = vpop.f32.mrf.mxu0
      %961 = vdwg.mxu0
      %v962 = vadd.f32 %v727, %v932
      %v963 = vadd.f32 %v730, %v935
      %v964 = vadd.f32 %v735, %v940
      %v965 = vadd.f32 %v738, %v943
      %v966 = vadd.f32 %v743, %v948
      %v967 = vadd.f32 %v746, %v951
      %v968 = vadd.f32 %v751, %v956
      %v969 = vadd.f32 %v754, %v959
      %s970 = scalar_lea.vmem %s315, 8
      %v971 = vld [vmem:[%s970] sm:$0xf]
      %v972 = vld [vmem:[%s970 + $0x8] sm:$0xf]
      %v973 = vld [vmem:[%s970 + $0x10] sm:$0xf]
      %v974 = vld [vmem:[%s970 + $0x18] sm:$0xf]
      %v975 = vld [vmem:[%s970 + $0x20] sm:$0xf]
      %v976 = vld [vmem:[%s970 + $0x28] sm:$0xf]
      %v977 = vld [vmem:[%s970 + $0x30] sm:$0xf]
      %v978 = vld [vmem:[%s970 + $0x38] sm:$0xf]
      %s979 = scalar_lea.vmem %s1, 192
      %v980 = vld [vmem:[%s979] sm:$0xf]
      %v981 = vld [vmem:[%s979 + $0x4] sm:$0xf]
      %v982 = vld [vmem:[%s979 + $0x8] sm:$0xf]
      %v983 = vld [vmem:[%s979 + $0xc] sm:$0xf]
      %v984 = vld [vmem:[%s979 + $0x10] sm:$0xf]
      %v985 = vld [vmem:[%s979 + $0x14] sm:$0xf]
      %v986 = vld [vmem:[%s979 + $0x18] sm:$0xf]
      %v987 = vld [vmem:[%s979 + $0x1c] sm:$0xf]
      %v988 = vld [vmem:[%s979 + $0x20] sm:$0xf]
      %v989 = vld [vmem:[%s979 + $0x24] sm:$0xf]
      %v990 = vld [vmem:[%s979 + $0x28] sm:$0xf]
      %v991 = vld [vmem:[%s979 + $0x2c] sm:$0xf]
      %v992 = vld [vmem:[%s979 + $0x30] sm:$0xf]
      %v993 = vld [vmem:[%s979 + $0x34] sm:$0xf]
      %v994 = vld [vmem:[%s979 + $0x38] sm:$0xf]
      %v995 = vld [vmem:[%s979 + $0x3c] sm:$0xf]
      %v1004 = vunpack.c.l.b16 %v971
      %v1005 = vunpack.c.l.b16 %v972
      %v1006 = vunpack.c.l.b16 %v973
      %v1007 = vunpack.c.l.b16 %v974
      %v1008 = vunpack.c.l.b16 %v975
      %v1009 = vunpack.c.l.b16 %v976
      %v1010 = vunpack.c.l.b16 %v977
      %v1011 = vunpack.c.l.b16 %v978
      %v1012 = vpack.c.b16 %v1005, %v1004
      %v1013 = vpack.c.b16 %v1007, %v1006
      %v1014 = vpack.c.b16 %v1009, %v1008
      %v1015 = vpack.c.b16 %v1011, %v1010
      %v1036 = vunpack.c.l.b16 %v980
      %v1037 = vunpack.c.l.b16 %v981
      %v1038 = vunpack.c.l.b16 %v982
      %v1039 = vunpack.c.l.b16 %v983
      %v1040 = vunpack.c.l.b16 %v984
      %v1041 = vunpack.c.l.b16 %v985
      %v1042 = vunpack.c.l.b16 %v986
      %v1043 = vunpack.c.l.b16 %v987
      %v1044 = vunpack.c.l.b16 %v988
      %v1045 = vunpack.c.l.b16 %v989
      %v1046 = vunpack.c.l.b16 %v990
      %v1047 = vunpack.c.l.b16 %v991
      %v1048 = vunpack.c.l.b16 %v992
      %v1049 = vunpack.c.l.b16 %v993
      %v1050 = vunpack.c.l.b16 %v994
      %v1051 = vunpack.c.l.b16 %v995
      %v1052 = vpack.c.b16 %v1037, %v1036
      %v1053 = vpack.c.b16 %v1039, %v1038
      %v1054 = vpack.c.b16 %v1041, %v1040
      %v1055 = vpack.c.b16 %v1043, %v1042
      %v1056 = vpack.c.b16 %v1045, %v1044
      %v1057 = vpack.c.b16 %v1047, %v1046
      %v1058 = vpack.c.b16 %v1049, %v1048
      %v1059 = vpack.c.b16 %v1051, %v1050
      %1068 = vmatprep.subr.bf16.mxu0 0
      %1069 = vmatpush1.bf16.msra.mxu0 %v1059
      %1070 = vmatprep.subr.bf16.mxu0 0
      %1071 = vmatpush1.bf16.msra.mxu0 %v1058
      %1072 = vmatprep.subr.bf16.mxu0 0
      %1073 = vmatpush1.bf16.msra.mxu0 %v1057
      %1074 = vmatprep.subr.bf16.mxu0 0
      %1075 = vmatpush1.bf16.msra.mxu0 %v1056
      %1076 = vmatprep.subr.bf16.mxu0 0
      %1077 = vmatpush1.bf16.msra.mxu0 %v1055
      %1078 = vmatprep.subr.bf16.mxu0 0
      %1079 = vmatpush1.bf16.msra.mxu0 %v1054
      %1080 = vmatprep.subr.bf16.mxu0 0
      %1081 = vmatpush1.bf16.msra.mxu0 %v1053
      %1082 = vmatprep.subr.bf16.mxu0 0
      %1083 = vmatpush1.bf16.msra.mxu0 %v1052
      %1084 = vmatprep.subr.bf16.mxu0 0
      %1085 = vmatpush2.bf16.msra.mxu0 0
      %1086 = vmatprep.subr.bf16.mxu0 0
      %1087 = vmatpush2.bf16.msra.mxu0 0
      %1088 = vmatprep.subr.bf16.mxu0 0
      %1089 = vmatpush2.bf16.msra.mxu0 0
      %1090 = vmatprep.subr.bf16.mxu0 0
      %1091 = vmatpush2.bf16.msra.mxu0 0
      %1092 = vmatprep.subr.bf16.mxu0 0
      %1093 = vmatpush2.bf16.msra.mxu0 0
      %1094 = vmatprep.subr.bf16.mxu0 0
      %1095 = vmatpush2.bf16.msra.mxu0 0
      %1096 = vmatprep.subr.bf16.mxu0 0
      %1097 = vmatpush2.bf16.msra.mxu0 0
      %1098 = vmatprep.subr.bf16.mxu0 0
      %1099 = vmatpush2.bf16.msra.mxu0 0
      %1100 = vmatprep.mubr.bf16.mxu0 0
      %1101 = vmatmul.mubr.bf16.gmra.mxu0 %v1012
      %v1102 = vpop.f32.mrf.mxu0
      %v1103 = vadd.f32 0.0, %v1102
      %v1104 = vpop.f32.mrf.mxu0
      %v1105 = vpop.f32.mrf.mxu0
      %v1106 = vadd.f32 0.0, %v1105
      %v1107 = vpop.f32.mrf.mxu0
      %1108 = vmatprep.mubr.bf16.mxu0 0
      %1109 = vmatmul.mubr.bf16.gmra.mxu0 %v1013
      %v1110 = vpop.f32.mrf.mxu0
      %v1111 = vadd.f32 0.0, %v1110
      %v1112 = vpop.f32.mrf.mxu0
      %v1113 = vpop.f32.mrf.mxu0
      %v1114 = vadd.f32 0.0, %v1113
      %v1115 = vpop.f32.mrf.mxu0
      %1116 = vmatprep.mubr.bf16.mxu0 0
      %1117 = vmatmul.mubr.bf16.gmra.mxu0 %v1014
      %v1118 = vpop.f32.mrf.mxu0
      %v1119 = vadd.f32 0.0, %v1118
      %v1120 = vpop.f32.mrf.mxu0
      %v1121 = vpop.f32.mrf.mxu0
      %v1122 = vadd.f32 0.0, %v1121
      %v1123 = vpop.f32.mrf.mxu0
      %1124 = vmatprep.mubr.bf16.mxu0 0
      %1125 = vmatmul.mubr.bf16.gmra.mxu0 %v1015
      %v1126 = vpop.f32.mrf.mxu0
      %v1127 = vadd.f32 0.0, %v1126
      %v1128 = vpop.f32.mrf.mxu0
      %v1129 = vpop.f32.mrf.mxu0
      %v1130 = vadd.f32 0.0, %v1129
      %v1131 = vpop.f32.mrf.mxu0
      %1132 = vdwg.mxu0
      %v1133 = vadd.f32 %v962, %v1103
      %v1134 = vadd.f32 %v963, %v1106
      %v1135 = vadd.f32 %v964, %v1111
      %v1136 = vadd.f32 %v965, %v1114
      %v1137 = vadd.f32 %v966, %v1119
      %v1138 = vadd.f32 %v967, %v1122
      %v1139 = vadd.f32 %v968, %v1127
      %v1140 = vadd.f32 %v969, %v1130
      %v1141 = vld [vmem:[%s970] sm:$0xf]
      %v1142 = vld [vmem:[%s970 + $0x4] sm:$0x1]
      %v1143 = vld [vmem:[%s970 + $0x8] sm:$0xf]
      %v1144 = vld [vmem:[%s970 + $0xc] sm:$0x1]
      %v1145 = vld [vmem:[%s970 + $0x10] sm:$0xf]
      %v1146 = vld [vmem:[%s970 + $0x14] sm:$0x1]
      %v1147 = vld [vmem:[%s970 + $0x18] sm:$0xf]
      %v1148 = vld [vmem:[%s970 + $0x1c] sm:$0x1]
      %v1149 = vld [vmem:[%s970 + $0x20] sm:$0xf]
      %v1150 = vld [vmem:[%s970 + $0x24] sm:$0x1]
      %v1151 = vld [vmem:[%s970 + $0x28] sm:$0xf]
      %v1152 = vld [vmem:[%s970 + $0x2c] sm:$0x1]
      %v1153 = vld [vmem:[%s970 + $0x30] sm:$0xf]
      %v1154 = vld [vmem:[%s970 + $0x34] sm:$0x1]
      %v1155 = vld [vmem:[%s970 + $0x38] sm:$0xf]
      %v1156 = vld [vmem:[%s970 + $0x3c] sm:$0x1]
      %v1158 = vshrl.u32 %v1141, 16
      %v1160 = vrot.slane %v1158, 4
      %v1161 = vshll.u32 %v1141, 16
      %v1163 = vrot.slane %v1161, 5
      %v1164 = vor.u32 %v1160, %v1163
      %v1165 = vrot.slane %v1164, 4
      %v1167 = vshll.u32 %v1142, 16
      %v1169 = vrot.slane %v1167, 5
      %v1170 = vsel %vm361, %v1165, %v1169
      %v1172 = vshrl.u32 %v1143, 16
      %v1174 = vrot.slane %v1172, 4
      %v1175 = vshll.u32 %v1143, 16
      %v1177 = vrot.slane %v1175, 5
      %v1178 = vor.u32 %v1174, %v1177
      %v1179 = vrot.slane %v1178, 4
      %v1181 = vshll.u32 %v1144, 16
      %v1183 = vrot.slane %v1181, 5
      %v1184 = vsel %vm361, %v1179, %v1183
      %v1186 = vshrl.u32 %v1145, 16
      %v1188 = vrot.slane %v1186, 4
      %v1189 = vshll.u32 %v1145, 16
      %v1191 = vrot.slane %v1189, 5
      %v1192 = vor.u32 %v1188, %v1191
      %v1193 = vrot.slane %v1192, 4
      %v1195 = vshll.u32 %v1146, 16
      %v1197 = vrot.slane %v1195, 5
      %v1198 = vsel %vm361, %v1193, %v1197
      %v1200 = vshrl.u32 %v1147, 16
      %v1202 = vrot.slane %v1200, 4
      %v1203 = vshll.u32 %v1147, 16
      %v1205 = vrot.slane %v1203, 5
      %v1206 = vor.u32 %v1202, %v1205
      %v1207 = vrot.slane %v1206, 4
      %v1209 = vshll.u32 %v1148, 16
      %v1211 = vrot.slane %v1209, 5
      %v1212 = vsel %vm361, %v1207, %v1211
      %v1214 = vshrl.u32 %v1149, 16
      %v1216 = vrot.slane %v1214, 4
      %v1217 = vshll.u32 %v1149, 16
      %v1219 = vrot.slane %v1217, 5
      %v1220 = vor.u32 %v1216, %v1219
      %v1221 = vrot.slane %v1220, 4
      %v1223 = vshll.u32 %v1150, 16
      %v1225 = vrot.slane %v1223, 5
      %v1226 = vsel %vm361, %v1221, %v1225
      %v1228 = vshrl.u32 %v1151, 16
      %v1230 = vrot.slane %v1228, 4
      %v1231 = vshll.u32 %v1151, 16
      %v1233 = vrot.slane %v1231, 5
      %v1234 = vor.u32 %v1230, %v1233
      %v1235 = vrot.slane %v1234, 4
      %v1237 = vshll.u32 %v1152, 16
      %v1239 = vrot.slane %v1237, 5
      %v1240 = vsel %vm361, %v1235, %v1239
      %v1242 = vshrl.u32 %v1153, 16
      %v1244 = vrot.slane %v1242, 4
      %v1245 = vshll.u32 %v1153, 16
      %v1247 = vrot.slane %v1245, 5
      %v1248 = vor.u32 %v1244, %v1247
      %v1249 = vrot.slane %v1248, 4
      %v1251 = vshll.u32 %v1154, 16
      %v1253 = vrot.slane %v1251, 5
      %v1254 = vsel %vm361, %v1249, %v1253
      %v1256 = vshrl.u32 %v1155, 16
      %v1258 = vrot.slane %v1256, 4
      %v1259 = vshll.u32 %v1155, 16
      %v1261 = vrot.slane %v1259, 5
      %v1262 = vor.u32 %v1258, %v1261
      %v1263 = vrot.slane %v1262, 4
      %v1265 = vshll.u32 %v1156, 16
      %v1267 = vrot.slane %v1265, 5
      %v1268 = vsel %vm361, %v1263, %v1267
      %s1269 = scalar_lea.vmem %s1, 256
      %v1270 = vld [vmem:[%s1269] sm:$0xf]
      %v1271 = vld [vmem:[%s1269 + $0x4] sm:$0xf]
      %v1272 = vld [vmem:[%s1269 + $0x8] sm:$0xf]
      %v1273 = vld [vmem:[%s1269 + $0xc] sm:$0xf]
      %v1274 = vld [vmem:[%s1269 + $0x10] sm:$0xf]
      %v1275 = vld [vmem:[%s1269 + $0x14] sm:$0xf]
      %v1276 = vld [vmem:[%s1269 + $0x18] sm:$0xf]
      %v1277 = vld [vmem:[%s1269 + $0x1c] sm:$0xf]
      %v1278 = vld [vmem:[%s1269 + $0x20] sm:$0xf]
      %v1279 = vld [vmem:[%s1269 + $0x24] sm:$0xf]
      %v1280 = vld [vmem:[%s1269 + $0x28] sm:$0xf]
      %v1281 = vld [vmem:[%s1269 + $0x2c] sm:$0xf]
      %v1282 = vld [vmem:[%s1269 + $0x30] sm:$0xf]
      %v1283 = vld [vmem:[%s1269 + $0x34] sm:$0xf]
      %v1284 = vld [vmem:[%s1269 + $0x38] sm:$0xf]
      %v1285 = vld [vmem:[%s1269 + $0x3c] sm:$0xf]
      %v1286 = vunpack.c.l.b16 %v1170
      %v1287 = vunpack.c.l.b16 %v1184
      %v1288 = vunpack.c.l.b16 %v1198
      %v1289 = vunpack.c.l.b16 %v1212
      %v1290 = vunpack.c.l.b16 %v1226
      %v1291 = vunpack.c.l.b16 %v1240
      %v1292 = vunpack.c.l.b16 %v1254
      %v1293 = vunpack.c.l.b16 %v1268
      %v1294 = vpack.c.b16 %v1287, %v1286
      %v1295 = vpack.c.b16 %v1289, %v1288
      %v1296 = vpack.c.b16 %v1291, %v1290
      %v1297 = vpack.c.b16 %v1293, %v1292
      %v1318 = vunpack.c.l.b16 %v1270
      %v1319 = vunpack.c.l.b16 %v1271
      %v1320 = vunpack.c.l.b16 %v1272
      %v1321 = vunpack.c.l.b16 %v1273
      %v1322 = vunpack.c.l.b16 %v1274
      %v1323 = vunpack.c.l.b16 %v1275
      %v1324 = vunpack.c.l.b16 %v1276
      %v1325 = vunpack.c.l.b16 %v1277
      %v1326 = vunpack.c.l.b16 %v1278
      %v1327 = vunpack.c.l.b16 %v1279
      %v1328 = vunpack.c.l.b16 %v1280
      %v1329 = vunpack.c.l.b16 %v1281
      %v1330 = vunpack.c.l.b16 %v1282
      %v1331 = vunpack.c.l.b16 %v1283
      %v1332 = vunpack.c.l.b16 %v1284
      %v1333 = vunpack.c.l.b16 %v1285
      %v1334 = vpack.c.b16 %v1319, %v1318
      %v1335 = vpack.c.b16 %v1321, %v1320
      %v1336 = vpack.c.b16 %v1323, %v1322
      %v1337 = vpack.c.b16 %v1325, %v1324
      %v1338 = vpack.c.b16 %v1327, %v1326
      %v1339 = vpack.c.b16 %v1329, %v1328
      %v1340 = vpack.c.b16 %v1331, %v1330
      %v1341 = vpack.c.b16 %v1333, %v1332
      %1350 = vmatprep.subr.bf16.mxu0 0
      %1351 = vmatpush1.bf16.msra.mxu0 %v1341
      %1352 = vmatprep.subr.bf16.mxu0 0
      %1353 = vmatpush1.bf16.msra.mxu0 %v1340
      %1354 = vmatprep.subr.bf16.mxu0 0
      %1355 = vmatpush1.bf16.msra.mxu0 %v1339
      %1356 = vmatprep.subr.bf16.mxu0 0
      %1357 = vmatpush1.bf16.msra.mxu0 %v1338
      %1358 = vmatprep.subr.bf16.mxu0 0
      %1359 = vmatpush1.bf16.msra.mxu0 %v1337
      %1360 = vmatprep.subr.bf16.mxu0 0
      %1361 = vmatpush1.bf16.msra.mxu0 %v1336
      %1362 = vmatprep.subr.bf16.mxu0 0
      %1363 = vmatpush1.bf16.msra.mxu0 %v1335
      %1364 = vmatprep.subr.bf16.mxu0 0
      %1365 = vmatpush1.bf16.msra.mxu0 %v1334
      %1366 = vmatprep.subr.bf16.mxu0 0
      %1367 = vmatpush2.bf16.msra.mxu0 0
      %1368 = vmatprep.subr.bf16.mxu0 0
      %1369 = vmatpush2.bf16.msra.mxu0 0
      %1370 = vmatprep.subr.bf16.mxu0 0
      %1371 = vmatpush2.bf16.msra.mxu0 0
      %1372 = vmatprep.subr.bf16.mxu0 0
      %1373 = vmatpush2.bf16.msra.mxu0 0
      %1374 = vmatprep.subr.bf16.mxu0 0
      %1375 = vmatpush2.bf16.msra.mxu0 0
      %1376 = vmatprep.subr.bf16.mxu0 0
      %1377 = vmatpush2.bf16.msra.mxu0 0
      %1378 = vmatprep.subr.bf16.mxu0 0
      %1379 = vmatpush2.bf16.msra.mxu0 0
      %1380 = vmatprep.subr.bf16.mxu0 0
      %1381 = vmatpush2.bf16.msra.mxu0 0
      %1382 = vmatprep.mubr.bf16.mxu0 0
      %1383 = vmatmul.mubr.bf16.gmra.mxu0 %v1294
      %v1384 = vpop.f32.mrf.mxu0
      %v1385 = vadd.f32 0.0, %v1384
      %v1386 = vpop.f32.mrf.mxu0
      %v1387 = vpop.f32.mrf.mxu0
      %v1388 = vadd.f32 0.0, %v1387
      %v1389 = vpop.f32.mrf.mxu0
      %1390 = vmatprep.mubr.bf16.mxu0 0
      %1391 = vmatmul.mubr.bf16.gmra.mxu0 %v1295
      %v1392 = vpop.f32.mrf.mxu0
      %v1393 = vadd.f32 0.0, %v1392
      %v1394 = vpop.f32.mrf.mxu0
      %v1395 = vpop.f32.mrf.mxu0
      %v1396 = vadd.f32 0.0, %v1395
      %v1397 = vpop.f32.mrf.mxu0
      %1398 = vmatprep.mubr.bf16.mxu0 0
      %1399 = vmatmul.mubr.bf16.gmra.mxu0 %v1296
      %v1400 = vpop.f32.mrf.mxu0
      %v1401 = vadd.f32 0.0, %v1400
      %v1402 = vpop.f32.mrf.mxu0
      %v1403 = vpop.f32.mrf.mxu0
      %v1404 = vadd.f32 0.0, %v1403
      %v1405 = vpop.f32.mrf.mxu0
      %1406 = vmatprep.mubr.bf16.mxu0 0
      %1407 = vmatmul.mubr.bf16.gmra.mxu0 %v1297
      %v1408 = vpop.f32.mrf.mxu0
      %v1409 = vadd.f32 0.0, %v1408
      %v1410 = vpop.f32.mrf.mxu0
      %v1411 = vpop.f32.mrf.mxu0
      %v1412 = vadd.f32 0.0, %v1411
      %v1413 = vpop.f32.mrf.mxu0
      %1414 = vdwg.mxu0
      %v1415 = vadd.f32 %v1133, %v1385
      %v1416 = vadd.f32 %v1134, %v1388
      %v1417 = vadd.f32 %v1135, %v1393
      %v1418 = vadd.f32 %v1136, %v1396
      %v1419 = vadd.f32 %v1137, %v1401
      %v1420 = vadd.f32 %v1138, %v1404
      %v1421 = vadd.f32 %v1139, %v1409
      %v1422 = vadd.f32 %v1140, %v1412
      %v1423 = vld [vmem:[%s970] sm:$0xe]
      %v1424 = vld [vmem:[%s970 + $0x8] sm:$0xe]
      %v1425 = vld [vmem:[%s970 + $0x10] sm:$0xe]
      %v1426 = vld [vmem:[%s970 + $0x18] sm:$0xe]
      %v1427 = vld [vmem:[%s970 + $0x20] sm:$0xe]
      %v1428 = vld [vmem:[%s970 + $0x28] sm:$0xe]
      %v1429 = vld [vmem:[%s970 + $0x30] sm:$0xe]
      %v1430 = vld [vmem:[%s970 + $0x38] sm:$0xe]
      %v1447 = vrot.slane %v1423, 5
      %v1448 = vrot.slane %v1447, 4
      %v1449 = vrot.slane %v1142, 5
      %v1450 = vsel %vm783, %v1448, %v1449
      %v1451 = vrot.slane %v1424, 5
      %v1452 = vrot.slane %v1451, 4
      %v1453 = vrot.slane %v1144, 5
      %v1454 = vsel %vm783, %v1452, %v1453
      %v1455 = vrot.slane %v1425, 5
      %v1456 = vrot.slane %v1455, 4
      %v1457 = vrot.slane %v1146, 5
      %v1458 = vsel %vm783, %v1456, %v1457
      %v1459 = vrot.slane %v1426, 5
      %v1460 = vrot.slane %v1459, 4
      %v1461 = vrot.slane %v1148, 5
      %v1462 = vsel %vm783, %v1460, %v1461
      %v1463 = vrot.slane %v1427, 5
      %v1464 = vrot.slane %v1463, 4
      %v1465 = vrot.slane %v1150, 5
      %v1466 = vsel %vm783, %v1464, %v1465
      %v1467 = vrot.slane %v1428, 5
      %v1468 = vrot.slane %v1467, 4
      %v1469 = vrot.slane %v1152, 5
      %v1470 = vsel %vm783, %v1468, %v1469
      %v1471 = vrot.slane %v1429, 5
      %v1472 = vrot.slane %v1471, 4
      %v1473 = vrot.slane %v1154, 5
      %v1474 = vsel %vm783, %v1472, %v1473
      %v1475 = vrot.slane %v1430, 5
      %v1476 = vrot.slane %v1475, 4
      %v1477 = vrot.slane %v1156, 5
      %v1478 = vsel %vm783, %v1476, %v1477
      %s1479 = scalar_lea.vmem %s1, 320
      %v1480 = vld [vmem:[%s1479] sm:$0xf]
      %v1481 = vld [vmem:[%s1479 + $0x4] sm:$0xf]
      %v1482 = vld [vmem:[%s1479 + $0x8] sm:$0xf]
      %v1483 = vld [vmem:[%s1479 + $0xc] sm:$0xf]
      %v1484 = vld [vmem:[%s1479 + $0x10] sm:$0xf]
      %v1485 = vld [vmem:[%s1479 + $0x14] sm:$0xf]
      %v1486 = vld [vmem:[%s1479 + $0x18] sm:$0xf]
      %v1487 = vld [vmem:[%s1479 + $0x1c] sm:$0xf]
      %v1488 = vld [vmem:[%s1479 + $0x20] sm:$0xf]
      %v1489 = vld [vmem:[%s1479 + $0x24] sm:$0xf]
      %v1490 = vld [vmem:[%s1479 + $0x28] sm:$0xf]
      %v1491 = vld [vmem:[%s1479 + $0x2c] sm:$0xf]
      %v1492 = vld [vmem:[%s1479 + $0x30] sm:$0xf]
      %v1493 = vld [vmem:[%s1479 + $0x34] sm:$0xf]
      %v1494 = vld [vmem:[%s1479 + $0x38] sm:$0xf]
      %v1495 = vld [vmem:[%s1479 + $0x3c] sm:$0xf]
      %v1496 = vunpack.c.l.b16 %v1450
      %v1497 = vunpack.c.l.b16 %v1454
      %v1498 = vunpack.c.l.b16 %v1458
      %v1499 = vunpack.c.l.b16 %v1462
      %v1500 = vunpack.c.l.b16 %v1466
      %v1501 = vunpack.c.l.b16 %v1470
      %v1502 = vunpack.c.l.b16 %v1474
      %v1503 = vunpack.c.l.b16 %v1478
      %v1504 = vpack.c.b16 %v1497, %v1496
      %v1505 = vpack.c.b16 %v1499, %v1498
      %v1506 = vpack.c.b16 %v1501, %v1500
      %v1507 = vpack.c.b16 %v1503, %v1502
      %v1528 = vunpack.c.l.b16 %v1480
      %v1529 = vunpack.c.l.b16 %v1481
      %v1530 = vunpack.c.l.b16 %v1482
      %v1531 = vunpack.c.l.b16 %v1483
      %v1532 = vunpack.c.l.b16 %v1484
      %v1533 = vunpack.c.l.b16 %v1485
      %v1534 = vunpack.c.l.b16 %v1486
      %v1535 = vunpack.c.l.b16 %v1487
      %v1536 = vunpack.c.l.b16 %v1488
      %v1537 = vunpack.c.l.b16 %v1489
      %v1538 = vunpack.c.l.b16 %v1490
      %v1539 = vunpack.c.l.b16 %v1491
      %v1540 = vunpack.c.l.b16 %v1492
      %v1541 = vunpack.c.l.b16 %v1493
      %v1542 = vunpack.c.l.b16 %v1494
      %v1543 = vunpack.c.l.b16 %v1495
      %v1544 = vpack.c.b16 %v1529, %v1528
      %v1545 = vpack.c.b16 %v1531, %v1530
      %v1546 = vpack.c.b16 %v1533, %v1532
      %v1547 = vpack.c.b16 %v1535, %v1534
      %v1548 = vpack.c.b16 %v1537, %v1536
      %v1549 = vpack.c.b16 %v1539, %v1538
      %v1550 = vpack.c.b16 %v1541, %v1540
      %v1551 = vpack.c.b16 %v1543, %v1542
      %1560 = vmatprep.subr.bf16.mxu0 0
      %1561 = vmatpush1.bf16.msra.mxu0 %v1551
      %1562 = vmatprep.subr.bf16.mxu0 0
      %1563 = vmatpush1.bf16.msra.mxu0 %v1550
      %1564 = vmatprep.subr.bf16.mxu0 0
      %1565 = vmatpush1.bf16.msra.mxu0 %v1549
      %1566 = vmatprep.subr.bf16.mxu0 0
      %1567 = vmatpush1.bf16.msra.mxu0 %v1548
      %1568 = vmatprep.subr.bf16.mxu0 0
      %1569 = vmatpush1.bf16.msra.mxu0 %v1547
      %1570 = vmatprep.subr.bf16.mxu0 0
      %1571 = vmatpush1.bf16.msra.mxu0 %v1546
      %1572 = vmatprep.subr.bf16.mxu0 0
      %1573 = vmatpush1.bf16.msra.mxu0 %v1545
      %1574 = vmatprep.subr.bf16.mxu0 0
      %1575 = vmatpush1.bf16.msra.mxu0 %v1544
      %1576 = vmatprep.subr.bf16.mxu0 0
      %1577 = vmatpush2.bf16.msra.mxu0 0
      %1578 = vmatprep.subr.bf16.mxu0 0
      %1579 = vmatpush2.bf16.msra.mxu0 0
      %1580 = vmatprep.subr.bf16.mxu0 0
      %1581 = vmatpush2.bf16.msra.mxu0 0
      %1582 = vmatprep.subr.bf16.mxu0 0
      %1583 = vmatpush2.bf16.msra.mxu0 0
      %1584 = vmatprep.subr.bf16.mxu0 0
      %1585 = vmatpush2.bf16.msra.mxu0 0
      %1586 = vmatprep.subr.bf16.mxu0 0
      %1587 = vmatpush2.bf16.msra.mxu0 0
      %1588 = vmatprep.subr.bf16.mxu0 0
      %1589 = vmatpush2.bf16.msra.mxu0 0
      %1590 = vmatprep.subr.bf16.mxu0 0
      %1591 = vmatpush2.bf16.msra.mxu0 0
      %1592 = vmatprep.mubr.bf16.mxu0 0
      %1593 = vmatmul.mubr.bf16.gmra.mxu0 %v1504
      %v1594 = vpop.f32.mrf.mxu0
      %v1595 = vadd.f32 0.0, %v1594
      %v1596 = vpop.f32.mrf.mxu0
      %v1597 = vpop.f32.mrf.mxu0
      %v1598 = vadd.f32 0.0, %v1597
      %v1599 = vpop.f32.mrf.mxu0
      %1600 = vmatprep.mubr.bf16.mxu0 0
      %1601 = vmatmul.mubr.bf16.gmra.mxu0 %v1505
      %v1602 = vpop.f32.mrf.mxu0
      %v1603 = vadd.f32 0.0, %v1602
      %v1604 = vpop.f32.mrf.mxu0
      %v1605 = vpop.f32.mrf.mxu0
      %v1606 = vadd.f32 0.0, %v1605
      %v1607 = vpop.f32.mrf.mxu0
      %1608 = vmatprep.mubr.bf16.mxu0 0
      %1609 = vmatmul.mubr.bf16.gmra.mxu0 %v1506
      %v1610 = vpop.f32.mrf.mxu0
      %v1611 = vadd.f32 0.0, %v1610
      %v1612 = vpop.f32.mrf.mxu0
      %v1613 = vpop.f32.mrf.mxu0
      %v1614 = vadd.f32 0.0, %v1613
      %v1615 = vpop.f32.mrf.mxu0
      %1616 = vmatprep.mubr.bf16.mxu0 0
      %1617 = vmatmul.mubr.bf16.gmra.mxu0 %v1507
      %v1618 = vpop.f32.mrf.mxu0
      %v1619 = vadd.f32 0.0, %v1618
      %v1620 = vpop.f32.mrf.mxu0
      %v1621 = vpop.f32.mrf.mxu0
      %v1622 = vadd.f32 0.0, %v1621
      %v1623 = vpop.f32.mrf.mxu0
      %1624 = vdwg.mxu0
      %v1625 = vadd.f32 %v1415, %v1595
      %v1626 = vadd.f32 %v1416, %v1598
      %v1627 = vadd.f32 %v1417, %v1603
      %v1628 = vadd.f32 %v1418, %v1606
      %v1629 = vadd.f32 %v1419, %v1611
      %v1630 = vadd.f32 %v1420, %v1614
      %v1631 = vadd.f32 %v1421, %v1619
      %v1632 = vadd.f32 %v1422, %v1622
      %s1633 = scalar_lea.vmem %s315, 16
      %v1634 = vld [vmem:[%s1633] sm:$0xf]
      %v1635 = vld [vmem:[%s1633 + $0x8] sm:$0xf]
      %v1636 = vld [vmem:[%s1633 + $0x10] sm:$0xf]
      %v1637 = vld [vmem:[%s1633 + $0x18] sm:$0xf]
      %v1638 = vld [vmem:[%s1633 + $0x20] sm:$0xf]
      %v1639 = vld [vmem:[%s1633 + $0x28] sm:$0xf]
      %v1640 = vld [vmem:[%s1633 + $0x30] sm:$0xf]
      %v1641 = vld [vmem:[%s1633 + $0x38] sm:$0xf]
      %s1642 = scalar_lea.vmem %s1, 384
      %v1643 = vld [vmem:[%s1642] sm:$0xf]
      %v1644 = vld [vmem:[%s1642 + $0x4] sm:$0xf]
      %v1645 = vld [vmem:[%s1642 + $0x8] sm:$0xf]
      %v1646 = vld [vmem:[%s1642 + $0xc] sm:$0xf]
      %v1647 = vld [vmem:[%s1642 + $0x10] sm:$0xf]
      %v1648 = vld [vmem:[%s1642 + $0x14] sm:$0xf]
      %v1649 = vld [vmem:[%s1642 + $0x18] sm:$0xf]
      %v1650 = vld [vmem:[%s1642 + $0x1c] sm:$0xf]
      %v1651 = vld [vmem:[%s1642 + $0x20] sm:$0xf]
      %v1652 = vld [vmem:[%s1642 + $0x24] sm:$0xf]
      %v1653 = vld [vmem:[%s1642 + $0x28] sm:$0xf]
      %v1654 = vld [vmem:[%s1642 + $0x2c] sm:$0xf]
      %v1655 = vld [vmem:[%s1642 + $0x30] sm:$0xf]
      %v1656 = vld [vmem:[%s1642 + $0x34] sm:$0xf]
      %v1657 = vld [vmem:[%s1642 + $0x38] sm:$0xf]
      %v1658 = vld [vmem:[%s1642 + $0x3c] sm:$0xf]
      %v1667 = vunpack.c.l.b16 %v1634
      %v1668 = vunpack.c.l.b16 %v1635
      %v1669 = vunpack.c.l.b16 %v1636
      %v1670 = vunpack.c.l.b16 %v1637
      %v1671 = vunpack.c.l.b16 %v1638
      %v1672 = vunpack.c.l.b16 %v1639
      %v1673 = vunpack.c.l.b16 %v1640
      %v1674 = vunpack.c.l.b16 %v1641
      %v1675 = vpack.c.b16 %v1668, %v1667
      %v1676 = vpack.c.b16 %v1670, %v1669
      %v1677 = vpack.c.b16 %v1672, %v1671
      %v1678 = vpack.c.b16 %v1674, %v1673
      %v1699 = vunpack.c.l.b16 %v1643
      %v1700 = vunpack.c.l.b16 %v1644
      %v1701 = vunpack.c.l.b16 %v1645
      %v1702 = vunpack.c.l.b16 %v1646
      %v1703 = vunpack.c.l.b16 %v1647
      %v1704 = vunpack.c.l.b16 %v1648
      %v1705 = vunpack.c.l.b16 %v1649
      %v1706 = vunpack.c.l.b16 %v1650
      %v1707 = vunpack.c.l.b16 %v1651
      %v1708 = vunpack.c.l.b16 %v1652
      %v1709 = vunpack.c.l.b16 %v1653
      %v1710 = vunpack.c.l.b16 %v1654
      %v1711 = vunpack.c.l.b16 %v1655
      %v1712 = vunpack.c.l.b16 %v1656
      %v1713 = vunpack.c.l.b16 %v1657
      %v1714 = vunpack.c.l.b16 %v1658
      %v1715 = vpack.c.b16 %v1700, %v1699
      %v1716 = vpack.c.b16 %v1702, %v1701
      %v1717 = vpack.c.b16 %v1704, %v1703
      %v1718 = vpack.c.b16 %v1706, %v1705
      %v1719 = vpack.c.b16 %v1708, %v1707
      %v1720 = vpack.c.b16 %v1710, %v1709
      %v1721 = vpack.c.b16 %v1712, %v1711
      %v1722 = vpack.c.b16 %v1714, %v1713
      %1731 = vmatprep.subr.bf16.mxu0 0
      %1732 = vmatpush1.bf16.msra.mxu0 %v1722
      %1733 = vmatprep.subr.bf16.mxu0 0
      %1734 = vmatpush1.bf16.msra.mxu0 %v1721
      %1735 = vmatprep.subr.bf16.mxu0 0
      %1736 = vmatpush1.bf16.msra.mxu0 %v1720
      %1737 = vmatprep.subr.bf16.mxu0 0
      %1738 = vmatpush1.bf16.msra.mxu0 %v1719
      %1739 = vmatprep.subr.bf16.mxu0 0
      %1740 = vmatpush1.bf16.msra.mxu0 %v1718
      %1741 = vmatprep.subr.bf16.mxu0 0
      %1742 = vmatpush1.bf16.msra.mxu0 %v1717
      %1743 = vmatprep.subr.bf16.mxu0 0
      %1744 = vmatpush1.bf16.msra.mxu0 %v1716
      %1745 = vmatprep.subr.bf16.mxu0 0
      %1746 = vmatpush1.bf16.msra.mxu0 %v1715
      %1747 = vmatprep.subr.bf16.mxu0 0
      %1748 = vmatpush2.bf16.msra.mxu0 0
      %1749 = vmatprep.subr.bf16.mxu0 0
      %1750 = vmatpush2.bf16.msra.mxu0 0
      %1751 = vmatprep.subr.bf16.mxu0 0
      %1752 = vmatpush2.bf16.msra.mxu0 0
      %1753 = vmatprep.subr.bf16.mxu0 0
      %1754 = vmatpush2.bf16.msra.mxu0 0
      %1755 = vmatprep.subr.bf16.mxu0 0
      %1756 = vmatpush2.bf16.msra.mxu0 0
      %1757 = vmatprep.subr.bf16.mxu0 0
      %1758 = vmatpush2.bf16.msra.mxu0 0
      %1759 = vmatprep.subr.bf16.mxu0 0
      %1760 = vmatpush2.bf16.msra.mxu0 0
      %1761 = vmatprep.subr.bf16.mxu0 0
      %1762 = vmatpush2.bf16.msra.mxu0 0
      %1763 = vmatprep.mubr.bf16.mxu0 0
      %1764 = vmatmul.mubr.bf16.gmra.mxu0 %v1675
      %v1765 = vpop.f32.mrf.mxu0
      %v1766 = vadd.f32 0.0, %v1765
      %v1767 = vpop.f32.mrf.mxu0
      %v1768 = vpop.f32.mrf.mxu0
      %v1769 = vadd.f32 0.0, %v1768
      %v1770 = vpop.f32.mrf.mxu0
      %1771 = vmatprep.mubr.bf16.mxu0 0
      %1772 = vmatmul.mubr.bf16.gmra.mxu0 %v1676
      %v1773 = vpop.f32.mrf.mxu0
      %v1774 = vadd.f32 0.0, %v1773
      %v1775 = vpop.f32.mrf.mxu0
      %v1776 = vpop.f32.mrf.mxu0
      %v1777 = vadd.f32 0.0, %v1776
      %v1778 = vpop.f32.mrf.mxu0
      %1779 = vmatprep.mubr.bf16.mxu0 0
      %1780 = vmatmul.mubr.bf16.gmra.mxu0 %v1677
      %v1781 = vpop.f32.mrf.mxu0
      %v1782 = vadd.f32 0.0, %v1781
      %v1783 = vpop.f32.mrf.mxu0
      %v1784 = vpop.f32.mrf.mxu0
      %v1785 = vadd.f32 0.0, %v1784
      %v1786 = vpop.f32.mrf.mxu0
      %1787 = vmatprep.mubr.bf16.mxu0 0
      %1788 = vmatmul.mubr.bf16.gmra.mxu0 %v1678
      %v1789 = vpop.f32.mrf.mxu0
      %v1790 = vadd.f32 0.0, %v1789
      %v1791 = vpop.f32.mrf.mxu0
      %v1792 = vpop.f32.mrf.mxu0
      %v1793 = vadd.f32 0.0, %v1792
      %v1794 = vpop.f32.mrf.mxu0
      %1795 = vdwg.mxu0
      %v1796 = vadd.f32 %v1625, %v1766
      %v1797 = vadd.f32 %v1626, %v1769
      %v1798 = vadd.f32 %v1627, %v1774
      %v1799 = vadd.f32 %v1628, %v1777
      %v1800 = vadd.f32 %v1629, %v1782
      %v1801 = vadd.f32 %v1630, %v1785
      %v1802 = vadd.f32 %v1631, %v1790
      %v1803 = vadd.f32 %v1632, %v1793
      %v1804 = vld [vmem:[%s1633] sm:$0xf]
      %v1805 = vld [vmem:[%s1633 + $0x4] sm:$0x1]
      %v1806 = vld [vmem:[%s1633 + $0x8] sm:$0xf]
      %v1807 = vld [vmem:[%s1633 + $0xc] sm:$0x1]
      %v1808 = vld [vmem:[%s1633 + $0x10] sm:$0xf]
      %v1809 = vld [vmem:[%s1633 + $0x14] sm:$0x1]
      %v1810 = vld [vmem:[%s1633 + $0x18] sm:$0xf]
      %v1811 = vld [vmem:[%s1633 + $0x1c] sm:$0x1]
      %v1812 = vld [vmem:[%s1633 + $0x20] sm:$0xf]
      %v1813 = vld [vmem:[%s1633 + $0x24] sm:$0x1]
      %v1814 = vld [vmem:[%s1633 + $0x28] sm:$0xf]
      %v1815 = vld [vmem:[%s1633 + $0x2c] sm:$0x1]
      %v1816 = vld [vmem:[%s1633 + $0x30] sm:$0xf]
      %v1817 = vld [vmem:[%s1633 + $0x34] sm:$0x1]
      %v1818 = vld [vmem:[%s1633 + $0x38] sm:$0xf]
      %v1819 = vld [vmem:[%s1633 + $0x3c] sm:$0x1]
      %v1821 = vshrl.u32 %v1804, 16
      %v1823 = vrot.slane %v1821, 4
      %v1824 = vshll.u32 %v1804, 16
      %v1826 = vrot.slane %v1824, 5
      %v1827 = vor.u32 %v1823, %v1826
      %v1828 = vrot.slane %v1827, 4
      %v1830 = vshll.u32 %v1805, 16
      %v1832 = vrot.slane %v1830, 5
      %v1833 = vsel %vm361, %v1828, %v1832
      %v1835 = vshrl.u32 %v1806, 16
      %v1837 = vrot.slane %v1835, 4
      %v1838 = vshll.u32 %v1806, 16
      %v1840 = vrot.slane %v1838, 5
      %v1841 = vor.u32 %v1837, %v1840
      %v1842 = vrot.slane %v1841, 4
      %v1844 = vshll.u32 %v1807, 16
      %v1846 = vrot.slane %v1844, 5
      %v1847 = vsel %vm361, %v1842, %v1846
      %v1849 = vshrl.u32 %v1808, 16
      %v1851 = vrot.slane %v1849, 4
      %v1852 = vshll.u32 %v1808, 16
      %v1854 = vrot.slane %v1852, 5
      %v1855 = vor.u32 %v1851, %v1854
      %v1856 = vrot.slane %v1855, 4
      %v1858 = vshll.u32 %v1809, 16
      %v1860 = vrot.slane %v1858, 5
      %v1861 = vsel %vm361, %v1856, %v1860
      %v1863 = vshrl.u32 %v1810, 16
      %v1865 = vrot.slane %v1863, 4
      %v1866 = vshll.u32 %v1810, 16
      %v1868 = vrot.slane %v1866, 5
      %v1869 = vor.u32 %v1865, %v1868
      %v1870 = vrot.slane %v1869, 4
      %v1872 = vshll.u32 %v1811, 16
      %v1874 = vrot.slane %v1872, 5
      %v1875 = vsel %vm361, %v1870, %v1874
      %v1877 = vshrl.u32 %v1812, 16
      %v1879 = vrot.slane %v1877, 4
      %v1880 = vshll.u32 %v1812, 16
      %v1882 = vrot.slane %v1880, 5
      %v1883 = vor.u32 %v1879, %v1882
      %v1884 = vrot.slane %v1883, 4
      %v1886 = vshll.u32 %v1813, 16
      %v1888 = vrot.slane %v1886, 5
      %v1889 = vsel %vm361, %v1884, %v1888
      %v1891 = vshrl.u32 %v1814, 16
      %v1893 = vrot.slane %v1891, 4
      %v1894 = vshll.u32 %v1814, 16
      %v1896 = vrot.slane %v1894, 5
      %v1897 = vor.u32 %v1893, %v1896
      %v1898 = vrot.slane %v1897, 4
      %v1900 = vshll.u32 %v1815, 16
      %v1902 = vrot.slane %v1900, 5
      %v1903 = vsel %vm361, %v1898, %v1902
      %v1905 = vshrl.u32 %v1816, 16
      %v1907 = vrot.slane %v1905, 4
      %v1908 = vshll.u32 %v1816, 16
      %v1910 = vrot.slane %v1908, 5
      %v1911 = vor.u32 %v1907, %v1910
      %v1912 = vrot.slane %v1911, 4
      %v1914 = vshll.u32 %v1817, 16
      %v1916 = vrot.slane %v1914, 5
      %v1917 = vsel %vm361, %v1912, %v1916
      %v1919 = vshrl.u32 %v1818, 16
      %v1921 = vrot.slane %v1919, 4
      %v1922 = vshll.u32 %v1818, 16
      %v1924 = vrot.slane %v1922, 5
      %v1925 = vor.u32 %v1921, %v1924
      %v1926 = vrot.slane %v1925, 4
      %v1928 = vshll.u32 %v1819, 16
      %v1930 = vrot.slane %v1928, 5
      %v1931 = vsel %vm361, %v1926, %v1930
      %s1932 = scalar_lea.vmem %s1, 448
      %v1933 = vld [vmem:[%s1932] sm:$0xf]
      %v1934 = vld [vmem:[%s1932 + $0x4] sm:$0xf]
      %v1935 = vld [vmem:[%s1932 + $0x8] sm:$0xf]
      %v1936 = vld [vmem:[%s1932 + $0xc] sm:$0xf]
      %v1937 = vld [vmem:[%s1932 + $0x10] sm:$0xf]
      %v1938 = vld [vmem:[%s1932 + $0x14] sm:$0xf]
      %v1939 = vld [vmem:[%s1932 + $0x18] sm:$0xf]
      %v1940 = vld [vmem:[%s1932 + $0x1c] sm:$0xf]
      %v1941 = vld [vmem:[%s1932 + $0x20] sm:$0xf]
      %v1942 = vld [vmem:[%s1932 + $0x24] sm:$0xf]
      %v1943 = vld [vmem:[%s1932 + $0x28] sm:$0xf]
      %v1944 = vld [vmem:[%s1932 + $0x2c] sm:$0xf]
      %v1945 = vld [vmem:[%s1932 + $0x30] sm:$0xf]
      %v1946 = vld [vmem:[%s1932 + $0x34] sm:$0xf]
      %v1947 = vld [vmem:[%s1932 + $0x38] sm:$0xf]
      %v1948 = vld [vmem:[%s1932 + $0x3c] sm:$0xf]
      %v1949 = vunpack.c.l.b16 %v1833
      %v1950 = vunpack.c.l.b16 %v1847
      %v1951 = vunpack.c.l.b16 %v1861
      %v1952 = vunpack.c.l.b16 %v1875
      %v1953 = vunpack.c.l.b16 %v1889
      %v1954 = vunpack.c.l.b16 %v1903
      %v1955 = vunpack.c.l.b16 %v1917
      %v1956 = vunpack.c.l.b16 %v1931
      %v1957 = vpack.c.b16 %v1950, %v1949
      %v1958 = vpack.c.b16 %v1952, %v1951
      %v1959 = vpack.c.b16 %v1954, %v1953
      %v1960 = vpack.c.b16 %v1956, %v1955
      %v1981 = vunpack.c.l.b16 %v1933
      %v1982 = vunpack.c.l.b16 %v1934
      %v1983 = vunpack.c.l.b16 %v1935
      %v1984 = vunpack.c.l.b16 %v1936
      %v1985 = vunpack.c.l.b16 %v1937
      %v1986 = vunpack.c.l.b16 %v1938
      %v1987 = vunpack.c.l.b16 %v1939
      %v1988 = vunpack.c.l.b16 %v1940
      %v1989 = vunpack.c.l.b16 %v1941
      %v1990 = vunpack.c.l.b16 %v1942
      %v1991 = vunpack.c.l.b16 %v1943
      %v1992 = vunpack.c.l.b16 %v1944
      %v1993 = vunpack.c.l.b16 %v1945
      %v1994 = vunpack.c.l.b16 %v1946
      %v1995 = vunpack.c.l.b16 %v1947
      %v1996 = vunpack.c.l.b16 %v1948
      %v1997 = vpack.c.b16 %v1982, %v1981
      %v1998 = vpack.c.b16 %v1984, %v1983
      %v1999 = vpack.c.b16 %v1986, %v1985
      %v2000 = vpack.c.b16 %v1988, %v1987
      %v2001 = vpack.c.b16 %v1990, %v1989
      %v2002 = vpack.c.b16 %v1992, %v1991
      %v2003 = vpack.c.b16 %v1994, %v1993
      %v2004 = vpack.c.b16 %v1996, %v1995
      %2013 = vmatprep.subr.bf16.mxu0 0
      %2014 = vmatpush1.bf16.msra.mxu0 %v2004
      %2015 = vmatprep.subr.bf16.mxu0 0
      %2016 = vmatpush1.bf16.msra.mxu0 %v2003
      %2017 = vmatprep.subr.bf16.mxu0 0
      %2018 = vmatpush1.bf16.msra.mxu0 %v2002
      %2019 = vmatprep.subr.bf16.mxu0 0
      %2020 = vmatpush1.bf16.msra.mxu0 %v2001
      %2021 = vmatprep.subr.bf16.mxu0 0
      %2022 = vmatpush1.bf16.msra.mxu0 %v2000
      %2023 = vmatprep.subr.bf16.mxu0 0
      %2024 = vmatpush1.bf16.msra.mxu0 %v1999
      %2025 = vmatprep.subr.bf16.mxu0 0
      %2026 = vmatpush1.bf16.msra.mxu0 %v1998
      %2027 = vmatprep.subr.bf16.mxu0 0
      %2028 = vmatpush1.bf16.msra.mxu0 %v1997
      %2029 = vmatprep.subr.bf16.mxu0 0
      %2030 = vmatpush2.bf16.msra.mxu0 0
      %2031 = vmatprep.subr.bf16.mxu0 0
      %2032 = vmatpush2.bf16.msra.mxu0 0
      %2033 = vmatprep.subr.bf16.mxu0 0
      %2034 = vmatpush2.bf16.msra.mxu0 0
      %2035 = vmatprep.subr.bf16.mxu0 0
      %2036 = vmatpush2.bf16.msra.mxu0 0
      %2037 = vmatprep.subr.bf16.mxu0 0
      %2038 = vmatpush2.bf16.msra.mxu0 0
      %2039 = vmatprep.subr.bf16.mxu0 0
      %2040 = vmatpush2.bf16.msra.mxu0 0
      %2041 = vmatprep.subr.bf16.mxu0 0
      %2042 = vmatpush2.bf16.msra.mxu0 0
      %2043 = vmatprep.subr.bf16.mxu0 0
      %2044 = vmatpush2.bf16.msra.mxu0 0
      %2045 = vmatprep.mubr.bf16.mxu0 0
      %2046 = vmatmul.mubr.bf16.gmra.mxu0 %v1957
      %v2047 = vpop.f32.mrf.mxu0
      %v2048 = vadd.f32 0.0, %v2047
      %v2049 = vpop.f32.mrf.mxu0
      %v2050 = vpop.f32.mrf.mxu0
      %v2051 = vadd.f32 0.0, %v2050
      %v2052 = vpop.f32.mrf.mxu0
      %2053 = vmatprep.mubr.bf16.mxu0 0
      %2054 = vmatmul.mubr.bf16.gmra.mxu0 %v1958
      %v2055 = vpop.f32.mrf.mxu0
      %v2056 = vadd.f32 0.0, %v2055
      %v2057 = vpop.f32.mrf.mxu0
      %v2058 = vpop.f32.mrf.mxu0
      %v2059 = vadd.f32 0.0, %v2058
      %v2060 = vpop.f32.mrf.mxu0
      %2061 = vmatprep.mubr.bf16.mxu0 0
      %2062 = vmatmul.mubr.bf16.gmra.mxu0 %v1959
      %v2063 = vpop.f32.mrf.mxu0
      %v2064 = vadd.f32 0.0, %v2063
      %v2065 = vpop.f32.mrf.mxu0
      %v2066 = vpop.f32.mrf.mxu0
      %v2067 = vadd.f32 0.0, %v2066
      %v2068 = vpop.f32.mrf.mxu0
      %2069 = vmatprep.mubr.bf16.mxu0 0
      %2070 = vmatmul.mubr.bf16.gmra.mxu0 %v1960
      %v2071 = vpop.f32.mrf.mxu0
      %v2072 = vadd.f32 0.0, %v2071
      %v2073 = vpop.f32.mrf.mxu0
      %v2074 = vpop.f32.mrf.mxu0
      %v2075 = vadd.f32 0.0, %v2074
      %v2076 = vpop.f32.mrf.mxu0
      %2077 = vdwg.mxu0
      %v2078 = vadd.f32 %v1796, %v2048
      %v2079 = vadd.f32 %v1797, %v2051
      %v2080 = vadd.f32 %v1798, %v2056
      %v2081 = vadd.f32 %v1799, %v2059
      %v2082 = vadd.f32 %v1800, %v2064
      %v2083 = vadd.f32 %v1801, %v2067
      %v2084 = vadd.f32 %v1802, %v2072
      %v2085 = vadd.f32 %v1803, %v2075
      %v2086 = vld [vmem:[%s1633] sm:$0xe]
      %v2087 = vld [vmem:[%s1633 + $0x8] sm:$0xe]
      %v2088 = vld [vmem:[%s1633 + $0x10] sm:$0xe]
      %v2089 = vld [vmem:[%s1633 + $0x18] sm:$0xe]
      %v2090 = vld [vmem:[%s1633 + $0x20] sm:$0xe]
      %v2091 = vld [vmem:[%s1633 + $0x28] sm:$0xe]
      %v2092 = vld [vmem:[%s1633 + $0x30] sm:$0xe]
      %v2093 = vld [vmem:[%s1633 + $0x38] sm:$0xe]
      %v2110 = vrot.slane %v2086, 5
      %v2111 = vrot.slane %v2110, 4
      %v2112 = vrot.slane %v1805, 5
      %v2113 = vsel %vm783, %v2111, %v2112
      %v2114 = vrot.slane %v2087, 5
      %v2115 = vrot.slane %v2114, 4
      %v2116 = vrot.slane %v1807, 5
      %v2117 = vsel %vm783, %v2115, %v2116
      %v2118 = vrot.slane %v2088, 5
      %v2119 = vrot.slane %v2118, 4
      %v2120 = vrot.slane %v1809, 5
      %v2121 = vsel %vm783, %v2119, %v2120
      %v2122 = vrot.slane %v2089, 5
      %v2123 = vrot.slane %v2122, 4
      %v2124 = vrot.slane %v1811, 5
      %v2125 = vsel %vm783, %v2123, %v2124
      %v2126 = vrot.slane %v2090, 5
      %v2127 = vrot.slane %v2126, 4
      %v2128 = vrot.slane %v1813, 5
      %v2129 = vsel %vm783, %v2127, %v2128
      %v2130 = vrot.slane %v2091, 5
      %v2131 = vrot.slane %v2130, 4
      %v2132 = vrot.slane %v1815, 5
      %v2133 = vsel %vm783, %v2131, %v2132
      %v2134 = vrot.slane %v2092, 5
      %v2135 = vrot.slane %v2134, 4
      %v2136 = vrot.slane %v1817, 5
      %v2137 = vsel %vm783, %v2135, %v2136
      %v2138 = vrot.slane %v2093, 5
      %v2139 = vrot.slane %v2138, 4
      %v2140 = vrot.slane %v1819, 5
      %v2141 = vsel %vm783, %v2139, %v2140
      %s2142 = scalar_lea.vmem %s1, 512
      %v2143 = vld [vmem:[%s2142] sm:$0xf]
      %v2144 = vld [vmem:[%s2142 + $0x4] sm:$0xf]
      %v2145 = vld [vmem:[%s2142 + $0x8] sm:$0xf]
      %v2146 = vld [vmem:[%s2142 + $0xc] sm:$0xf]
      %v2147 = vld [vmem:[%s2142 + $0x10] sm:$0xf]
      %v2148 = vld [vmem:[%s2142 + $0x14] sm:$0xf]
      %v2149 = vld [vmem:[%s2142 + $0x18] sm:$0xf]
      %v2150 = vld [vmem:[%s2142 + $0x1c] sm:$0xf]
      %v2151 = vld [vmem:[%s2142 + $0x20] sm:$0xf]
      %v2152 = vld [vmem:[%s2142 + $0x24] sm:$0xf]
      %v2153 = vld [vmem:[%s2142 + $0x28] sm:$0xf]
      %v2154 = vld [vmem:[%s2142 + $0x2c] sm:$0xf]
      %v2155 = vld [vmem:[%s2142 + $0x30] sm:$0xf]
      %v2156 = vld [vmem:[%s2142 + $0x34] sm:$0xf]
      %v2157 = vld [vmem:[%s2142 + $0x38] sm:$0xf]
      %v2158 = vld [vmem:[%s2142 + $0x3c] sm:$0xf]
      %v2159 = vunpack.c.l.b16 %v2113
      %v2160 = vunpack.c.l.b16 %v2117
      %v2161 = vunpack.c.l.b16 %v2121
      %v2162 = vunpack.c.l.b16 %v2125
      %v2163 = vunpack.c.l.b16 %v2129
      %v2164 = vunpack.c.l.b16 %v2133
      %v2165 = vunpack.c.l.b16 %v2137
      %v2166 = vunpack.c.l.b16 %v2141
      %v2167 = vpack.c.b16 %v2160, %v2159
      %v2168 = vpack.c.b16 %v2162, %v2161
      %v2169 = vpack.c.b16 %v2164, %v2163
      %v2170 = vpack.c.b16 %v2166, %v2165
      %v2191 = vunpack.c.l.b16 %v2143
      %v2192 = vunpack.c.l.b16 %v2144
      %v2193 = vunpack.c.l.b16 %v2145
      %v2194 = vunpack.c.l.b16 %v2146
      %v2195 = vunpack.c.l.b16 %v2147
      %v2196 = vunpack.c.l.b16 %v2148
      %v2197 = vunpack.c.l.b16 %v2149
      %v2198 = vunpack.c.l.b16 %v2150
      %v2199 = vunpack.c.l.b16 %v2151
      %v2200 = vunpack.c.l.b16 %v2152
      %v2201 = vunpack.c.l.b16 %v2153
      %v2202 = vunpack.c.l.b16 %v2154
      %v2203 = vunpack.c.l.b16 %v2155
      %v2204 = vunpack.c.l.b16 %v2156
      %v2205 = vunpack.c.l.b16 %v2157
      %v2206 = vunpack.c.l.b16 %v2158
      %v2207 = vpack.c.b16 %v2192, %v2191
      %v2208 = vpack.c.b16 %v2194, %v2193
      %v2209 = vpack.c.b16 %v2196, %v2195
      %v2210 = vpack.c.b16 %v2198, %v2197
      %v2211 = vpack.c.b16 %v2200, %v2199
      %v2212 = vpack.c.b16 %v2202, %v2201
      %v2213 = vpack.c.b16 %v2204, %v2203
      %v2214 = vpack.c.b16 %v2206, %v2205
      %2223 = vmatprep.subr.bf16.mxu0 0
      %2224 = vmatpush1.bf16.msra.mxu0 %v2214
      %2225 = vmatprep.subr.bf16.mxu0 0
      %2226 = vmatpush1.bf16.msra.mxu0 %v2213
      %2227 = vmatprep.subr.bf16.mxu0 0
      %2228 = vmatpush1.bf16.msra.mxu0 %v2212
      %2229 = vmatprep.subr.bf16.mxu0 0
      %2230 = vmatpush1.bf16.msra.mxu0 %v2211
      %2231 = vmatprep.subr.bf16.mxu0 0
      %2232 = vmatpush1.bf16.msra.mxu0 %v2210
      %2233 = vmatprep.subr.bf16.mxu0 0
      %2234 = vmatpush1.bf16.msra.mxu0 %v2209
      %2235 = vmatprep.subr.bf16.mxu0 0
      %2236 = vmatpush1.bf16.msra.mxu0 %v2208
      %2237 = vmatprep.subr.bf16.mxu0 0
      %2238 = vmatpush1.bf16.msra.mxu0 %v2207
      %2239 = vmatprep.subr.bf16.mxu0 0
      %2240 = vmatpush2.bf16.msra.mxu0 0
      %2241 = vmatprep.subr.bf16.mxu0 0
      %2242 = vmatpush2.bf16.msra.mxu0 0
      %2243 = vmatprep.subr.bf16.mxu0 0
      %2244 = vmatpush2.bf16.msra.mxu0 0
      %2245 = vmatprep.subr.bf16.mxu0 0
      %2246 = vmatpush2.bf16.msra.mxu0 0
      %2247 = vmatprep.subr.bf16.mxu0 0
      %2248 = vmatpush2.bf16.msra.mxu0 0
      %2249 = vmatprep.subr.bf16.mxu0 0
      %2250 = vmatpush2.bf16.msra.mxu0 0
      %2251 = vmatprep.subr.bf16.mxu0 0
      %2252 = vmatpush2.bf16.msra.mxu0 0
      %2253 = vmatprep.subr.bf16.mxu0 0
      %2254 = vmatpush2.bf16.msra.mxu0 0
      %2255 = vmatprep.mubr.bf16.mxu0 0
      %2256 = vmatmul.mubr.bf16.gmra.mxu0 %v2167
      %v2257 = vpop.f32.mrf.mxu0
      %v2258 = vadd.f32 0.0, %v2257
      %v2259 = vpop.f32.mrf.mxu0
      %v2260 = vpop.f32.mrf.mxu0
      %v2261 = vadd.f32 0.0, %v2260
      %v2262 = vpop.f32.mrf.mxu0
      %2263 = vmatprep.mubr.bf16.mxu0 0
      %2264 = vmatmul.mubr.bf16.gmra.mxu0 %v2168
      %v2265 = vpop.f32.mrf.mxu0
      %v2266 = vadd.f32 0.0, %v2265
      %v2267 = vpop.f32.mrf.mxu0
      %v2268 = vpop.f32.mrf.mxu0
      %v2269 = vadd.f32 0.0, %v2268
      %v2270 = vpop.f32.mrf.mxu0
      %2271 = vmatprep.mubr.bf16.mxu0 0
      %2272 = vmatmul.mubr.bf16.gmra.mxu0 %v2169
      %v2273 = vpop.f32.mrf.mxu0
      %v2274 = vadd.f32 0.0, %v2273
      %v2275 = vpop.f32.mrf.mxu0
      %v2276 = vpop.f32.mrf.mxu0
      %v2277 = vadd.f32 0.0, %v2276
      %v2278 = vpop.f32.mrf.mxu0
      %2279 = vmatprep.mubr.bf16.mxu0 0
      %2280 = vmatmul.mubr.bf16.gmra.mxu0 %v2170
      %v2281 = vpop.f32.mrf.mxu0
      %v2282 = vadd.f32 0.0, %v2281
      %v2283 = vpop.f32.mrf.mxu0
      %v2284 = vpop.f32.mrf.mxu0
      %v2285 = vadd.f32 0.0, %v2284
      %v2286 = vpop.f32.mrf.mxu0
      %2287 = vdwg.mxu0
      %v2288 = vadd.f32 %v2078, %v2258
      %v2289 = vadd.f32 %v2079, %v2261
      %v2290 = vadd.f32 %v2080, %v2266
      %v2291 = vadd.f32 %v2081, %v2269
      %v2292 = vadd.f32 %v2082, %v2274
      %v2293 = vadd.f32 %v2083, %v2277
      %v2294 = vadd.f32 %v2084, %v2282
      %v2295 = vadd.f32 %v2085, %v2285
      %v2296 = vld [vmem:[%s2] sm:$0x1]
      %v2298 = vlaneseq
      %v2299 = vshrl.u32 %v2298, 7
      %v2300 = vsub.s32 0, %v2299
      %v2301 = vrot.slane %v2296, %v2300
      %v2303 = vmul.f32 %v2288, %v2301
      %v2304 = vmul.f32 %v2289, %v2301
      %v2305 = vmul.f32 %v2290, %v2301
      %v2306 = vmul.f32 %v2291, %v2301
      %v2307 = vmul.f32 %v2292, %v2301
      %v2308 = vmul.f32 %v2293, %v2301
      %v2309 = vmul.f32 %v2294, %v2301
      %v2310 = vmul.f32 %v2295, %v2301
      %v2311 = vld [vmem:[%s3] sm:$0x1]
      %v2313 = vlaneseq
      %v2314 = vshrl.u32 %v2313, 7
      %v2315 = vsub.s32 0, %v2314
      %v2316 = vrot.slane %v2311, %v2315
      %v2318 = vadd.f32 %v2303, %v2316
      %v2319 = vadd.f32 %v2304, %v2316
      %v2320 = vadd.f32 %v2305, %v2316
      %v2321 = vadd.f32 %v2306, %v2316
      %v2322 = vadd.f32 %v2307, %v2316
      %v2323 = vadd.f32 %v2308, %v2316
      %v2324 = vadd.f32 %v2309, %v2316
      %v2325 = vadd.f32 %v2310, %v2316
      %v2326 = vld [vmem:[%s320] sm:$0xf]
      %v2327 = vld [vmem:[%s320 + $0x4] sm:$0xf]
      %v2328 = vld [vmem:[%s320 + $0x8] sm:$0xf]
      %v2329 = vld [vmem:[%s320 + $0xc] sm:$0xf]
      %v2330 = vld [vmem:[%s320 + $0x10] sm:$0xf]
      %v2331 = vld [vmem:[%s320 + $0x14] sm:$0xf]
      %v2332 = vld [vmem:[%s320 + $0x18] sm:$0xf]
      %v2333 = vld [vmem:[%s320 + $0x1c] sm:$0xf]
      %v2334 = vld [vmem:[%s5] sm:$0xf]
      %v2335 = vld [vmem:[%s5 + $0x4] sm:$0xf]
      %v2336 = vld [vmem:[%s5 + $0x8] sm:$0xf]
      %v2337 = vld [vmem:[%s5 + $0xc] sm:$0xf]
      %v2338 = vld [vmem:[%s5 + $0x10] sm:$0xf]
      %v2339 = vld [vmem:[%s5 + $0x14] sm:$0xf]
      %v2340 = vld [vmem:[%s5 + $0x18] sm:$0xf]
      %v2341 = vld [vmem:[%s5 + $0x1c] sm:$0xf]
      %v2342 = vld [vmem:[%s5 + $0x20] sm:$0xf]
      %v2343 = vld [vmem:[%s5 + $0x24] sm:$0xf]
      %v2344 = vld [vmem:[%s5 + $0x28] sm:$0xf]
      %v2345 = vld [vmem:[%s5 + $0x2c] sm:$0xf]
      %v2346 = vld [vmem:[%s5 + $0x30] sm:$0xf]
      %v2347 = vld [vmem:[%s5 + $0x34] sm:$0xf]
      %v2348 = vld [vmem:[%s5 + $0x38] sm:$0xf]
      %v2349 = vld [vmem:[%s5 + $0x3c] sm:$0xf]
      %v2358 = vunpack.c.l.b16 %v2326
      %v2359 = vunpack.c.l.b16 %v2327
      %v2360 = vunpack.c.l.b16 %v2328
      %v2361 = vunpack.c.l.b16 %v2329
      %v2362 = vunpack.c.l.b16 %v2330
      %v2363 = vunpack.c.l.b16 %v2331
      %v2364 = vunpack.c.l.b16 %v2332
      %v2365 = vunpack.c.l.b16 %v2333
      %v2366 = vpack.c.b16 %v2359, %v2358
      %v2367 = vpack.c.b16 %v2361, %v2360
      %v2368 = vpack.c.b16 %v2363, %v2362
      %v2369 = vpack.c.b16 %v2365, %v2364
      %v2390 = vunpack.c.l.b16 %v2334
      %v2391 = vunpack.c.l.b16 %v2335
      %v2392 = vunpack.c.l.b16 %v2336
      %v2393 = vunpack.c.l.b16 %v2337
      %v2394 = vunpack.c.l.b16 %v2338
      %v2395 = vunpack.c.l.b16 %v2339
      %v2396 = vunpack.c.l.b16 %v2340
      %v2397 = vunpack.c.l.b16 %v2341
      %v2398 = vunpack.c.l.b16 %v2342
      %v2399 = vunpack.c.l.b16 %v2343
      %v2400 = vunpack.c.l.b16 %v2344
      %v2401 = vunpack.c.l.b16 %v2345
      %v2402 = vunpack.c.l.b16 %v2346
      %v2403 = vunpack.c.l.b16 %v2347
      %v2404 = vunpack.c.l.b16 %v2348
      %v2405 = vunpack.c.l.b16 %v2349
      %v2406 = vpack.c.b16 %v2391, %v2390
      %v2407 = vpack.c.b16 %v2393, %v2392
      %v2408 = vpack.c.b16 %v2395, %v2394
      %v2409 = vpack.c.b16 %v2397, %v2396
      %v2410 = vpack.c.b16 %v2399, %v2398
      %v2411 = vpack.c.b16 %v2401, %v2400
      %v2412 = vpack.c.b16 %v2403, %v2402
      %v2413 = vpack.c.b16 %v2405, %v2404
      %2422 = vmatprep.subr.bf16.mxu0 0
      %2423 = vmatpush1.bf16.msra.mxu0 %v2413
      %2424 = vmatprep.subr.bf16.mxu0 0
      %2425 = vmatpush1.bf16.msra.mxu0 %v2412
      %2426 = vmatprep.subr.bf16.mxu0 0
      %2427 = vmatpush1.bf16.msra.mxu0 %v2411
      %2428 = vmatprep.subr.bf16.mxu0 0
      %2429 = vmatpush1.bf16.msra.mxu0 %v2410
      %2430 = vmatprep.subr.bf16.mxu0 0
      %2431 = vmatpush1.bf16.msra.mxu0 %v2409
      %2432 = vmatprep.subr.bf16.mxu0 0
      %2433 = vmatpush1.bf16.msra.mxu0 %v2408
      %2434 = vmatprep.subr.bf16.mxu0 0
      %2435 = vmatpush1.bf16.msra.mxu0 %v2407
      %2436 = vmatprep.subr.bf16.mxu0 0
      %2437 = vmatpush1.bf16.msra.mxu0 %v2406
      %2438 = vmatprep.subr.bf16.mxu0 0
      %2439 = vmatpush2.bf16.msra.mxu0 0
      %2440 = vmatprep.subr.bf16.mxu0 0
      %2441 = vmatpush2.bf16.msra.mxu0 0
      %2442 = vmatprep.subr.bf16.mxu0 0
      %2443 = vmatpush2.bf16.msra.mxu0 0
      %2444 = vmatprep.subr.bf16.mxu0 0
      %2445 = vmatpush2.bf16.msra.mxu0 0
      %2446 = vmatprep.subr.bf16.mxu0 0
      %2447 = vmatpush2.bf16.msra.mxu0 0
      %2448 = vmatprep.subr.bf16.mxu0 0
      %2449 = vmatpush2.bf16.msra.mxu0 0
      %2450 = vmatprep.subr.bf16.mxu0 0
      %2451 = vmatpush2.bf16.msra.mxu0 0
      %2452 = vmatprep.subr.bf16.mxu0 0
      %2453 = vmatpush2.bf16.msra.mxu0 0
      %2454 = vmatprep.mubr.bf16.mxu0 0
      %2455 = vmatmul.mubr.bf16.gmra.mxu0 %v2366
      %v2456 = vpop.f32.mrf.mxu0
      %v2457 = vadd.f32 0.0, %v2456
      %v2458 = vpop.f32.mrf.mxu0
      %v2459 = vpop.f32.mrf.mxu0
      %v2460 = vadd.f32 0.0, %v2459
      %v2461 = vpop.f32.mrf.mxu0
      %2462 = vmatprep.mubr.bf16.mxu0 0
      %2463 = vmatmul.mubr.bf16.gmra.mxu0 %v2367
      %v2464 = vpop.f32.mrf.mxu0
      %v2465 = vadd.f32 0.0, %v2464
      %v2466 = vpop.f32.mrf.mxu0
      %v2467 = vpop.f32.mrf.mxu0
      %v2468 = vadd.f32 0.0, %v2467
      %v2469 = vpop.f32.mrf.mxu0
      %2470 = vmatprep.mubr.bf16.mxu0 0
      %2471 = vmatmul.mubr.bf16.gmra.mxu0 %v2368
      %v2472 = vpop.f32.mrf.mxu0
      %v2473 = vadd.f32 0.0, %v2472
      %v2474 = vpop.f32.mrf.mxu0
      %v2475 = vpop.f32.mrf.mxu0
      %v2476 = vadd.f32 0.0, %v2475
      %v2477 = vpop.f32.mrf.mxu0
      %2478 = vmatprep.mubr.bf16.mxu0 0
      %2479 = vmatmul.mubr.bf16.gmra.mxu0 %v2369
      %v2480 = vpop.f32.mrf.mxu0
      %v2481 = vadd.f32 0.0, %v2480
      %v2482 = vpop.f32.mrf.mxu0
      %v2483 = vpop.f32.mrf.mxu0
      %v2484 = vadd.f32 0.0, %v2483
      %v2485 = vpop.f32.mrf.mxu0
      %2486 = vdwg.mxu0
      %v2487 = vld [vmem:[%s6] sm:$0x1]
      %v2489 = vlaneseq
      %v2490 = vshrl.u32 %v2489, 7
      %v2491 = vsub.s32 0, %v2490
      %v2492 = vrot.slane %v2487, %v2491
      %v2494 = vmul.f32 %v2457, %v2492
      %v2495 = vmul.f32 %v2460, %v2492
      %v2496 = vmul.f32 %v2465, %v2492
      %v2497 = vmul.f32 %v2468, %v2492
      %v2498 = vmul.f32 %v2473, %v2492
      %v2499 = vmul.f32 %v2476, %v2492
      %v2500 = vmul.f32 %v2481, %v2492
      %v2501 = vmul.f32 %v2484, %v2492
      %v2502 = vadd.f32 %v2318, %v2494
      %v2503 = vadd.f32 %v2319, %v2495
      %v2504 = vadd.f32 %v2320, %v2496
      %v2505 = vadd.f32 %v2321, %v2497
      %v2506 = vadd.f32 %v2322, %v2498
      %v2507 = vadd.f32 %v2323, %v2499
      %v2508 = vadd.f32 %v2324, %v2500
      %v2509 = vadd.f32 %v2325, %v2501
      %v2510 = vld [vmem:[%s7] sm:$0x1]
      %v2512 = vlaneseq
      %v2513 = vshrl.u32 %v2512, 7
      %v2514 = vsub.s32 0, %v2513
      %v2515 = vrot.slane %v2510, %v2514
      %v2517 = vadd.f32 %v2502, %v2515
      %v2518 = vadd.f32 %v2503, %v2515
      %v2519 = vadd.f32 %v2504, %v2515
      %v2520 = vadd.f32 %v2505, %v2515
      %v2521 = vadd.f32 %v2506, %v2515
      %v2522 = vadd.f32 %v2507, %v2515
      %v2523 = vadd.f32 %v2508, %v2515
      %v2524 = vadd.f32 %v2509, %v2515
      %v2525 = vmax.f32 %v2517, 0.0
      %v2526 = vmax.f32 %v2518, 0.0
      %v2527 = vmax.f32 %v2519, 0.0
      %v2528 = vmax.f32 %v2520, 0.0
      %v2529 = vmax.f32 %v2521, 0.0
      %v2530 = vmax.f32 %v2522, 0.0
      %v2531 = vmax.f32 %v2523, 0.0
      %v2532 = vmax.f32 %v2524, 0.0
      %2533 = vst [vmem:[%s325] sm:$0xff] %v2525
      %2534 = vst [vmem:[%s325 + $0x8] sm:$0xff] %v2526
      %2535 = vst [vmem:[%s325 + $0x10] sm:$0xff] %v2527
      %2536 = vst [vmem:[%s325 + $0x18] sm:$0xff] %v2528
      %2537 = vst [vmem:[%s325 + $0x20] sm:$0xff] %v2529
      %2538 = vst [vmem:[%s325 + $0x28] sm:$0xff] %v2530
      %2539 = vst [vmem:[%s325 + $0x30] sm:$0xff] %v2531
      %2540 = vst [vmem:[%s325 + $0x38] sm:$0xff] %v2532
      %p2541 = scmp.lt.s32.totalorder %s19, 1
      %s2542 = scalar_select %p2541, %s19, 1
      %s2543 = smul.addr %s2542, 8
      %s2544 = smul.addr %s2543, 8
      %s2545 = scalar_lea.vmem %s8, %s2544
      // Predicated region
      $region53: #{basic_block_forward.3} parent=51 // pred_check
        %p2546 = pneg %p215
      $region54: #{basic_block_forward.3} parent=51 // pred_check_branch
        %2548 = sbr.rel (%p2546) target = $region56
      $region55: #{basic_block_forward.3} parent=51 // pred_region
        _
      $region56: #{basic_block_forward.3} parent=51 // pred_fallthru
        _
    $region52: #{basic_block_forward.3} parent=5 // pred_fallthru
      _
    %p2549 = scmp.le.s32.totalorder 2, %s14
    // Predicated region
    $region57: #{basic_block_forward.3} parent=5 // pred_check
      %p2550 = pneg %p2549
    $region58: #{basic_block_forward.3} parent=5 // pred_check_branch
      %2552 = sbr.rel (%p2550) target = $region60
    $region59: #{basic_block_forward.3} parent=5 // pred_region
      %s2553 = ssub.s32 %s14, 2
      // Predicated region
      $region61: #{basic_block_forward.3} parent=59 // pred_check
        %p2554 = pneg %p221
      $region62: #{basic_block_forward.3} parent=59 // pred_check_branch
        %2556 = sbr.rel (%p2554) target = $region64
      $region63: #{basic_block_forward.3} parent=59 // pred_region
        %p2557 = scmp.lt.s32.totalorder %s20, 1
        %s2558 = scalar_select %p2557, %s20, 1
        %s2559 = smul.addr %s2558, 8
        %s2560 = smul.addr %s2559, 8
        %s2561 = scalar_lea.vmem %s8, %s2560
      $region64: #{basic_block_forward.3} parent=59 // pred_fallthru
        _
    $region60: #{basic_block_forward.3} parent=5 // pred_fallthru
      _
  $region6: #{basic_block_forward.3} parent=0 // loop_footer
    %s18 = sadd.s32 1, %s14
  $region7: #{basic_block_forward.3} parent=0 // loop_footer_branch
    %13 = sbr.rel target = $region3
  $region8: #{basic_block_forward.3} parent=0 // loop_exit
    _

</llo_original>
